<compile_context>
chip_gen: v7x
topology: tpu7x:2x2x1
jax: 0.10.0
libtpu: 0.0.40
codegen_flags: <defaults>
</compile_context>

<pallas_src>
import math

import numpy as np
import jax
import jax.numpy as jnp
from jax import lax
from jax.experimental import pallas as pl
from jax.experimental.pallas import tpu as pltpu

D_MODEL = 16
N_HEADS = 2
HEAD_DIM = D_MODEL // N_HEADS
FFN = 32
N_LAYERS = 2
LN_EPS = 1e-5
PACK_W = N_LAYERS * 2 * D_MODEL  # packed-parameter buffer width (widest row = 64)

# Full per-layer parameter set (used by init_params / reference).
PARAM_DEFS = (
    ("sa_w",   D_MODEL, 3 * D_MODEL),   # self-attn fused qkv weight  (D, 3D)
    ("sa_ow",  D_MODEL, D_MODEL),       # self-attn output proj       (D, D)
    ("ca_qw",  D_MODEL, D_MODEL),       # cross-attn query proj       (D, D)
    ("ca_kvw", D_MODEL, 2 * D_MODEL),   # cross-attn fused kv proj    (D, 2D)
    ("ca_ow",  D_MODEL, D_MODEL),       # cross-attn output proj      (D, D)
    ("l1_w",   D_MODEL, FFN),           # FFN in                      (D, F)
    ("l2_w",   FFN, D_MODEL),           # FFN out                     (F, D)
    ("sa_b",   1, 3 * D_MODEL),
    ("sa_ob",  1, D_MODEL),
    ("ca_qb",  1, D_MODEL),
    ("ca_kvb", 1, 2 * D_MODEL),
    ("ca_ob",  1, D_MODEL),
    ("l1_b",   1, FFN),
    ("l2_b",   1, D_MODEL),
    ("ln1_w",  1, D_MODEL), ("ln1_b", 1, D_MODEL),
    ("ln2_w",  1, D_MODEL), ("ln2_b", 1, D_MODEL),
    ("ln3_w",  1, D_MODEL), ("ln3_b", 1, D_MODEL),
)

# Per-layer entries that go into the packed buffer; cross-attn KV is packed as a
# single fused-across-layers global entry instead (hoisted matmul).
LAYER_PACK_ENTRIES = tuple(
    (n, r, c) for (n, r, c) in PARAM_DEFS if n not in ("ca_kvw", "ca_kvb"))


# ------------------------------ param packing -------------------------------
def pack_params(params):
    """Pack every parameter into one (R, PACK_W) f32 buffer.

    Multi-row weights keep 8-aligned row offsets; all 1-row bias/LN vectors are
    co-packed into shared trailing sublane blocks.  Returns the packed buffer
    and a static layout dict {key: (row_offset, rows, cols)} where key is a
    global name (str) or (layer, name) tuple.
    """
    mats, vecs = [], []

    def add(key, arr):
        arr = np.asarray(arr, np.float32)
        r, c = arr.shape
        padded = np.pad(arr, ((0, 0), (0, PACK_W - c)))
        (vecs if r == 1 else mats).append((key, padded, c))

    # cross-attn KV projections for both layers, fused column-wise
    add("ca_kvw_all",
        np.concatenate([np.asarray(params["ca_kvw"][l]) for l in range(N_LAYERS)],
                       axis=1))
    add("ca_kvb_all",
        np.concatenate([np.asarray(params["ca_kvb"][l]).reshape(1, -1)
                        for l in range(N_LAYERS)], axis=1))
    for l in range(N_LAYERS):
        for name, r, c in LAYER_PACK_ENTRIES:
            add((l, name), np.asarray(params[name][l]).reshape(r, c))

    layout, blocks, off = {}, [], 0
    for key, a, c in mats:            # weight matrices (rows already % 8 == 0)
        layout[key] = (off, a.shape[0], c)
        blocks.append(a)
        off += a.shape[0]
    for key, a, c in vecs:            # 1-row vectors share sublane blocks
        layout[key] = (off, 1, c)
        blocks.append(a)
        off += 1
    if off % 8:
        blocks.append(np.zeros(((-off) % 8, PACK_W), np.float32))
    return jnp.asarray(np.concatenate(blocks, axis=0)), layout


# ----------------------------- kernel helpers --------------------------------
def _layer_norm(x, w, b):
    # E[x] and E[x^2] are independent reductions -> back-to-back XLU issues.
    mu = jnp.mean(x, axis=-1, keepdims=True)
    ms = jnp.mean(x * x, axis=-1, keepdims=True)
    var = ms - mu * mu
    return (x - mu) * lax.rsqrt(var + LN_EPS) * w + b


def _block_diag_mask(n_blocks, lq, lk):
    """f32 (n_blocks*lq, n_blocks*lk): 1 where row-block == col-block, else 0."""
    r = lax.broadcasted_iota(jnp.int32, (n_blocks * lq, n_blocks * lk), 0)
    c = lax.broadcasted_iota(jnp.int32, (n_blocks * lq, n_blocks * lk), 1)
    m = None
    for b in range(n_blocks):  # static unroll (n_blocks = N_HEADS * B = 4)
        mb = ((r >= b * lq) & (r < (b + 1) * lq)
              & (c >= b * lk) & (c < (b + 1) * lk))
        m = mb if m is None else (m | mb)
    return m.astype(jnp.float32)


def _attention(q, k, v, out_w, mask_f):
    """Fused-head MHA on batch-flattened operands.

    q: (B*Lq, D), k/v: (B*Lk, D).  Both heads and both batch elements share ONE
    score matmul / softmax chain / PV matmul: the heads are stacked along the
    sublane axis and cross-(head,batch) scores are zeroed multiplicatively.
    """
    nq = q.shape[0]
    scale = 1.0 / math.sqrt(HEAD_DIM)
    stack = lambda a: jnp.concatenate(
        [a[:, h * HEAD_DIM:(h + 1) * HEAD_DIM] for h in range(N_HEADS)], axis=0)
    qs, ks, vs = stack(q) * scale, stack(k), stack(v)
    s = lax.dot_general(qs, ks, (((1,), (1,)), ((), ())),
                        preferred_element_type=jnp.float32)
    # Scores are O(1) for this module (bounded inputs / 0.3-scale weights), so
    # exp without max-subtraction cannot overflow; invalid entries are zeroed.
    p = jnp.exp(s) * mask_f
    p = p * pl.reciprocal(jnp.sum(p, axis=-1, keepdims=True), approx=True)
    pv = jnp.dot(p, vs, preferred_element_type=jnp.float32)   # (NH*B*Lq, HEAD_DIM)
    o = jnp.concatenate([pv[h * nq:(h + 1) * nq, :] for h in range(N_HEADS)],
                        axis=1)                                # (B*Lq, D)
    return jnp.dot(o, out_w, preferred_element_type=jnp.float32)


# --------------------------------- wrapper -----------------------------------
def transformer_decoder(target, encoder_out, params, encoder_padding_mask=None):
    # TODO(synk): memory_key_padding_mask path not implemented (None only).
    assert encoder_padding_mask is None
    B, Lt, D = target.shape
    _, Ls, _ = encoder_out.shape
    assert D == D_MODEL
    packed, layout = pack_params(params)

    def kernel(tgt_ref, mem_ref, p_ref, out_ref):
        def getp(key):
            off, r, c = layout[key]
            return p_ref[off:off + r, 0:c]       # static slice (cheap load)

        # batch-flattened activations (leading-dim collapse: layout no-op)
        x = tgt_ref[...].reshape(B * Lt, D).astype(jnp.float32)
        mem = mem_ref[...].reshape(B * Ls, D).astype(jnp.float32)

        # (head, batch) block-diagonal masks, built once, shared by every layer
        self_mask = _block_diag_mask(N_HEADS * B, Lt, Lt)
        cross_mask = _block_diag_mask(N_HEADS * B, Lt, Ls)

        # cross-attn KV depends only on `mem`: one fused matmul for both layers
        kv_all = jnp.dot(mem, getp("ca_kvw_all"),
                         preferred_element_type=jnp.float32) + getp("ca_kvb_all")

        for l in range(N_LAYERS):  # static unroll over decoder layers
            # --- self attention + residual + norm1 (fused (D,3D) projection) ---
            qkv = jnp.dot(x, getp((l, "sa_w")),
                          preferred_element_type=jnp.float32) + getp((l, "sa_b"))
            sa = _attention(qkv[:, :D], qkv[:, D:2 * D], qkv[:, 2 * D:],
                            getp((l, "sa_ow")), self_mask) + getp((l, "sa_ob"))
            x = _layer_norm(x + sa, getp((l, "ln1_w")), getp((l, "ln1_b")))

            # --- cross attention + residual + norm2 (KV precomputed above) ---
            q = jnp.dot(x, getp((l, "ca_qw")),
                        preferred_element_type=jnp.float32) + getp((l, "ca_qb"))
            kv = kv_all[:, l * 2 * D:(l + 1) * 2 * D]
            ca = _attention(q, kv[:, :D], kv[:, D:],
                            getp((l, "ca_ow")), cross_mask) + getp((l, "ca_ob"))
            x = _layer_norm(x + ca, getp((l, "ln2_w")), getp((l, "ln2_b")))

            # --- feed forward + residual + norm3 ---
            h = jnp.dot(x, getp((l, "l1_w")),
                        preferred_element_type=jnp.float32) + getp((l, "l1_b"))
            h = jnp.maximum(h, 0.0)
            ff = jnp.dot(h, getp((l, "l2_w")),
                         preferred_element_type=jnp.float32) + getp((l, "l2_b"))
            x = _layer_norm(x + ff, getp((l, "ln3_w")), getp((l, "ln3_b")))

        out_ref[...] = x.reshape(B, Lt, D).astype(out_ref.dtype)

    vmem = pltpu.MemorySpace.VMEM
    return pl.pallas_call(
        kernel,
        out_shape=jax.ShapeDtypeStruct((B, Lt, D), target.dtype),
        in_specs=[pl.BlockSpec(memory_space=vmem),
                  pl.BlockSpec(memory_space=vmem),
                  pl.BlockSpec(memory_space=vmem)],
        out_specs=pl.BlockSpec(memory_space=vmem),
    )(target, encoder_out, packed)


# ----------------------------- params / reference ----------------------------
def init_params(key):
    ks = jax.random.split(key, len(PARAM_DEFS))
    p = {}
    for k, (name, r, c) in zip(ks, PARAM_DEFS):
        if r > 1:                                             # weight matrix
            a = 0.3 * jax.random.normal(k, (N_LAYERS, r, c))
        elif name.startswith("ln") and name.endswith("_w"):   # LN scale ~ 1
            a = 1.0 + 0.05 * jax.random.normal(k, (N_LAYERS, r, c))
        else:                                                 # bias
            a = 0.05 * jax.random.normal(k, (N_LAYERS, r, c))
        p[name] = a.astype(jnp.float32)
    return p


def reference(target, encoder_out, params):
    """Pure-JAX mirror of the PyTorch post-norm decoder stack."""
    def ln(x, w, b):
        mu = x.mean(-1, keepdims=True)
        var = ((x - mu) ** 2).mean(-1, keepdims=True)
        return (x - mu) / jnp.sqrt(var + LN_EPS) * w + b

    def mha(q_in, kv_in, qw, qb, kvw, kvb, ow, ob):
        d, hd = D_MODEL, HEAD_DIM
        q = q_in @ qw + qb
        kv = kv_in @ kvw + kvb
        k, v = kv[..., :d], kv[..., d:]
        B, Lq, _ = q.shape
        Lk = k.shape[1]
        q = q.reshape(B, Lq, N_HEADS, hd).transpose(0, 2, 1, 3)
        k = k.reshape(B, Lk, N_HEADS, hd).transpose(0, 2, 1, 3)
        v = v.reshape(B, Lk, N_HEADS, hd).transpose(0, 2, 1, 3)
        s = jnp.einsum("bhqd,bhkd->bhqk", q, k) / math.sqrt(hd)
        p = jax.nn.softmax(s, axis=-1)
        o = jnp.einsum("bhqk,bhkd->bhqd", p, v).transpose(0, 2, 1, 3).reshape(B, Lq, d)
        return o @ ow + ob

    x = target.astype(jnp.float32)
    mem = encoder_out.astype(jnp.float32)
    d = D_MODEL
    for l in range(N_LAYERS):
        P = lambda n: params[n][l]
        sa_w, sa_b = P("sa_w"), P("sa_b")
        sa = mha(x, x, sa_w[:, :d], sa_b[:, :d], sa_w[:, d:], sa_b[:, d:],
                 P("sa_ow"), P("sa_ob"))
        x = ln(x + sa, P("ln1_w"), P("ln1_b"))
        ca = mha(x, mem, P("ca_qw"), P("ca_qb"), P("ca_kvw"), P("ca_kvb"),
                 P("ca_ow"), P("ca_ob"))
        x = ln(x + ca, P("ln2_w"), P("ln2_b"))
        h = jnp.maximum(x @ P("l1_w") + P("l1_b"), 0.0)
        ff = h @ P("l2_w") + P("l2_b")
        x = ln(x + ff, P("ln3_w"), P("ln3_b"))
    return x


if __name__ == "__main__":
    B, Lt, Ls = 2, 8, 8
    key = jax.random.PRNGKey(0)
    k_t, k_m, k_p = jax.random.split(key, 3)
    target = jax.random.normal(k_t, (B, Lt, D_MODEL), dtype=jnp.float32)
    encoder_out = jax.random.normal(k_m, (B, Ls, D_MODEL), dtype=jnp.float32)
    params = init_params(k_p)

    out = jax.block_until_ready(transformer_decoder(target, encoder_out, params))
    ref = jax.block_until_ready(reference(target, encoder_out, params))

    err = float(jnp.max(jnp.abs(out - ref)))
    assert out.shape == (B, Lt, D_MODEL), out.shape
    # tolerance covers default (non-'highest') MXU precision, approx reciprocal,
    # the no-max-shift softmax and the E[x^2]-mu^2 LayerNorm variance
    assert err < 3e-2, f"max abs err {err}"
    print("KERNEL_OK")
</pallas_src>

<mosaic_0001>
module attributes {stable_mosaic.version = 11 : i64} {
  func.func @kernel(%arg0: memref<2x8x16xf32, #tpu.memory_space<vmem>>, %arg1: memref<2x8x16xf32, #tpu.memory_space<vmem>>, %arg2: memref<272x64xf32, #tpu.memory_space<vmem>>, %arg3: memref<2x8x16xf32, #tpu.memory_space<vmem>>) attributes {dimension_semantics = [], scalar_prefetch = 0 : i64, scratch_operands = 0 : i64, tpu.core_type = #tpu.core_type<tc>} {
    %c0 = arith.constant 0 : index
    %c0_0 = arith.constant 0 : index
    %c0_1 = arith.constant 0 : index
    %0 = vector.load %arg0[%c0, %c0_0, %c0_1] : memref<2x8x16xf32, #tpu.memory_space<vmem>>, vector<2x8x16xf32>
    %1 = vector.shape_cast %0 : vector<2x8x16xf32> to vector<16x16xf32>
    %c0_2 = arith.constant 0 : index
    %c0_3 = arith.constant 0 : index
    %c0_4 = arith.constant 0 : index
    %2 = vector.load %arg1[%c0_2, %c0_3, %c0_4] : memref<2x8x16xf32, #tpu.memory_space<vmem>>, vector<2x8x16xf32>
    %3 = vector.shape_cast %2 : vector<2x8x16xf32> to vector<16x16xf32>
    %4 = tpu.iota {dimensions = array<i32: 0>} : vector<32x32xi32>
    %5 = tpu.iota {dimensions = array<i32: 1>} : vector<32x32xi32>
    %c0_i32 = arith.constant 0 : i32
    %6 = vector.broadcast %c0_i32 : i32 to vector<32x32xi32>
    %7 = arith.cmpi sge, %4, %6 : vector<32x32xi32>
    %c8_i32 = arith.constant 8 : i32
    %8 = vector.broadcast %c8_i32 : i32 to vector<32x32xi32>
    %9 = arith.cmpi slt, %4, %8 : vector<32x32xi32>
    %10 = arith.andi %7, %9 : vector<32x32xi1>
    %c0_i32_5 = arith.constant 0 : i32
    %11 = vector.broadcast %c0_i32_5 : i32 to vector<32x32xi32>
    %12 = arith.cmpi sge, %5, %11 : vector<32x32xi32>
    %13 = arith.andi %10, %12 : vector<32x32xi1>
    %c8_i32_6 = arith.constant 8 : i32
    %14 = vector.broadcast %c8_i32_6 : i32 to vector<32x32xi32>
    %15 = arith.cmpi slt, %5, %14 : vector<32x32xi32>
    %16 = arith.andi %13, %15 : vector<32x32xi1>
    %c8_i32_7 = arith.constant 8 : i32
    %17 = vector.broadcast %c8_i32_7 : i32 to vector<32x32xi32>
    %18 = arith.cmpi sge, %4, %17 : vector<32x32xi32>
    %c16_i32 = arith.constant 16 : i32
    %19 = vector.broadcast %c16_i32 : i32 to vector<32x32xi32>
    %20 = arith.cmpi slt, %4, %19 : vector<32x32xi32>
    %21 = arith.andi %18, %20 : vector<32x32xi1>
    %c8_i32_8 = arith.constant 8 : i32
    %22 = vector.broadcast %c8_i32_8 : i32 to vector<32x32xi32>
    %23 = arith.cmpi sge, %5, %22 : vector<32x32xi32>
    %24 = arith.andi %21, %23 : vector<32x32xi1>
    %c16_i32_9 = arith.constant 16 : i32
    %25 = vector.broadcast %c16_i32_9 : i32 to vector<32x32xi32>
    %26 = arith.cmpi slt, %5, %25 : vector<32x32xi32>
    %27 = arith.andi %24, %26 : vector<32x32xi1>
    %28 = arith.ori %16, %27 : vector<32x32xi1>
    %c16_i32_10 = arith.constant 16 : i32
    %29 = vector.broadcast %c16_i32_10 : i32 to vector<32x32xi32>
    %30 = arith.cmpi sge, %4, %29 : vector<32x32xi32>
    %c24_i32 = arith.constant 24 : i32
    %31 = vector.broadcast %c24_i32 : i32 to vector<32x32xi32>
    %32 = arith.cmpi slt, %4, %31 : vector<32x32xi32>
    %33 = arith.andi %30, %32 : vector<32x32xi1>
    %c16_i32_11 = arith.constant 16 : i32
    %34 = vector.broadcast %c16_i32_11 : i32 to vector<32x32xi32>
    %35 = arith.cmpi sge, %5, %34 : vector<32x32xi32>
    %36 = arith.andi %33, %35 : vector<32x32xi1>
    %c24_i32_12 = arith.constant 24 : i32
    %37 = vector.broadcast %c24_i32_12 : i32 to vector<32x32xi32>
    %38 = arith.cmpi slt, %5, %37 : vector<32x32xi32>
    %39 = arith.andi %36, %38 : vector<32x32xi1>
    %40 = arith.ori %28, %39 : vector<32x32xi1>
    %c24_i32_13 = arith.constant 24 : i32
    %41 = vector.broadcast %c24_i32_13 : i32 to vector<32x32xi32>
    %42 = arith.cmpi sge, %4, %41 : vector<32x32xi32>
    %c32_i32 = arith.constant 32 : i32
    %43 = vector.broadcast %c32_i32 : i32 to vector<32x32xi32>
    %44 = arith.cmpi slt, %4, %43 : vector<32x32xi32>
    %45 = arith.andi %42, %44 : vector<32x32xi1>
    %c24_i32_14 = arith.constant 24 : i32
    %46 = vector.broadcast %c24_i32_14 : i32 to vector<32x32xi32>
    %47 = arith.cmpi sge, %5, %46 : vector<32x32xi32>
    %48 = arith.andi %45, %47 : vector<32x32xi1>
    %c32_i32_15 = arith.constant 32 : i32
    %49 = vector.broadcast %c32_i32_15 : i32 to vector<32x32xi32>
    %50 = arith.cmpi slt, %5, %49 : vector<32x32xi32>
    %51 = arith.andi %48, %50 : vector<32x32xi1>
    %52 = arith.ori %40, %51 : vector<32x32xi1>
    %53 = arith.extui %52 : vector<32x32xi1> to vector<32x32xi32>
    %54 = arith.sitofp %53 : vector<32x32xi32> to vector<32x32xf32>
    %55 = tpu.iota {dimensions = array<i32: 0>} : vector<32x32xi32>
    %56 = tpu.iota {dimensions = array<i32: 1>} : vector<32x32xi32>
    %c0_i32_16 = arith.constant 0 : i32
    %57 = vector.broadcast %c0_i32_16 : i32 to vector<32x32xi32>
    %58 = arith.cmpi sge, %55, %57 : vector<32x32xi32>
    %c8_i32_17 = arith.constant 8 : i32
    %59 = vector.broadcast %c8_i32_17 : i32 to vector<32x32xi32>
    %60 = arith.cmpi slt, %55, %59 : vector<32x32xi32>
    %61 = arith.andi %58, %60 : vector<32x32xi1>
    %c0_i32_18 = arith.constant 0 : i32
    %62 = vector.broadcast %c0_i32_18 : i32 to vector<32x32xi32>
    %63 = arith.cmpi sge, %56, %62 : vector<32x32xi32>
    %64 = arith.andi %61, %63 : vector<32x32xi1>
    %c8_i32_19 = arith.constant 8 : i32
    %65 = vector.broadcast %c8_i32_19 : i32 to vector<32x32xi32>
    %66 = arith.cmpi slt, %56, %65 : vector<32x32xi32>
    %67 = arith.andi %64, %66 : vector<32x32xi1>
    %c8_i32_20 = arith.constant 8 : i32
    %68 = vector.broadcast %c8_i32_20 : i32 to vector<32x32xi32>
    %69 = arith.cmpi sge, %55, %68 : vector<32x32xi32>
    %c16_i32_21 = arith.constant 16 : i32
    %70 = vector.broadcast %c16_i32_21 : i32 to vector<32x32xi32>
    %71 = arith.cmpi slt, %55, %70 : vector<32x32xi32>
    %72 = arith.andi %69, %71 : vector<32x32xi1>
    %c8_i32_22 = arith.constant 8 : i32
    %73 = vector.broadcast %c8_i32_22 : i32 to vector<32x32xi32>
    %74 = arith.cmpi sge, %56, %73 : vector<32x32xi32>
    %75 = arith.andi %72, %74 : vector<32x32xi1>
    %c16_i32_23 = arith.constant 16 : i32
    %76 = vector.broadcast %c16_i32_23 : i32 to vector<32x32xi32>
    %77 = arith.cmpi slt, %56, %76 : vector<32x32xi32>
    %78 = arith.andi %75, %77 : vector<32x32xi1>
    %79 = arith.ori %67, %78 : vector<32x32xi1>
    %c16_i32_24 = arith.constant 16 : i32
    %80 = vector.broadcast %c16_i32_24 : i32 to vector<32x32xi32>
    %81 = arith.cmpi sge, %55, %80 : vector<32x32xi32>
    %c24_i32_25 = arith.constant 24 : i32
    %82 = vector.broadcast %c24_i32_25 : i32 to vector<32x32xi32>
    %83 = arith.cmpi slt, %55, %82 : vector<32x32xi32>
    %84 = arith.andi %81, %83 : vector<32x32xi1>
    %c16_i32_26 = arith.constant 16 : i32
    %85 = vector.broadcast %c16_i32_26 : i32 to vector<32x32xi32>
    %86 = arith.cmpi sge, %56, %85 : vector<32x32xi32>
    %87 = arith.andi %84, %86 : vector<32x32xi1>
    %c24_i32_27 = arith.constant 24 : i32
    %88 = vector.broadcast %c24_i32_27 : i32 to vector<32x32xi32>
    %89 = arith.cmpi slt, %56, %88 : vector<32x32xi32>
    %90 = arith.andi %87, %89 : vector<32x32xi1>
    %91 = arith.ori %79, %90 : vector<32x32xi1>
    %c24_i32_28 = arith.constant 24 : i32
    %92 = vector.broadcast %c24_i32_28 : i32 to vector<32x32xi32>
    %93 = arith.cmpi sge, %55, %92 : vector<32x32xi32>
    %c32_i32_29 = arith.constant 32 : i32
    %94 = vector.broadcast %c32_i32_29 : i32 to vector<32x32xi32>
    %95 = arith.cmpi slt, %55, %94 : vector<32x32xi32>
    %96 = arith.andi %93, %95 : vector<32x32xi1>
    %c24_i32_30 = arith.constant 24 : i32
    %97 = vector.broadcast %c24_i32_30 : i32 to vector<32x32xi32>
    %98 = arith.cmpi sge, %56, %97 : vector<32x32xi32>
    %99 = arith.andi %96, %98 : vector<32x32xi1>
    %c32_i32_31 = arith.constant 32 : i32
    %100 = vector.broadcast %c32_i32_31 : i32 to vector<32x32xi32>
    %101 = arith.cmpi slt, %56, %100 : vector<32x32xi32>
    %102 = arith.andi %99, %101 : vector<32x32xi1>
    %103 = arith.ori %91, %102 : vector<32x32xi1>
    %104 = arith.extui %103 : vector<32x32xi1> to vector<32x32xi32>
    %105 = arith.sitofp %104 : vector<32x32xi32> to vector<32x32xf32>
    %c0_32 = arith.constant 0 : index
    %c0_33 = arith.constant 0 : index
    %106 = vector.load %arg2[%c0_32, %c0_33] : memref<272x64xf32, #tpu.memory_space<vmem>>, vector<16x64xf32>
    %cst = arith.constant dense<0.000000e+00> : vector<16x64xf32>
    %107 = tpu.matmul %3, %106, %cst {dimension_numbers = #tpu.dot_dimension_numbers<[1], [0], [0], [1], [0, 0, 1, 1], [], []>} : vector<16x16xf32>, vector<16x64xf32>, vector<16x64xf32> -> vector<16x64xf32>
    %c240 = arith.constant 240 : index
    %c0_34 = arith.constant 0 : index
    %108 = vector.load %arg2[%c240, %c0_34] : memref<272x64xf32, #tpu.memory_space<vmem>>, vector<1x64xf32>
    %109 = vector.broadcast %108 : vector<1x64xf32> to vector<16x64xf32>
    %110 = arith.addf %107, %109 : vector<16x64xf32>
    %c16 = arith.constant 16 : index
    %c0_35 = arith.constant 0 : index
    %111 = vector.load %arg2[%c16, %c0_35] : memref<272x64xf32, #tpu.memory_space<vmem>>, vector<16x48xf32>
    %cst_36 = arith.constant dense<0.000000e+00> : vector<16x48xf32>
    %112 = tpu.matmul %1, %111, %cst_36 {dimension_numbers = #tpu.dot_dimension_numbers<[1], [0], [0], [1], [0, 0, 1, 1], [], []>} : vector<16x16xf32>, vector<16x48xf32>, vector<16x48xf32> -> vector<16x48xf32>
    %c241 = arith.constant 241 : index
    %c0_37 = arith.constant 0 : index
    %113 = vector.load %arg2[%c241, %c0_37] : memref<272x64xf32, #tpu.memory_space<vmem>>, vector<1x48xf32>
    %114 = vector.broadcast %113 : vector<1x48xf32> to vector<16x48xf32>
    %115 = arith.addf %112, %114 : vector<16x48xf32>
    %116 = vector.extract_strided_slice %115 {offsets = [0, 0], sizes = [16, 16], strides = [1, 1]} : vector<16x48xf32> to vector<16x16xf32>
    %117 = vector.extract_strided_slice %115 {offsets = [0, 16], sizes = [16, 16], strides = [1, 1]} : vector<16x48xf32> to vector<16x16xf32>
    %118 = vector.extract_strided_slice %115 {offsets = [0, 32], sizes = [16, 16], strides = [1, 1]} : vector<16x48xf32> to vector<16x16xf32>
    %c32 = arith.constant 32 : index
    %c0_38 = arith.constant 0 : index
    %119 = vector.load %arg2[%c32, %c0_38] : memref<272x64xf32, #tpu.memory_space<vmem>>, vector<16x16xf32>
    %120 = vector.extract_strided_slice %116 {offsets = [0, 0], sizes = [16, 8], strides = [1, 1]} : vector<16x16xf32> to vector<16x8xf32>
    %121 = vector.extract_strided_slice %116 {offsets = [0, 8], sizes = [16, 8], strides = [1, 1]} : vector<16x16xf32> to vector<16x8xf32>
    %122 = tpu.concatenate %120, %121 in 0 : vector<16x8xf32>, vector<16x8xf32> -> vector<32x8xf32>
    %cst_39 = arith.constant 0.353553385 : f32
    %123 = vector.broadcast %cst_39 : f32 to vector<32x8xf32>
    %124 = arith.mulf %122, %123 : vector<32x8xf32>
    %125 = vector.extract_strided_slice %117 {offsets = [0, 0], sizes = [16, 8], strides = [1, 1]} : vector<16x16xf32> to vector<16x8xf32>
    %126 = vector.extract_strided_slice %117 {offsets = [0, 8], sizes = [16, 8], strides = [1, 1]} : vector<16x16xf32> to vector<16x8xf32>
    %127 = tpu.concatenate %125, %126 in 0 : vector<16x8xf32>, vector<16x8xf32> -> vector<32x8xf32>
    %128 = vector.extract_strided_slice %118 {offsets = [0, 0], sizes = [16, 8], strides = [1, 1]} : vector<16x16xf32> to vector<16x8xf32>
    %129 = vector.extract_strided_slice %118 {offsets = [0, 8], sizes = [16, 8], strides = [1, 1]} : vector<16x16xf32> to vector<16x8xf32>
    %130 = tpu.concatenate %128, %129 in 0 : vector<16x8xf32>, vector<16x8xf32> -> vector<32x8xf32>
    %cst_40 = arith.constant dense<0.000000e+00> : vector<32x32xf32>
    %131 = tpu.matmul %124, %127, %cst_40 {dimension_numbers = #tpu.dot_dimension_numbers<[1], [1], [0], [0], [0, 0, 1, 0], [], []>} : vector<32x8xf32>, vector<32x8xf32>, vector<32x32xf32> -> vector<32x32xf32>
    %132 = math.exp %131 : vector<32x32xf32>
    %133 = arith.mulf %132, %54 : vector<32x32xf32>
    %cst_41 = arith.constant dense<0.000000e+00> : vector<32xf32>
    %134 = vector.multi_reduction <add>, %133, %cst_41 [1] : vector<32x32xf32> to vector<32xf32>
    %135 = vector.shape_cast %134 : vector<32xf32> to vector<32x1xf32>
    %136 = tpu.reciprocal %135 {approx = true} : vector<32x1xf32> -> vector<32x1xf32>
    %137 = vector.broadcast %136 : vector<32x1xf32> to vector<32x32xf32>
    %138 = arith.mulf %133, %137 : vector<32x32xf32>
    %cst_42 = arith.constant dense<0.000000e+00> : vector<32x8xf32>
    %139 = tpu.matmul %138, %130, %cst_42 {dimension_numbers = #tpu.dot_dimension_numbers<[1], [0], [0], [1], [0, 0, 1, 1], [], []>} : vector<32x32xf32>, vector<32x8xf32>, vector<32x8xf32> -> vector<32x8xf32>
    %140 = vector.extract_strided_slice %139 {offsets = [0, 0], sizes = [16, 8], strides = [1, 1]} : vector<32x8xf32> to vector<16x8xf32>
    %141 = vector.extract_strided_slice %139 {offsets = [16, 0], sizes = [16, 8], strides = [1, 1]} : vector<32x8xf32> to vector<16x8xf32>
    %142 = tpu.concatenate %140, %141 in 1 : vector<16x8xf32>, vector<16x8xf32> -> vector<16x16xf32>
    %cst_43 = arith.constant dense<0.000000e+00> : vector<16x16xf32>
    %143 = tpu.matmul %142, %119, %cst_43 {dimension_numbers = #tpu.dot_dimension_numbers<[1], [0], [0], [1], [0, 0, 1, 1], [], []>} : vector<16x16xf32>, vector<16x16xf32>, vector<16x16xf32> -> vector<16x16xf32>
    %c242 = arith.constant 242 : index
    %c0_44 = arith.constant 0 : index
    %144 = vector.load %arg2[%c242, %c0_44] : memref<272x64xf32, #tpu.memory_space<vmem>>, vector<1x16xf32>
    %145 = vector.broadcast %144 : vector<1x16xf32> to vector<16x16xf32>
    %146 = arith.addf %143, %145 : vector<16x16xf32>
    %147 = arith.addf %1, %146 : vector<16x16xf32>
    %c247 = arith.constant 247 : index
    %c0_45 = arith.constant 0 : index
    %148 = vector.load %arg2[%c247, %c0_45] : memref<272x64xf32, #tpu.memory_space<vmem>>, vector<1x16xf32>
    %c248 = arith.constant 248 : index
    %c0_46 = arith.constant 0 : index
    %149 = vector.load %arg2[%c248, %c0_46] : memref<272x64xf32, #tpu.memory_space<vmem>>, vector<1x16xf32>
    %cst_47 = arith.constant dense<0.000000e+00> : vector<16xf32>
    %150 = vector.multi_reduction <add>, %147, %cst_47 [1] : vector<16x16xf32> to vector<16xf32>
    %151 = vector.shape_cast %150 : vector<16xf32> to vector<16x1xf32>
    %cst_48 = arith.constant 1.600000e+01 : f32
    %152 = vector.broadcast %cst_48 : f32 to vector<16x1xf32>
    %153 = arith.divf %151, %152 : vector<16x1xf32>
    %154 = arith.mulf %147, %147 : vector<16x16xf32>
    %cst_49 = arith.constant dense<0.000000e+00> : vector<16xf32>
    %155 = vector.multi_reduction <add>, %154, %cst_49 [1] : vector<16x16xf32> to vector<16xf32>
    %156 = vector.shape_cast %155 : vector<16xf32> to vector<16x1xf32>
    %cst_50 = arith.constant 1.600000e+01 : f32
    %157 = vector.broadcast %cst_50 : f32 to vector<16x1xf32>
    %158 = arith.divf %156, %157 : vector<16x1xf32>
    %159 = arith.mulf %153, %153 : vector<16x1xf32>
    %160 = arith.subf %158, %159 : vector<16x1xf32>
    %161 = vector.broadcast %153 : vector<16x1xf32> to vector<16x16xf32>
    %162 = arith.subf %147, %161 : vector<16x16xf32>
    %cst_51 = arith.constant 9.99999974E-6 : f32
    %163 = vector.broadcast %cst_51 : f32 to vector<16x1xf32>
    %164 = arith.addf %160, %163 : vector<16x1xf32>
    %165 = math.rsqrt %164 : vector<16x1xf32>
    %166 = vector.broadcast %165 : vector<16x1xf32> to vector<16x16xf32>
    %167 = arith.mulf %162, %166 : vector<16x16xf32>
    %168 = vector.broadcast %148 : vector<1x16xf32> to vector<16x16xf32>
    %169 = arith.mulf %167, %168 : vector<16x16xf32>
    %170 = vector.broadcast %149 : vector<1x16xf32> to vector<16x16xf32>
    %171 = arith.addf %169, %170 : vector<16x16xf32>
    %c48 = arith.constant 48 : index
    %c0_52 = arith.constant 0 : index
    %172 = vector.load %arg2[%c48, %c0_52] : memref<272x64xf32, #tpu.memory_space<vmem>>, vector<16x16xf32>
    %cst_53 = arith.constant dense<0.000000e+00> : vector<16x16xf32>
    %173 = tpu.matmul %171, %172, %cst_53 {dimension_numbers = #tpu.dot_dimension_numbers<[1], [0], [0], [1], [0, 0, 1, 1], [], []>} : vector<16x16xf32>, vector<16x16xf32>, vector<16x16xf32> -> vector<16x16xf32>
    %c243 = arith.constant 243 : index
    %c0_54 = arith.constant 0 : index
    %174 = vector.load %arg2[%c243, %c0_54] : memref<272x64xf32, #tpu.memory_space<vmem>>, vector<1x16xf32>
    %175 = vector.broadcast %174 : vector<1x16xf32> to vector<16x16xf32>
    %176 = arith.addf %173, %175 : vector<16x16xf32>
    %177 = vector.extract_strided_slice %110 {offsets = [0, 0], sizes = [16, 32], strides = [1, 1]} : vector<16x64xf32> to vector<16x32xf32>
    %178 = vector.extract_strided_slice %177 {offsets = [0, 0], sizes = [16, 16], strides = [1, 1]} : vector<16x32xf32> to vector<16x16xf32>
    %179 = vector.extract_strided_slice %177 {offsets = [0, 16], sizes = [16, 16], strides = [1, 1]} : vector<16x32xf32> to vector<16x16xf32>
    %c64 = arith.constant 64 : index
    %c0_55 = arith.constant 0 : index
    %180 = vector.load %arg2[%c64, %c0_55] : memref<272x64xf32, #tpu.memory_space<vmem>>, vector<16x16xf32>
    %181 = vector.extract_strided_slice %176 {offsets = [0, 0], sizes = [16, 8], strides = [1, 1]} : vector<16x16xf32> to vector<16x8xf32>
    %182 = vector.extract_strided_slice %176 {offsets = [0, 8], sizes = [16, 8], strides = [1, 1]} : vector<16x16xf32> to vector<16x8xf32>
    %183 = tpu.concatenate %181, %182 in 0 : vector<16x8xf32>, vector<16x8xf32> -> vector<32x8xf32>
    %cst_56 = arith.constant 0.353553385 : f32
    %184 = vector.broadcast %cst_56 : f32 to vector<32x8xf32>
    %185 = arith.mulf %183, %184 : vector<32x8xf32>
    %186 = vector.extract_strided_slice %178 {offsets = [0, 0], sizes = [16, 8], strides = [1, 1]} : vector<16x16xf32> to vector<16x8xf32>
    %187 = vector.extract_strided_slice %178 {offsets = [0, 8], sizes = [16, 8], strides = [1, 1]} : vector<16x16xf32> to vector<16x8xf32>
    %188 = tpu.concatenate %186, %187 in 0 : vector<16x8xf32>, vector<16x8xf32> -> vector<32x8xf32>
    %189 = vector.extract_strided_slice %179 {offsets = [0, 0], sizes = [16, 8], strides = [1, 1]} : vector<16x16xf32> to vector<16x8xf32>
    %190 = vector.extract_strided_slice %179 {offsets = [0, 8], sizes = [16, 8], strides = [1, 1]} : vector<16x16xf32> to vector<16x8xf32>
    %191 = tpu.concatenate %189, %190 in 0 : vector<16x8xf32>, vector<16x8xf32> -> vector<32x8xf32>
    %cst_57 = arith.constant dense<0.000000e+00> : vector<32x32xf32>
    %192 = tpu.matmul %185, %188, %cst_57 {dimension_numbers = #tpu.dot_dimension_numbers<[1], [1], [0], [0], [0, 0, 1, 0], [], []>} : vector<32x8xf32>, vector<32x8xf32>, vector<32x32xf32> -> vector<32x32xf32>
    %193 = math.exp %192 : vector<32x32xf32>
    %194 = arith.mulf %193, %105 : vector<32x32xf32>
    %cst_58 = arith.constant dense<0.000000e+00> : vector<32xf32>
    %195 = vector.multi_reduction <add>, %194, %cst_58 [1] : vector<32x32xf32> to vector<32xf32>
    %196 = vector.shape_cast %195 : vector<32xf32> to vector<32x1xf32>
    %197 = tpu.reciprocal %196 {approx = true} : vector<32x1xf32> -> vector<32x1xf32>
    %198 = vector.broadcast %197 : vector<32x1xf32> to vector<32x32xf32>
    %199 = arith.mulf %194, %198 : vector<32x32xf32>
    %cst_59 = arith.constant dense<0.000000e+00> : vector<32x8xf32>
    %200 = tpu.matmul %199, %191, %cst_59 {dimension_numbers = #tpu.dot_dimension_numbers<[1], [0], [0], [1], [0, 0, 1, 1], [], []>} : vector<32x32xf32>, vector<32x8xf32>, vector<32x8xf32> -> vector<32x8xf32>
    %201 = vector.extract_strided_slice %200 {offsets = [0, 0], sizes = [16, 8], strides = [1, 1]} : vector<32x8xf32> to vector<16x8xf32>
    %202 = vector.extract_strided_slice %200 {offsets = [16, 0], sizes = [16, 8], strides = [1, 1]} : vector<32x8xf32> to vector<16x8xf32>
    %203 = tpu.concatenate %201, %202 in 1 : vector<16x8xf32>, vector<16x8xf32> -> vector<16x16xf32>
    %cst_60 = arith.constant dense<0.000000e+00> : vector<16x16xf32>
    %204 = tpu.matmul %203, %180, %cst_60 {dimension_numbers = #tpu.dot_dimension_numbers<[1], [0], [0], [1], [0, 0, 1, 1], [], []>} : vector<16x16xf32>, vector<16x16xf32>, vector<16x16xf32> -> vector<16x16xf32>
    %c244 = arith.constant 244 : index
    %c0_61 = arith.constant 0 : index
    %205 = vector.load %arg2[%c244, %c0_61] : memref<272x64xf32, #tpu.memory_space<vmem>>, vector<1x16xf32>
    %206 = vector.broadcast %205 : vector<1x16xf32> to vector<16x16xf32>
    %207 = arith.addf %204, %206 : vector<16x16xf32>
    %208 = arith.addf %171, %207 : vector<16x16xf32>
    %c249 = arith.constant 249 : index
    %c0_62 = arith.constant 0 : index
    %209 = vector.load %arg2[%c249, %c0_62] : memref<272x64xf32, #tpu.memory_space<vmem>>, vector<1x16xf32>
    %c250 = arith.constant 250 : index
    %c0_63 = arith.constant 0 : index
    %210 = vector.load %arg2[%c250, %c0_63] : memref<272x64xf32, #tpu.memory_space<vmem>>, vector<1x16xf32>
    %cst_64 = arith.constant dense<0.000000e+00> : vector<16xf32>
    %211 = vector.multi_reduction <add>, %208, %cst_64 [1] : vector<16x16xf32> to vector<16xf32>
    %212 = vector.shape_cast %211 : vector<16xf32> to vector<16x1xf32>
    %cst_65 = arith.constant 1.600000e+01 : f32
    %213 = vector.broadcast %cst_65 : f32 to vector<16x1xf32>
    %214 = arith.divf %212, %213 : vector<16x1xf32>
    %215 = arith.mulf %208, %208 : vector<16x16xf32>
    %cst_66 = arith.constant dense<0.000000e+00> : vector<16xf32>
    %216 = vector.multi_reduction <add>, %215, %cst_66 [1] : vector<16x16xf32> to vector<16xf32>
    %217 = vector.shape_cast %216 : vector<16xf32> to vector<16x1xf32>
    %cst_67 = arith.constant 1.600000e+01 : f32
    %218 = vector.broadcast %cst_67 : f32 to vector<16x1xf32>
    %219 = arith.divf %217, %218 : vector<16x1xf32>
    %220 = arith.mulf %214, %214 : vector<16x1xf32>
    %221 = arith.subf %219, %220 : vector<16x1xf32>
    %222 = vector.broadcast %214 : vector<16x1xf32> to vector<16x16xf32>
    %223 = arith.subf %208, %222 : vector<16x16xf32>
    %cst_68 = arith.constant 9.99999974E-6 : f32
    %224 = vector.broadcast %cst_68 : f32 to vector<16x1xf32>
    %225 = arith.addf %221, %224 : vector<16x1xf32>
    %226 = math.rsqrt %225 : vector<16x1xf32>
    %227 = vector.broadcast %226 : vector<16x1xf32> to vector<16x16xf32>
    %228 = arith.mulf %223, %227 : vector<16x16xf32>
    %229 = vector.broadcast %209 : vector<1x16xf32> to vector<16x16xf32>
    %230 = arith.mulf %228, %229 : vector<16x16xf32>
    %231 = vector.broadcast %210 : vector<1x16xf32> to vector<16x16xf32>
    %232 = arith.addf %230, %231 : vector<16x16xf32>
    %c80 = arith.constant 80 : index
    %c0_69 = arith.constant 0 : index
    %233 = vector.load %arg2[%c80, %c0_69] : memref<272x64xf32, #tpu.memory_space<vmem>>, vector<16x32xf32>
    %cst_70 = arith.constant dense<0.000000e+00> : vector<16x32xf32>
    %234 = tpu.matmul %232, %233, %cst_70 {dimension_numbers = #tpu.dot_dimension_numbers<[1], [0], [0], [1], [0, 0, 1, 1], [], []>} : vector<16x16xf32>, vector<16x32xf32>, vector<16x32xf32> -> vector<16x32xf32>
    %c245 = arith.constant 245 : index
    %c0_71 = arith.constant 0 : index
    %235 = vector.load %arg2[%c245, %c0_71] : memref<272x64xf32, #tpu.memory_space<vmem>>, vector<1x32xf32>
    %236 = vector.broadcast %235 : vector<1x32xf32> to vector<16x32xf32>
    %237 = arith.addf %234, %236 : vector<16x32xf32>
    %cst_72 = arith.constant 0.000000e+00 : f32
    %238 = vector.broadcast %cst_72 : f32 to vector<16x32xf32>
    %239 = arith.maximumf %237, %238 : vector<16x32xf32>
    %c96 = arith.constant 96 : index
    %c0_73 = arith.constant 0 : index
    %240 = vector.load %arg2[%c96, %c0_73] : memref<272x64xf32, #tpu.memory_space<vmem>>, vector<32x16xf32>
    %cst_74 = arith.constant dense<0.000000e+00> : vector<16x16xf32>
    %241 = tpu.matmul %239, %240, %cst_74 {dimension_numbers = #tpu.dot_dimension_numbers<[1], [0], [0], [1], [0, 0, 1, 1], [], []>} : vector<16x32xf32>, vector<32x16xf32>, vector<16x16xf32> -> vector<16x16xf32>
    %c246 = arith.constant 246 : index
    %c0_75 = arith.constant 0 : index
    %242 = vector.load %arg2[%c246, %c0_75] : memref<272x64xf32, #tpu.memory_space<vmem>>, vector<1x16xf32>
    %243 = vector.broadcast %242 : vector<1x16xf32> to vector<16x16xf32>
    %244 = arith.addf %241, %243 : vector<16x16xf32>
    %245 = arith.addf %232, %244 : vector<16x16xf32>
    %c251 = arith.constant 251 : index
    %c0_76 = arith.constant 0 : index
    %246 = vector.load %arg2[%c251, %c0_76] : memref<272x64xf32, #tpu.memory_space<vmem>>, vector<1x16xf32>
    %c252 = arith.constant 252 : index
    %c0_77 = arith.constant 0 : index
    %247 = vector.load %arg2[%c252, %c0_77] : memref<272x64xf32, #tpu.memory_space<vmem>>, vector<1x16xf32>
    %cst_78 = arith.constant dense<0.000000e+00> : vector<16xf32>
    %248 = vector.multi_reduction <add>, %245, %cst_78 [1] : vector<16x16xf32> to vector<16xf32>
    %249 = vector.shape_cast %248 : vector<16xf32> to vector<16x1xf32>
    %cst_79 = arith.constant 1.600000e+01 : f32
    %250 = vector.broadcast %cst_79 : f32 to vector<16x1xf32>
    %251 = arith.divf %249, %250 : vector<16x1xf32>
    %252 = arith.mulf %245, %245 : vector<16x16xf32>
    %cst_80 = arith.constant dense<0.000000e+00> : vector<16xf32>
    %253 = vector.multi_reduction <add>, %252, %cst_80 [1] : vector<16x16xf32> to vector<16xf32>
    %254 = vector.shape_cast %253 : vector<16xf32> to vector<16x1xf32>
    %cst_81 = arith.constant 1.600000e+01 : f32
    %255 = vector.broadcast %cst_81 : f32 to vector<16x1xf32>
    %256 = arith.divf %254, %255 : vector<16x1xf32>
    %257 = arith.mulf %251, %251 : vector<16x1xf32>
    %258 = arith.subf %256, %257 : vector<16x1xf32>
    %259 = vector.broadcast %251 : vector<16x1xf32> to vector<16x16xf32>
    %260 = arith.subf %245, %259 : vector<16x16xf32>
    %cst_82 = arith.constant 9.99999974E-6 : f32
    %261 = vector.broadcast %cst_82 : f32 to vector<16x1xf32>
    %262 = arith.addf %258, %261 : vector<16x1xf32>
    %263 = math.rsqrt %262 : vector<16x1xf32>
    %264 = vector.broadcast %263 : vector<16x1xf32> to vector<16x16xf32>
    %265 = arith.mulf %260, %264 : vector<16x16xf32>
    %266 = vector.broadcast %246 : vector<1x16xf32> to vector<16x16xf32>
    %267 = arith.mulf %265, %266 : vector<16x16xf32>
    %268 = vector.broadcast %247 : vector<1x16xf32> to vector<16x16xf32>
    %269 = arith.addf %267, %268 : vector<16x16xf32>
    %c128 = arith.constant 128 : index
    %c0_83 = arith.constant 0 : index
    %270 = vector.load %arg2[%c128, %c0_83] : memref<272x64xf32, #tpu.memory_space<vmem>>, vector<16x48xf32>
    %cst_84 = arith.constant dense<0.000000e+00> : vector<16x48xf32>
    %271 = tpu.matmul %269, %270, %cst_84 {dimension_numbers = #tpu.dot_dimension_numbers<[1], [0], [0], [1], [0, 0, 1, 1], [], []>} : vector<16x16xf32>, vector<16x48xf32>, vector<16x48xf32> -> vector<16x48xf32>
    %c253 = arith.constant 253 : index
    %c0_85 = arith.constant 0 : index
    %272 = vector.load %arg2[%c253, %c0_85] : memref<272x64xf32, #tpu.memory_space<vmem>>, vector<1x48xf32>
    %273 = vector.broadcast %272 : vector<1x48xf32> to vector<16x48xf32>
    %274 = arith.addf %271, %273 : vector<16x48xf32>
    %275 = vector.extract_strided_slice %274 {offsets = [0, 0], sizes = [16, 16], strides = [1, 1]} : vector<16x48xf32> to vector<16x16xf32>
    %276 = vector.extract_strided_slice %274 {offsets = [0, 16], sizes = [16, 16], strides = [1, 1]} : vector<16x48xf32> to vector<16x16xf32>
    %277 = vector.extract_strided_slice %274 {offsets = [0, 32], sizes = [16, 16], strides = [1, 1]} : vector<16x48xf32> to vector<16x16xf32>
    %c144 = arith.constant 144 : index
    %c0_86 = arith.constant 0 : index
    %278 = vector.load %arg2[%c144, %c0_86] : memref<272x64xf32, #tpu.memory_space<vmem>>, vector<16x16xf32>
    %279 = vector.extract_strided_slice %275 {offsets = [0, 0], sizes = [16, 8], strides = [1, 1]} : vector<16x16xf32> to vector<16x8xf32>
    %280 = vector.extract_strided_slice %275 {offsets = [0, 8], sizes = [16, 8], strides = [1, 1]} : vector<16x16xf32> to vector<16x8xf32>
    %281 = tpu.concatenate %279, %280 in 0 : vector<16x8xf32>, vector<16x8xf32> -> vector<32x8xf32>
    %cst_87 = arith.constant 0.353553385 : f32
    %282 = vector.broadcast %cst_87 : f32 to vector<32x8xf32>
    %283 = arith.mulf %281, %282 : vector<32x8xf32>
    %284 = vector.extract_strided_slice %276 {offsets = [0, 0], sizes = [16, 8], strides = [1, 1]} : vector<16x16xf32> to vector<16x8xf32>
    %285 = vector.extract_strided_slice %276 {offsets = [0, 8], sizes = [16, 8], strides = [1, 1]} : vector<16x16xf32> to vector<16x8xf32>
    %286 = tpu.concatenate %284, %285 in 0 : vector<16x8xf32>, vector<16x8xf32> -> vector<32x8xf32>
    %287 = vector.extract_strided_slice %277 {offsets = [0, 0], sizes = [16, 8], strides = [1, 1]} : vector<16x16xf32> to vector<16x8xf32>
    %288 = vector.extract_strided_slice %277 {offsets = [0, 8], sizes = [16, 8], strides = [1, 1]} : vector<16x16xf32> to vector<16x8xf32>
    %289 = tpu.concatenate %287, %288 in 0 : vector<16x8xf32>, vector<16x8xf32> -> vector<32x8xf32>
    %cst_88 = arith.constant dense<0.000000e+00> : vector<32x32xf32>
    %290 = tpu.matmul %283, %286, %cst_88 {dimension_numbers = #tpu.dot_dimension_numbers<[1], [1], [0], [0], [0, 0, 1, 0], [], []>} : vector<32x8xf32>, vector<32x8xf32>, vector<32x32xf32> -> vector<32x32xf32>
    %291 = math.exp %290 : vector<32x32xf32>
    %292 = arith.mulf %291, %54 : vector<32x32xf32>
    %cst_89 = arith.constant dense<0.000000e+00> : vector<32xf32>
    %293 = vector.multi_reduction <add>, %292, %cst_89 [1] : vector<32x32xf32> to vector<32xf32>
    %294 = vector.shape_cast %293 : vector<32xf32> to vector<32x1xf32>
    %295 = tpu.reciprocal %294 {approx = true} : vector<32x1xf32> -> vector<32x1xf32>
    %296 = vector.broadcast %295 : vector<32x1xf32> to vector<32x32xf32>
    %297 = arith.mulf %292, %296 : vector<32x32xf32>
    %cst_90 = arith.constant dense<0.000000e+00> : vector<32x8xf32>
    %298 = tpu.matmul %297, %289, %cst_90 {dimension_numbers = #tpu.dot_dimension_numbers<[1], [0], [0], [1], [0, 0, 1, 1], [], []>} : vector<32x32xf32>, vector<32x8xf32>, vector<32x8xf32> -> vector<32x8xf32>
    %299 = vector.extract_strided_slice %298 {offsets = [0, 0], sizes = [16, 8], strides = [1, 1]} : vector<32x8xf32> to vector<16x8xf32>
    %300 = vector.extract_strided_slice %298 {offsets = [16, 0], sizes = [16, 8], strides = [1, 1]} : vector<32x8xf32> to vector<16x8xf32>
    %301 = tpu.concatenate %299, %300 in 1 : vector<16x8xf32>, vector<16x8xf32> -> vector<16x16xf32>
    %cst_91 = arith.constant dense<0.000000e+00> : vector<16x16xf32>
    %302 = tpu.matmul %301, %278, %cst_91 {dimension_numbers = #tpu.dot_dimension_numbers<[1], [0], [0], [1], [0, 0, 1, 1], [], []>} : vector<16x16xf32>, vector<16x16xf32>, vector<16x16xf32> -> vector<16x16xf32>
    %c254 = arith.constant 254 : index
    %c0_92 = arith.constant 0 : index
    %303 = vector.load %arg2[%c254, %c0_92] : memref<272x64xf32, #tpu.memory_space<vmem>>, vector<1x16xf32>
    %304 = vector.broadcast %303 : vector<1x16xf32> to vector<16x16xf32>
    %305 = arith.addf %302, %304 : vector<16x16xf32>
    %306 = arith.addf %269, %305 : vector<16x16xf32>
    %c259 = arith.constant 259 : index
    %c0_93 = arith.constant 0 : index
    %307 = vector.load %arg2[%c259, %c0_93] : memref<272x64xf32, #tpu.memory_space<vmem>>, vector<1x16xf32>
    %c260 = arith.constant 260 : index
    %c0_94 = arith.constant 0 : index
    %308 = vector.load %arg2[%c260, %c0_94] : memref<272x64xf32, #tpu.memory_space<vmem>>, vector<1x16xf32>
    %cst_95 = arith.constant dense<0.000000e+00> : vector<16xf32>
    %309 = vector.multi_reduction <add>, %306, %cst_95 [1] : vector<16x16xf32> to vector<16xf32>
    %310 = vector.shape_cast %309 : vector<16xf32> to vector<16x1xf32>
    %cst_96 = arith.constant 1.600000e+01 : f32
    %311 = vector.broadcast %cst_96 : f32 to vector<16x1xf32>
    %312 = arith.divf %310, %311 : vector<16x1xf32>
    %313 = arith.mulf %306, %306 : vector<16x16xf32>
    %cst_97 = arith.constant dense<0.000000e+00> : vector<16xf32>
    %314 = vector.multi_reduction <add>, %313, %cst_97 [1] : vector<16x16xf32> to vector<16xf32>
    %315 = vector.shape_cast %314 : vector<16xf32> to vector<16x1xf32>
    %cst_98 = arith.constant 1.600000e+01 : f32
    %316 = vector.broadcast %cst_98 : f32 to vector<16x1xf32>
    %317 = arith.divf %315, %316 : vector<16x1xf32>
    %318 = arith.mulf %312, %312 : vector<16x1xf32>
    %319 = arith.subf %317, %318 : vector<16x1xf32>
    %320 = vector.broadcast %312 : vector<16x1xf32> to vector<16x16xf32>
    %321 = arith.subf %306, %320 : vector<16x16xf32>
    %cst_99 = arith.constant 9.99999974E-6 : f32
    %322 = vector.broadcast %cst_99 : f32 to vector<16x1xf32>
    %323 = arith.addf %319, %322 : vector<16x1xf32>
    %324 = math.rsqrt %323 : vector<16x1xf32>
    %325 = vector.broadcast %324 : vector<16x1xf32> to vector<16x16xf32>
    %326 = arith.mulf %321, %325 : vector<16x16xf32>
    %327 = vector.broadcast %307 : vector<1x16xf32> to vector<16x16xf32>
    %328 = arith.mulf %326, %327 : vector<16x16xf32>
    %329 = vector.broadcast %308 : vector<1x16xf32> to vector<16x16xf32>
    %330 = arith.addf %328, %329 : vector<16x16xf32>
    %c160 = arith.constant 160 : index
    %c0_100 = arith.constant 0 : index
    %331 = vector.load %arg2[%c160, %c0_100] : memref<272x64xf32, #tpu.memory_space<vmem>>, vector<16x16xf32>
    %cst_101 = arith.constant dense<0.000000e+00> : vector<16x16xf32>
    %332 = tpu.matmul %330, %331, %cst_101 {dimension_numbers = #tpu.dot_dimension_numbers<[1], [0], [0], [1], [0, 0, 1, 1], [], []>} : vector<16x16xf32>, vector<16x16xf32>, vector<16x16xf32> -> vector<16x16xf32>
    %c255 = arith.constant 255 : index
    %c0_102 = arith.constant 0 : index
    %333 = vector.load %arg2[%c255, %c0_102] : memref<272x64xf32, #tpu.memory_space<vmem>>, vector<1x16xf32>
    %334 = vector.broadcast %333 : vector<1x16xf32> to vector<16x16xf32>
    %335 = arith.addf %332, %334 : vector<16x16xf32>
    %336 = vector.extract_strided_slice %110 {offsets = [0, 32], sizes = [16, 32], strides = [1, 1]} : vector<16x64xf32> to vector<16x32xf32>
    %337 = vector.extract_strided_slice %336 {offsets = [0, 0], sizes = [16, 16], strides = [1, 1]} : vector<16x32xf32> to vector<16x16xf32>
    %338 = vector.extract_strided_slice %336 {offsets = [0, 16], sizes = [16, 16], strides = [1, 1]} : vector<16x32xf32> to vector<16x16xf32>
    %c176 = arith.constant 176 : index
    %c0_103 = arith.constant 0 : index
    %339 = vector.load %arg2[%c176, %c0_103] : memref<272x64xf32, #tpu.memory_space<vmem>>, vector<16x16xf32>
    %340 = vector.extract_strided_slice %335 {offsets = [0, 0], sizes = [16, 8], strides = [1, 1]} : vector<16x16xf32> to vector<16x8xf32>
    %341 = vector.extract_strided_slice %335 {offsets = [0, 8], sizes = [16, 8], strides = [1, 1]} : vector<16x16xf32> to vector<16x8xf32>
    %342 = tpu.concatenate %340, %341 in 0 : vector<16x8xf32>, vector<16x8xf32> -> vector<32x8xf32>
    %cst_104 = arith.constant 0.353553385 : f32
    %343 = vector.broadcast %cst_104 : f32 to vector<32x8xf32>
    %344 = arith.mulf %342, %343 : vector<32x8xf32>
    %345 = vector.extract_strided_slice %337 {offsets = [0, 0], sizes = [16, 8], strides = [1, 1]} : vector<16x16xf32> to vector<16x8xf32>
    %346 = vector.extract_strided_slice %337 {offsets = [0, 8], sizes = [16, 8], strides = [1, 1]} : vector<16x16xf32> to vector<16x8xf32>
    %347 = tpu.concatenate %345, %346 in 0 : vector<16x8xf32>, vector<16x8xf32> -> vector<32x8xf32>
    %348 = vector.extract_strided_slice %338 {offsets = [0, 0], sizes = [16, 8], strides = [1, 1]} : vector<16x16xf32> to vector<16x8xf32>
    %349 = vector.extract_strided_slice %338 {offsets = [0, 8], sizes = [16, 8], strides = [1, 1]} : vector<16x16xf32> to vector<16x8xf32>
    %350 = tpu.concatenate %348, %349 in 0 : vector<16x8xf32>, vector<16x8xf32> -> vector<32x8xf32>
    %cst_105 = arith.constant dense<0.000000e+00> : vector<32x32xf32>
    %351 = tpu.matmul %344, %347, %cst_105 {dimension_numbers = #tpu.dot_dimension_numbers<[1], [1], [0], [0], [0, 0, 1, 0], [], []>} : vector<32x8xf32>, vector<32x8xf32>, vector<32x32xf32> -> vector<32x32xf32>
    %352 = math.exp %351 : vector<32x32xf32>
    %353 = arith.mulf %352, %105 : vector<32x32xf32>
    %cst_106 = arith.constant dense<0.000000e+00> : vector<32xf32>
    %354 = vector.multi_reduction <add>, %353, %cst_106 [1] : vector<32x32xf32> to vector<32xf32>
    %355 = vector.shape_cast %354 : vector<32xf32> to vector<32x1xf32>
    %356 = tpu.reciprocal %355 {approx = true} : vector<32x1xf32> -> vector<32x1xf32>
    %357 = vector.broadcast %356 : vector<32x1xf32> to vector<32x32xf32>
    %358 = arith.mulf %353, %357 : vector<32x32xf32>
    %cst_107 = arith.constant dense<0.000000e+00> : vector<32x8xf32>
    %359 = tpu.matmul %358, %350, %cst_107 {dimension_numbers = #tpu.dot_dimension_numbers<[1], [0], [0], [1], [0, 0, 1, 1], [], []>} : vector<32x32xf32>, vector<32x8xf32>, vector<32x8xf32> -> vector<32x8xf32>
    %360 = vector.extract_strided_slice %359 {offsets = [0, 0], sizes = [16, 8], strides = [1, 1]} : vector<32x8xf32> to vector<16x8xf32>
    %361 = vector.extract_strided_slice %359 {offsets = [16, 0], sizes = [16, 8], strides = [1, 1]} : vector<32x8xf32> to vector<16x8xf32>
    %362 = tpu.concatenate %360, %361 in 1 : vector<16x8xf32>, vector<16x8xf32> -> vector<16x16xf32>
    %cst_108 = arith.constant dense<0.000000e+00> : vector<16x16xf32>
    %363 = tpu.matmul %362, %339, %cst_108 {dimension_numbers = #tpu.dot_dimension_numbers<[1], [0], [0], [1], [0, 0, 1, 1], [], []>} : vector<16x16xf32>, vector<16x16xf32>, vector<16x16xf32> -> vector<16x16xf32>
    %c256 = arith.constant 256 : index
    %c0_109 = arith.constant 0 : index
    %364 = vector.load %arg2[%c256, %c0_109] : memref<272x64xf32, #tpu.memory_space<vmem>>, vector<1x16xf32>
    %365 = vector.broadcast %364 : vector<1x16xf32> to vector<16x16xf32>
    %366 = arith.addf %363, %365 : vector<16x16xf32>
    %367 = arith.addf %330, %366 : vector<16x16xf32>
    %c261 = arith.constant 261 : index
    %c0_110 = arith.constant 0 : index
    %368 = vector.load %arg2[%c261, %c0_110] : memref<272x64xf32, #tpu.memory_space<vmem>>, vector<1x16xf32>
    %c262 = arith.constant 262 : index
    %c0_111 = arith.constant 0 : index
    %369 = vector.load %arg2[%c262, %c0_111] : memref<272x64xf32, #tpu.memory_space<vmem>>, vector<1x16xf32>
    %cst_112 = arith.constant dense<0.000000e+00> : vector<16xf32>
    %370 = vector.multi_reduction <add>, %367, %cst_112 [1] : vector<16x16xf32> to vector<16xf32>
    %371 = vector.shape_cast %370 : vector<16xf32> to vector<16x1xf32>
    %cst_113 = arith.constant 1.600000e+01 : f32
    %372 = vector.broadcast %cst_113 : f32 to vector<16x1xf32>
    %373 = arith.divf %371, %372 : vector<16x1xf32>
    %374 = arith.mulf %367, %367 : vector<16x16xf32>
    %cst_114 = arith.constant dense<0.000000e+00> : vector<16xf32>
    %375 = vector.multi_reduction <add>, %374, %cst_114 [1] : vector<16x16xf32> to vector<16xf32>
    %376 = vector.shape_cast %375 : vector<16xf32> to vector<16x1xf32>
    %cst_115 = arith.constant 1.600000e+01 : f32
    %377 = vector.broadcast %cst_115 : f32 to vector<16x1xf32>
    %378 = arith.divf %376, %377 : vector<16x1xf32>
    %379 = arith.mulf %373, %373 : vector<16x1xf32>
    %380 = arith.subf %378, %379 : vector<16x1xf32>
    %381 = vector.broadcast %373 : vector<16x1xf32> to vector<16x16xf32>
    %382 = arith.subf %367, %381 : vector<16x16xf32>
    %cst_116 = arith.constant 9.99999974E-6 : f32
    %383 = vector.broadcast %cst_116 : f32 to vector<16x1xf32>
    %384 = arith.addf %380, %383 : vector<16x1xf32>
    %385 = math.rsqrt %384 : vector<16x1xf32>
    %386 = vector.broadcast %385 : vector<16x1xf32> to vector<16x16xf32>
    %387 = arith.mulf %382, %386 : vector<16x16xf32>
    %388 = vector.broadcast %368 : vector<1x16xf32> to vector<16x16xf32>
    %389 = arith.mulf %387, %388 : vector<16x16xf32>
    %390 = vector.broadcast %369 : vector<1x16xf32> to vector<16x16xf32>
    %391 = arith.addf %389, %390 : vector<16x16xf32>
    %c192 = arith.constant 192 : index
    %c0_117 = arith.constant 0 : index
    %392 = vector.load %arg2[%c192, %c0_117] : memref<272x64xf32, #tpu.memory_space<vmem>>, vector<16x32xf32>
    %cst_118 = arith.constant dense<0.000000e+00> : vector<16x32xf32>
    %393 = tpu.matmul %391, %392, %cst_118 {dimension_numbers = #tpu.dot_dimension_numbers<[1], [0], [0], [1], [0, 0, 1, 1], [], []>} : vector<16x16xf32>, vector<16x32xf32>, vector<16x32xf32> -> vector<16x32xf32>
    %c257 = arith.constant 257 : index
    %c0_119 = arith.constant 0 : index
    %394 = vector.load %arg2[%c257, %c0_119] : memref<272x64xf32, #tpu.memory_space<vmem>>, vector<1x32xf32>
    %395 = vector.broadcast %394 : vector<1x32xf32> to vector<16x32xf32>
    %396 = arith.addf %393, %395 : vector<16x32xf32>
    %cst_120 = arith.constant 0.000000e+00 : f32
    %397 = vector.broadcast %cst_120 : f32 to vector<16x32xf32>
    %398 = arith.maximumf %396, %397 : vector<16x32xf32>
    %c208 = arith.constant 208 : index
    %c0_121 = arith.constant 0 : index
    %399 = vector.load %arg2[%c208, %c0_121] : memref<272x64xf32, #tpu.memory_space<vmem>>, vector<32x16xf32>
    %cst_122 = arith.constant dense<0.000000e+00> : vector<16x16xf32>
    %400 = tpu.matmul %398, %399, %cst_122 {dimension_numbers = #tpu.dot_dimension_numbers<[1], [0], [0], [1], [0, 0, 1, 1], [], []>} : vector<16x32xf32>, vector<32x16xf32>, vector<16x16xf32> -> vector<16x16xf32>
    %c258 = arith.constant 258 : index
    %c0_123 = arith.constant 0 : index
    %401 = vector.load %arg2[%c258, %c0_123] : memref<272x64xf32, #tpu.memory_space<vmem>>, vector<1x16xf32>
    %402 = vector.broadcast %401 : vector<1x16xf32> to vector<16x16xf32>
    %403 = arith.addf %400, %402 : vector<16x16xf32>
    %404 = arith.addf %391, %403 : vector<16x16xf32>
    %c263 = arith.constant 263 : index
    %c0_124 = arith.constant 0 : index
    %405 = vector.load %arg2[%c263, %c0_124] : memref<272x64xf32, #tpu.memory_space<vmem>>, vector<1x16xf32>
    %c264 = arith.constant 264 : index
    %c0_125 = arith.constant 0 : index
    %406 = vector.load %arg2[%c264, %c0_125] : memref<272x64xf32, #tpu.memory_space<vmem>>, vector<1x16xf32>
    %cst_126 = arith.constant dense<0.000000e+00> : vector<16xf32>
    %407 = vector.multi_reduction <add>, %404, %cst_126 [1] : vector<16x16xf32> to vector<16xf32>
    %408 = vector.shape_cast %407 : vector<16xf32> to vector<16x1xf32>
    %cst_127 = arith.constant 1.600000e+01 : f32
    %409 = vector.broadcast %cst_127 : f32 to vector<16x1xf32>
    %410 = arith.divf %408, %409 : vector<16x1xf32>
    %411 = arith.mulf %404, %404 : vector<16x16xf32>
    %cst_128 = arith.constant dense<0.000000e+00> : vector<16xf32>
    %412 = vector.multi_reduction <add>, %411, %cst_128 [1] : vector<16x16xf32> to vector<16xf32>
    %413 = vector.shape_cast %412 : vector<16xf32> to vector<16x1xf32>
    %cst_129 = arith.constant 1.600000e+01 : f32
    %414 = vector.broadcast %cst_129 : f32 to vector<16x1xf32>
    %415 = arith.divf %413, %414 : vector<16x1xf32>
    %416 = arith.mulf %410, %410 : vector<16x1xf32>
    %417 = arith.subf %415, %416 : vector<16x1xf32>
    %418 = vector.broadcast %410 : vector<16x1xf32> to vector<16x16xf32>
    %419 = arith.subf %404, %418 : vector<16x16xf32>
    %cst_130 = arith.constant 9.99999974E-6 : f32
    %420 = vector.broadcast %cst_130 : f32 to vector<16x1xf32>
    %421 = arith.addf %417, %420 : vector<16x1xf32>
    %422 = math.rsqrt %421 : vector<16x1xf32>
    %423 = vector.broadcast %422 : vector<16x1xf32> to vector<16x16xf32>
    %424 = arith.mulf %419, %423 : vector<16x16xf32>
    %425 = vector.broadcast %405 : vector<1x16xf32> to vector<16x16xf32>
    %426 = arith.mulf %424, %425 : vector<16x16xf32>
    %427 = vector.broadcast %406 : vector<1x16xf32> to vector<16x16xf32>
    %428 = arith.addf %426, %427 : vector<16x16xf32>
    %429 = vector.shape_cast %428 : vector<16x16xf32> to vector<2x8x16xf32>
    %c0_131 = arith.constant 0 : index
    %c0_132 = arith.constant 0 : index
    %c0_133 = arith.constant 0 : index
    %430 = vector.load %arg3[%c0_131, %c0_132, %c0_133] : memref<2x8x16xf32, #tpu.memory_space<vmem>>, vector<2x8x16xf32>
    tpu.vector_store %arg3[%c0_131, %c0_132, %c0_133], %429 {strides = array<i32>} : memref<2x8x16xf32, #tpu.memory_space<vmem>>, vector<2x8x16xf32>,
    return
  }
}

</mosaic_0001>

<llo_original>
// kernel: tpu_custom_call.1
$region0: #{tpu_custom_call.1}
  #allocation0 [shape = 'u32[]', space=smem, size = 0x4, offset = 0x4, fixed_abs, tag = 'smem constant byte address 0x4 - core index']
  #allocation1 [shape = 'u32[144,128]{1,0:T(1,128)}', space=vmem, size = 0x12000, scoped, tag = 'internal scratch']
  %s0 = inlined_call_operand.vmem [shape: f32[2,8,16], index: 0, kind: input, shape index: {}]
  %s1 = inlined_call_operand.vmem [shape: f32[2,8,16], index: 1, kind: input, shape index: {}]
  %s2 = inlined_call_operand.vmem [shape: f32[272,64], index: 2, kind: input, shape index: {}]
  %s3 = inlined_call_operand.hbm [shape: f32[2,8,16], index: 3, kind: output, shape index: {}]
  %s4 = sld [smem:[#allocation0]]
  $region22: #{tpu_custom_call.1} parent=0
    _
  %s6 = ssub.s32 1, %s4
  %s7 = scalar_select 0, %s6, %s4
  $region1: #{tpu_custom_call.1} parent=0
    #allocation2 [shape = 'u8[8192]{0}', space=vmem, size = 0x2000, scoped, tag = 'output window, operand 0, single buffered']
    #allocation3 [shape = 's32[1]{0}', space=sflag, size = 0x4, scoped, tag = 'scoped memory for tpu_custom_call.1']
    %8 = vsyncpa [#allocation3], 0
    // Predicated region
    $region2: #{tpu_custom_call.1} parent=1 // pred_check
      _
    $region3: #{tpu_custom_call.1} parent=1 // pred_check_branch
      %10 = sbr.rel (0) target = $region5
    $region4: #{tpu_custom_call.1} parent=1 // pred_region
      _
    $region5: #{tpu_custom_call.1} parent=1 // pred_fallthru
      _
    // Predicated region
    $region6: #{tpu_custom_call.1} parent=1 // pred_check
      _
    $region7: #{tpu_custom_call.1} parent=1 // pred_check_branch
      %12 = sbr.rel (0) target = $region9
    $region8: #{tpu_custom_call.1} parent=1 // pred_region
      _
    $region9: #{tpu_custom_call.1} parent=1 // pred_fallthru
      _
    // Predicated region
    $region10: #{tpu_custom_call.1} parent=1 // pred_check
      _
    $region11: #{tpu_custom_call.1} parent=1 // pred_check_branch
      %14 = sbr.rel (0) target = $region13
    $region12: #{tpu_custom_call.1} parent=1 // pred_region
      _
    $region13: #{tpu_custom_call.1} parent=1 // pred_fallthru
      _
    %v15 = vld [vmem:[%s0] sm:$0xff]
    %v16 = vld [vmem:[%s0 + $0x8] sm:$0xff]
    %v17 = vld [vmem:[%s1] sm:$0xff]
    %v18 = vld [vmem:[%s1 + $0x8] sm:$0xff]
    %v19 = vlaneseq
    %v20 = vshrl.u32 %v19, 7
    %v21 = vadd.s32 %v20, 8
    %v22 = vadd.s32 %v20, 16
    %v23 = vadd.s32 %v20, 24
    %v24 = vlaneseq
    %v25 = vand.u32 %v24, 127
    %vm26 = vcmp.ge.s32.totalorder %v20, 0
    %vm27 = vcmp.ge.s32.totalorder %v21, 0
    %vm28 = vcmp.ge.s32.totalorder %v22, 0
    %vm29 = vcmp.ge.s32.totalorder %v23, 0
    %vm30 = vcmp.lt.s32.totalorder %v20, 8
    %vm31 = vcmp.lt.s32.totalorder %v21, 8
    %vm32 = vcmp.lt.s32.totalorder %v22, 8
    %vm33 = vcmp.lt.s32.totalorder %v23, 8
    %vm34 = vmand %vm26, %vm30
    %vm35 = vmand %vm27, %vm31
    %vm36 = vmand %vm28, %vm32
    %vm37 = vmand %vm29, %vm33
    %vm38 = vcmp.ge.s32.totalorder %v25, 0
    %vm39 = vmand %vm34, %vm38
    %vm40 = vmand %vm35, %vm38
    %vm41 = vmand %vm36, %vm38
    %vm42 = vmand %vm37, %vm38
    %vm43 = vcmp.lt.s32.totalorder %v25, 8
    %vm44 = vmand %vm39, %vm43
    %vm45 = vmand %vm40, %vm43
    %vm46 = vmand %vm41, %vm43
    %vm47 = vmand %vm42, %vm43
    %vm48 = vcmp.ge.s32.totalorder %v20, 8
    %vm49 = vcmp.ge.s32.totalorder %v21, 8
    %vm50 = vcmp.ge.s32.totalorder %v22, 8
    %vm51 = vcmp.ge.s32.totalorder %v23, 8
    %vm52 = vcmp.lt.s32.totalorder %v20, 16
    %vm53 = vcmp.lt.s32.totalorder %v21, 16
    %vm54 = vcmp.lt.s32.totalorder %v22, 16
    %vm55 = vcmp.lt.s32.totalorder %v23, 16
    %vm56 = vmand %vm48, %vm52
    %vm57 = vmand %vm49, %vm53
    %vm58 = vmand %vm50, %vm54
    %vm59 = vmand %vm51, %vm55
    %vm60 = vcmp.ge.s32.totalorder %v25, 8
    %vm61 = vmand %vm56, %vm60
    %vm62 = vmand %vm57, %vm60
    %vm63 = vmand %vm58, %vm60
    %vm64 = vmand %vm59, %vm60
    %vm65 = vcmp.lt.s32.totalorder %v25, 16
    %vm66 = vmand %vm61, %vm65
    %vm67 = vmand %vm62, %vm65
    %vm68 = vmand %vm63, %vm65
    %vm69 = vmand %vm64, %vm65
    %vm70 = vmor %vm44, %vm66
    %vm71 = vmor %vm45, %vm67
    %vm72 = vmor %vm46, %vm68
    %vm73 = vmor %vm47, %vm69
    %vm74 = vcmp.ge.s32.totalorder %v20, 16
    %vm75 = vcmp.ge.s32.totalorder %v21, 16
    %vm76 = vcmp.ge.s32.totalorder %v22, 16
    %vm77 = vcmp.ge.s32.totalorder %v23, 16
    %vm78 = vcmp.lt.s32.totalorder %v20, 24
    %vm79 = vcmp.lt.s32.totalorder %v21, 24
    %vm80 = vcmp.lt.s32.totalorder %v22, 24
    %vm81 = vcmp.lt.s32.totalorder %v23, 24
    %vm82 = vmand %vm74, %vm78
    %vm83 = vmand %vm75, %vm79
    %vm84 = vmand %vm76, %vm80
    %vm85 = vmand %vm77, %vm81
    %vm86 = vcmp.ge.s32.totalorder %v25, 16
    %vm87 = vmand %vm82, %vm86
    %vm88 = vmand %vm83, %vm86
    %vm89 = vmand %vm84, %vm86
    %vm90 = vmand %vm85, %vm86
    %vm91 = vcmp.lt.s32.totalorder %v25, 24
    %vm92 = vmand %vm87, %vm91
    %vm93 = vmand %vm88, %vm91
    %vm94 = vmand %vm89, %vm91
    %vm95 = vmand %vm90, %vm91
    %vm96 = vmor %vm70, %vm92
    %vm97 = vmor %vm71, %vm93
    %vm98 = vmor %vm72, %vm94
    %vm99 = vmor %vm73, %vm95
    %vm100 = vcmp.ge.s32.totalorder %v20, 24
    %vm101 = vcmp.ge.s32.totalorder %v21, 24
    %vm102 = vcmp.ge.s32.totalorder %v22, 24
    %vm103 = vcmp.ge.s32.totalorder %v23, 24
    %vm104 = vcmp.lt.s32.totalorder %v20, 32
    %vm105 = vcmp.lt.s32.totalorder %v21, 32
    %vm106 = vcmp.lt.s32.totalorder %v22, 32
    %vm107 = vcmp.lt.s32.totalorder %v23, 32
    %vm108 = vmand %vm100, %vm104
    %vm109 = vmand %vm101, %vm105
    %vm110 = vmand %vm102, %vm106
    %vm111 = vmand %vm103, %vm107
    %vm112 = vcmp.ge.s32.totalorder %v25, 24
    %vm113 = vmand %vm108, %vm112
    %vm114 = vmand %vm109, %vm112
    %vm115 = vmand %vm110, %vm112
    %vm116 = vmand %vm111, %vm112
    %vm117 = vcmp.lt.s32.totalorder %v25, 32
    %vm118 = vmand %vm113, %vm117
    %vm119 = vmand %vm114, %vm117
    %vm120 = vmand %vm115, %vm117
    %vm121 = vmand %vm116, %vm117
    %vm122 = vmor %vm96, %vm118
    %vm123 = vmor %vm97, %vm119
    %vm124 = vmor %vm98, %vm120
    %vm125 = vmor %vm99, %vm121
    %v126 = vsel %vm122, 1, 0
    %v127 = vsel %vm123, 1, 0
    %v128 = vsel %vm124, 1, 0
    %v129 = vsel %vm125, 1, 0
    %v130 = vcvt.s32.f32 %v126
    %v131 = vcvt.s32.f32 %v127
    %v132 = vcvt.s32.f32 %v128
    %v133 = vcvt.s32.f32 %v129
    %v134 = vld [vmem:[%s2] sm:$0xff]
    %v135 = vld [vmem:[%s2 + $0x8] sm:$0xff]
    %v136 = vld [vmem:[%s2 + $0xf0] sm:$0x1]
    %v137 = vlaneseq
    %v138 = vshrl.u32 %v137, 7
    %v139 = vsub.s32 0, %v138
    %v140 = vrot.slane %v136, %v139
    %vm141 = vcmask 130048
    %v143 = vsel %vm141, %v17, 0
    %v146 = vsel %vm141, %v18, 0
    %148 = vmatprep.subr.mxu0 0.0
    %149 = vmatpush1.msra.mxu0 %v134
    %150 = vmatprep.subr.mxu0 0.0
    %151 = vmatpush1.msra.mxu0 %v135
    %152 = vmatprep.subr.mxu0 0.0
    %153 = vmatpush1.msra.mxu0 0.0
    %154 = vmatprep.subr.mxu0 0.0
    %155 = vmatpush1.msra.mxu0 0.0
    %156 = vmatprep.subr.mxu0 0.0
    %157 = vmatpush1.msra.mxu0 0.0
    %158 = vmatprep.subr.mxu0 0.0
    %159 = vmatpush1.msra.mxu0 0.0
    %160 = vmatprep.subr.mxu0 0.0
    %161 = vmatpush1.msra.mxu0 0.0
    %162 = vmatprep.subr.mxu0 0.0
    %163 = vmatpush1.msra.mxu0 0.0
    %164 = vmatprep.subr.mxu0 0.0
    %165 = vmatpush1.msra.mxu0 0.0
    %166 = vmatprep.subr.mxu0 0.0
    %167 = vmatpush1.msra.mxu0 0.0
    %168 = vmatprep.subr.mxu0 0.0
    %169 = vmatpush1.msra.mxu0 0.0
    %170 = vmatprep.subr.mxu0 0.0
    %171 = vmatpush1.msra.mxu0 0.0
    %172 = vmatprep.subr.mxu0 0.0
    %173 = vmatpush1.msra.mxu0 0.0
    %174 = vmatprep.subr.mxu0 0.0
    %175 = vmatpush1.msra.mxu0 0.0
    %176 = vmatprep.subr.mxu0 0.0
    %177 = vmatpush1.msra.mxu0 0.0
    %178 = vmatprep.subr.mxu0 0.0
    %179 = vmatpush1.msra.mxu0 0.0
    %180 = vmatprep.subr.mxu0 0.0
    %181 = vmatpush1.msra.mxu0 0.0
    %182 = vmatprep.subr.mxu0 0.0
    %183 = vmatpush1.msra.mxu0 0.0
    %184 = vmatprep.subr.mxu0 0.0
    %185 = vmatpush1.msra.mxu0 0.0
    %186 = vmatprep.subr.mxu0 0.0
    %187 = vmatpush1.msra.mxu0 0.0
    %188 = vmatprep.subr.mxu0 0.0
    %189 = vmatpush1.msra.mxu0 0.0
    %190 = vmatprep.subr.mxu0 0.0
    %191 = vmatpush1.msra.mxu0 0.0
    %192 = vmatprep.subr.mxu0 0.0
    %193 = vmatpush1.msra.mxu0 0.0
    %194 = vmatprep.subr.mxu0 0.0
    %195 = vmatpush1.msra.mxu0 0.0
    %196 = vmatprep.subr.mxu0 0.0
    %197 = vmatpush1.msra.mxu0 0.0
    %198 = vmatprep.subr.mxu0 0.0
    %199 = vmatpush1.msra.mxu0 0.0
    %200 = vmatprep.subr.mxu0 0.0
    %201 = vmatpush1.msra.mxu0 0.0
    %202 = vmatprep.subr.mxu0 0.0
    %203 = vmatpush1.msra.mxu0 0.0
    %204 = vmatprep.subr.mxu0 0.0
    %205 = vmatpush1.msra.mxu0 0.0
    %206 = vmatprep.subr.mxu0 0.0
    %207 = vmatpush1.msra.mxu0 0.0
    %208 = vmatprep.subr.mxu0 0.0
    %209 = vmatpush1.msra.mxu0 0.0
    %210 = vmatprep.subr.mxu0 0.0
    %211 = vmatpush1.msra.mxu0 0.0
    %212 = vmatprep.mubr.f32.mxu0 0.0
    %213 = vmatmul.mubr.f32.gmra.mrb[0].mxu0 %v143
    %v214 = vpop.f32.mrb[0].mxu0
    %v215 = vadd.f32 %v140, %v214
    %v216 = vpop.f32.mrb[0].mxu0
    %217 = vmatprep.mubr.f32.mxu0 0.0
    %218 = vmatmul.mubr.f32.gmra.mrb[0].mxu0 %v146
    %v219 = vpop.f32.mrb[0].mxu0
    %v220 = vadd.f32 %v140, %v219
    %v221 = vpop.f32.mrb[0].mxu0
    %222 = vdwg.mxu0
    %v223 = vld [vmem:[%s2 + $0x10] sm:$0xff]
    %v224 = vld [vmem:[%s2 + $0x18] sm:$0xff]
    %v225 = vld [vmem:[%s2 + $0xf1] sm:$0x1]
    %v226 = vlaneseq
    %v227 = vshrl.u32 %v226, 7
    %v228 = vsub.s32 0, %v227
    %v229 = vrot.slane %v225, %v228
    %v231 = vsel %vm141, %v15, 0
    %v234 = vsel %vm141, %v16, 0
    %236 = vmatprep.subr.mxu0 0.0
    %237 = vmatpush1.msra.mxu0 %v223
    %238 = vmatprep.subr.mxu0 0.0
    %239 = vmatpush1.msra.mxu0 %v224
    %240 = vmatprep.subr.mxu0 0.0
    %241 = vmatpush1.msra.mxu0 0.0
    %242 = vmatprep.subr.mxu0 0.0
    %243 = vmatpush1.msra.mxu0 0.0
    %244 = vmatprep.subr.mxu0 0.0
    %245 = vmatpush1.msra.mxu0 0.0
    %246 = vmatprep.subr.mxu0 0.0
    %247 = vmatpush1.msra.mxu0 0.0
    %248 = vmatprep.subr.mxu0 0.0
    %249 = vmatpush1.msra.mxu0 0.0
    %250 = vmatprep.subr.mxu0 0.0
    %251 = vmatpush1.msra.mxu0 0.0
    %252 = vmatprep.subr.mxu0 0.0
    %253 = vmatpush1.msra.mxu0 0.0
    %254 = vmatprep.subr.mxu0 0.0
    %255 = vmatpush1.msra.mxu0 0.0
    %256 = vmatprep.subr.mxu0 0.0
    %257 = vmatpush1.msra.mxu0 0.0
    %258 = vmatprep.subr.mxu0 0.0
    %259 = vmatpush1.msra.mxu0 0.0
    %260 = vmatprep.subr.mxu0 0.0
    %261 = vmatpush1.msra.mxu0 0.0
    %262 = vmatprep.subr.mxu0 0.0
    %263 = vmatpush1.msra.mxu0 0.0
    %264 = vmatprep.subr.mxu0 0.0
    %265 = vmatpush1.msra.mxu0 0.0
    %266 = vmatprep.subr.mxu0 0.0
    %267 = vmatpush1.msra.mxu0 0.0
    %268 = vmatprep.subr.mxu0 0.0
    %269 = vmatpush1.msra.mxu0 0.0
    %270 = vmatprep.subr.mxu0 0.0
    %271 = vmatpush1.msra.mxu0 0.0
    %272 = vmatprep.subr.mxu0 0.0
    %273 = vmatpush1.msra.mxu0 0.0
    %274 = vmatprep.subr.mxu0 0.0
    %275 = vmatpush1.msra.mxu0 0.0
    %276 = vmatprep.subr.mxu0 0.0
    %277 = vmatpush1.msra.mxu0 0.0
    %278 = vmatprep.subr.mxu0 0.0
    %279 = vmatpush1.msra.mxu0 0.0
    %280 = vmatprep.subr.mxu0 0.0
    %281 = vmatpush1.msra.mxu0 0.0
    %282 = vmatprep.subr.mxu0 0.0
    %283 = vmatpush1.msra.mxu0 0.0
    %284 = vmatprep.subr.mxu0 0.0
    %285 = vmatpush1.msra.mxu0 0.0
    %286 = vmatprep.subr.mxu0 0.0
    %287 = vmatpush1.msra.mxu0 0.0
    %288 = vmatprep.subr.mxu0 0.0
    %289 = vmatpush1.msra.mxu0 0.0
    %290 = vmatprep.subr.mxu0 0.0
    %291 = vmatpush1.msra.mxu0 0.0
    %292 = vmatprep.subr.mxu0 0.0
    %293 = vmatpush1.msra.mxu0 0.0
    %294 = vmatprep.subr.mxu0 0.0
    %295 = vmatpush1.msra.mxu0 0.0
    %296 = vmatprep.subr.mxu0 0.0
    %297 = vmatpush1.msra.mxu0 0.0
    %298 = vmatprep.subr.mxu0 0.0
    %299 = vmatpush1.msra.mxu0 0.0
    %300 = vmatprep.mubr.f32.mxu0 0.0
    %301 = vmatmul.mubr.f32.gmra.mrb[0].mxu0 %v231
    %v302 = vpop.f32.mrb[0].mxu0
    %v303 = vadd.f32 %v229, %v302
    %v304 = vpop.f32.mrb[0].mxu0
    %305 = vmatprep.mubr.f32.mxu0 0.0
    %306 = vmatmul.mubr.f32.gmra.mrb[0].mxu0 %v234
    %v307 = vpop.f32.mrb[0].mxu0
    %v308 = vadd.f32 %v229, %v307
    %v309 = vpop.f32.mrb[0].mxu0
    %310 = vdwg.mxu0
    %v311 = vld [vmem:[%s2 + $0x20] sm:$0xff]
    %v312 = vld [vmem:[%s2 + $0x28] sm:$0xff]
    %315 = vrot.lane.b32.xlu0 %v303, 120
    %v316 = vpop.permute.xlu0 %315
    %317 = vrot.lane.b32.xlu0 %v308, 120
    %v318 = vpop.permute.xlu0 %317
    %v321 = vmul.f32 %v303, 0.35355338
    %v322 = vmul.f32 %v308, 0.35355338
    %v323 = vmul.f32 %v316, 0.35355338
    %v324 = vmul.f32 %v318, 0.35355338
    %325 = vrot.lane.b32.xlu0 %v303, 112
    %v326 = vpop.permute.xlu0 %325
    %327 = vrot.lane.b32.xlu0 %v308, 112
    %v328 = vpop.permute.xlu0 %327
    %329 = vrot.lane.b32.xlu0 %v316, 112
    %v330 = vpop.permute.xlu0 %329
    %331 = vrot.lane.b32.xlu0 %v318, 112
    %v332 = vpop.permute.xlu0 %331
    %vm333 = vcmask 64512
    %v335 = vsel %vm333, %v321, 0
    %v338 = vsel %vm333, %v322, 0
    %v341 = vsel %vm333, %v323, 0
    %v344 = vsel %vm333, %v324, 0
    %v346 = vsel %vm333, %v326, 0
    %v348 = vsel %vm333, %v328, 0
    %v350 = vsel %vm333, %v330, 0
    %v352 = vsel %vm333, %v332, 0
    %354 = vmatprep.subr.mxu0 0.0
    %355 = vmatpush1.xpose.msra.mxu0 %v346
    %356 = vmatprep.subr.mxu0 0.0
    %357 = vmatpush1.xpose.msra.mxu0 %v348
    %358 = vmatprep.subr.mxu0 0.0
    %359 = vmatpush1.xpose.msra.mxu0 %v350
    %360 = vmatprep.subr.mxu0 0.0
    %361 = vmatpush1.xpose.msra.mxu0 %v352
    %362 = vmatprep.subr.mxu0 0.0
    %363 = vmatpush1.xpose.msra.mxu0 0.0
    %364 = vmatprep.subr.mxu0 0.0
    %365 = vmatpush1.xpose.msra.mxu0 0.0
    %366 = vmatprep.subr.mxu0 0.0
    %367 = vmatpush1.xpose.msra.mxu0 0.0
    %368 = vmatprep.subr.mxu0 0.0
    %369 = vmatpush1.xpose.msra.mxu0 0.0
    %370 = vmatprep.subr.mxu0 0.0
    %371 = vmatpush1.xpose.msra.mxu0 0.0
    %372 = vmatprep.subr.mxu0 0.0
    %373 = vmatpush1.xpose.msra.mxu0 0.0
    %374 = vmatprep.subr.mxu0 0.0
    %375 = vmatpush1.xpose.msra.mxu0 0.0
    %376 = vmatprep.subr.mxu0 0.0
    %377 = vmatpush1.xpose.msra.mxu0 0.0
    %378 = vmatprep.subr.mxu0 0.0
    %379 = vmatpush1.xpose.msra.mxu0 0.0
    %380 = vmatprep.subr.mxu0 0.0
    %381 = vmatpush1.xpose.msra.mxu0 0.0
    %382 = vmatprep.subr.mxu0 0.0
    %383 = vmatpush1.xpose.msra.mxu0 0.0
    %384 = vmatprep.subr.mxu0 0.0
    %385 = vmatpush1.xpose.msra.mxu0 0.0
    %386 = vmatprep.subr.mxu0 0.0
    %387 = vmatpush1.xpose.msra.mxu0 0.0
    %388 = vmatprep.subr.mxu0 0.0
    %389 = vmatpush1.xpose.msra.mxu0 0.0
    %390 = vmatprep.subr.mxu0 0.0
    %391 = vmatpush1.xpose.msra.mxu0 0.0
    %392 = vmatprep.subr.mxu0 0.0
    %393 = vmatpush1.xpose.msra.mxu0 0.0
    %394 = vmatprep.subr.mxu0 0.0
    %395 = vmatpush1.xpose.msra.mxu0 0.0
    %396 = vmatprep.subr.mxu0 0.0
    %397 = vmatpush1.xpose.msra.mxu0 0.0
    %398 = vmatprep.subr.mxu0 0.0
    %399 = vmatpush1.xpose.msra.mxu0 0.0
    %400 = vmatprep.subr.mxu0 0.0
    %401 = vmatpush1.xpose.msra.mxu0 0.0
    %402 = vmatprep.subr.mxu0 0.0
    %403 = vmatpush1.xpose.msra.mxu0 0.0
    %404 = vmatprep.subr.mxu0 0.0
    %405 = vmatpush1.xpose.msra.mxu0 0.0
    %406 = vmatprep.subr.mxu0 0.0
    %407 = vmatpush1.xpose.msra.mxu0 0.0
    %408 = vmatprep.subr.mxu0 0.0
    %409 = vmatpush1.xpose.msra.mxu0 0.0
    %410 = vmatprep.subr.mxu0 0.0
    %411 = vmatpush1.xpose.msra.mxu0 0.0
    %412 = vmatprep.subr.mxu0 0.0
    %413 = vmatpush1.xpose.msra.mxu0 0.0
    %414 = vmatprep.subr.mxu0 0.0
    %415 = vmatpush1.xpose.msra.mxu0 0.0
    %416 = vmatprep.subr.mxu0 0.0
    %417 = vmatpush1.xpose.msra.mxu0 0.0
    %418 = vmatprep.mubr.f32.mxu0 0.0
    %419 = vmatmul.mubr.f32.gmra.mrb[0].mxu0 %v335
    %v420 = vpop.f32.mrb[0].mxu0
    %v421 = vadd.f32 0.0, %v420
    %v422 = vpop.f32.mrb[0].mxu0
    %423 = vmatprep.mubr.f32.mxu0 0.0
    %424 = vmatmul.mubr.f32.gmra.mrb[0].mxu0 %v338
    %v425 = vpop.f32.mrb[0].mxu0
    %v426 = vadd.f32 0.0, %v425
    %v427 = vpop.f32.mrb[0].mxu0
    %428 = vmatprep.mubr.f32.mxu0 0.0
    %429 = vmatmul.mubr.f32.gmra.mrb[0].mxu0 %v341
    %v430 = vpop.f32.mrb[0].mxu0
    %v431 = vadd.f32 0.0, %v430
    %v432 = vpop.f32.mrb[0].mxu0
    %433 = vmatprep.mubr.f32.mxu0 0.0
    %434 = vmatmul.mubr.f32.gmra.mrb[0].mxu0 %v344
    %v435 = vpop.f32.mrb[0].mxu0
    %v436 = vadd.f32 0.0, %v435
    %v437 = vpop.f32.mrb[0].mxu0
    %438 = vdwg.mxu0
    %v439 = vmul.f32 %v421, 1.442695
    %v440 = vpow.pop %v439
    %v441 = vmul.f32 %v426, 1.442695
    %v442 = vpow.pop %v441
    %v443 = vmul.f32 %v431, 1.442695
    %v444 = vpow.pop %v443
    %v445 = vmul.f32 %v436, 1.442695
    %v446 = vpow.pop %v445
    %v447 = vmul.f32 %v440, %v130
    %v448 = vmul.f32 %v442, %v131
    %v449 = vmul.f32 %v444, %v132
    %v450 = vmul.f32 %v446, %v133
    %vm451 = vcmask 261120
    %v452 = vsel %vm451, %v447, 0.0
    %453 = vadd.xlane.f32.xlu0 %v452
    %v454 = vpop.xlane.xlu0 %453
    %v455 = vsel %vm451, %v448, 0.0
    %456 = vadd.xlane.f32.xlu0 %v455
    %v457 = vpop.xlane.xlu0 %456
    %v458 = vsel %vm451, %v449, 0.0
    %459 = vadd.xlane.f32.xlu0 %v458
    %v460 = vpop.xlane.xlu0 %459
    %v461 = vsel %vm451, %v450, 0.0
    %462 = vadd.xlane.f32.xlu0 %v461
    %v463 = vpop.xlane.xlu0 %462
    %v464 = vrcp.pop %v454
    %v465 = vrcp.pop %v457
    %v466 = vrcp.pop %v460
    %v467 = vrcp.pop %v463
    %v468 = vmul.f32 %v447, %v464
    %v469 = vmul.f32 %v448, %v465
    %v470 = vmul.f32 %v449, %v466
    %v471 = vmul.f32 %v450, %v467
    %472 = vrot.lane.b32.xlu0 %v303, 96
    %v473 = vpop.permute.xlu0 %472
    %474 = vrot.lane.b32.xlu0 %v308, 96
    %v475 = vpop.permute.xlu0 %474
    %476 = vrot.lane.b32.xlu0 %v316, 96
    %v477 = vpop.permute.xlu0 %476
    %478 = vrot.lane.b32.xlu0 %v318, 96
    %v479 = vpop.permute.xlu0 %478
    %v485 = vsel %vm451, %v468, 0
    %v488 = vsel %vm451, %v469, 0
    %v491 = vsel %vm451, %v470, 0
    %v494 = vsel %vm451, %v471, 0
    %496 = vmatprep.subr.mxu0 0.0
    %497 = vmatpush1.msra.mxu0 %v473
    %498 = vmatprep.subr.mxu0 0.0
    %499 = vmatpush1.msra.mxu0 %v475
    %500 = vmatprep.subr.mxu0 0.0
    %501 = vmatpush1.msra.mxu0 %v477
    %502 = vmatprep.subr.mxu0 0.0
    %503 = vmatpush1.msra.mxu0 %v479
    %504 = vmatprep.subr.mxu0 0.0
    %505 = vmatpush1.msra.mxu0 0.0
    %506 = vmatprep.subr.mxu0 0.0
    %507 = vmatpush1.msra.mxu0 0.0
    %508 = vmatprep.subr.mxu0 0.0
    %509 = vmatpush1.msra.mxu0 0.0
    %510 = vmatprep.subr.mxu0 0.0
    %511 = vmatpush1.msra.mxu0 0.0
    %512 = vmatprep.subr.mxu0 0.0
    %513 = vmatpush1.msra.mxu0 0.0
    %514 = vmatprep.subr.mxu0 0.0
    %515 = vmatpush1.msra.mxu0 0.0
    %516 = vmatprep.subr.mxu0 0.0
    %517 = vmatpush1.msra.mxu0 0.0
    %518 = vmatprep.subr.mxu0 0.0
    %519 = vmatpush1.msra.mxu0 0.0
    %520 = vmatprep.subr.mxu0 0.0
    %521 = vmatpush1.msra.mxu0 0.0
    %522 = vmatprep.subr.mxu0 0.0
    %523 = vmatpush1.msra.mxu0 0.0
    %524 = vmatprep.subr.mxu0 0.0
    %525 = vmatpush1.msra.mxu0 0.0
    %526 = vmatprep.subr.mxu0 0.0
    %527 = vmatpush1.msra.mxu0 0.0
    %528 = vmatprep.subr.mxu0 0.0
    %529 = vmatpush1.msra.mxu0 0.0
    %530 = vmatprep.subr.mxu0 0.0
    %531 = vmatpush1.msra.mxu0 0.0
    %532 = vmatprep.subr.mxu0 0.0
    %533 = vmatpush1.msra.mxu0 0.0
    %534 = vmatprep.subr.mxu0 0.0
    %535 = vmatpush1.msra.mxu0 0.0
    %536 = vmatprep.subr.mxu0 0.0
    %537 = vmatpush1.msra.mxu0 0.0
    %538 = vmatprep.subr.mxu0 0.0
    %539 = vmatpush1.msra.mxu0 0.0
    %540 = vmatprep.subr.mxu0 0.0
    %541 = vmatpush1.msra.mxu0 0.0
    %542 = vmatprep.subr.mxu0 0.0
    %543 = vmatpush1.msra.mxu0 0.0
    %544 = vmatprep.subr.mxu0 0.0
    %545 = vmatpush1.msra.mxu0 0.0
    %546 = vmatprep.subr.mxu0 0.0
    %547 = vmatpush1.msra.mxu0 0.0
    %548 = vmatprep.subr.mxu0 0.0
    %549 = vmatpush1.msra.mxu0 0.0
    %550 = vmatprep.subr.mxu0 0.0
    %551 = vmatpush1.msra.mxu0 0.0
    %552 = vmatprep.subr.mxu0 0.0
    %553 = vmatpush1.msra.mxu0 0.0
    %554 = vmatprep.subr.mxu0 0.0
    %555 = vmatpush1.msra.mxu0 0.0
    %556 = vmatprep.subr.mxu0 0.0
    %557 = vmatpush1.msra.mxu0 0.0
    %558 = vmatprep.subr.mxu0 0.0
    %559 = vmatpush1.msra.mxu0 0.0
    %560 = vmatprep.mubr.f32.mxu0 0.0
    %561 = vmatmul.mubr.f32.gmra.mrb[0].mxu0 %v485
    %v562 = vpop.f32.mrb[0].mxu0
    %v563 = vadd.f32 0.0, %v562
    %v564 = vpop.f32.mrb[0].mxu0
    %565 = vmatprep.mubr.f32.mxu0 0.0
    %566 = vmatmul.mubr.f32.gmra.mrb[0].mxu0 %v488
    %v567 = vpop.f32.mrb[0].mxu0
    %v568 = vadd.f32 0.0, %v567
    %v569 = vpop.f32.mrb[0].mxu0
    %570 = vmatprep.mubr.f32.mxu0 0.0
    %571 = vmatmul.mubr.f32.gmra.mrb[0].mxu0 %v491
    %v572 = vpop.f32.mrb[0].mxu0
    %v573 = vadd.f32 0.0, %v572
    %v574 = vpop.f32.mrb[0].mxu0
    %575 = vmatprep.mubr.f32.mxu0 0.0
    %576 = vmatmul.mubr.f32.gmra.mrb[0].mxu0 %v494
    %v577 = vpop.f32.mrb[0].mxu0
    %v578 = vadd.f32 0.0, %v577
    %v579 = vpop.f32.mrb[0].mxu0
    %580 = vdwg.mxu0
    %583 = vrot.lane.b32.xlu0 %v573, 8
    %v584 = vpop.permute.xlu0 %583
    %585 = vrot.lane.b32.xlu0 %v578, 8
    %v586 = vpop.permute.xlu0 %585
    %v589 = vsel %vm333, %v563, %v584
    %v590 = vsel %vm333, %v568, %v586
    %v591 = vld [vmem:[%s2 + $0xf2] sm:$0x1]
    %v592 = vlaneseq
    %v593 = vshrl.u32 %v592, 7
    %v594 = vsub.s32 0, %v593
    %v595 = vrot.slane %v591, %v594
    %v597 = vsel %vm141, %v589, 0
    %v600 = vsel %vm141, %v590, 0
    %602 = vmatprep.subr.mxu0 0.0
    %603 = vmatpush1.msra.mxu0 %v311
    %604 = vmatprep.subr.mxu0 0.0
    %605 = vmatpush1.msra.mxu0 %v312
    %606 = vmatprep.subr.mxu0 0.0
    %607 = vmatpush1.msra.mxu0 0.0
    %608 = vmatprep.subr.mxu0 0.0
    %609 = vmatpush1.msra.mxu0 0.0
    %610 = vmatprep.subr.mxu0 0.0
    %611 = vmatpush1.msra.mxu0 0.0
    %612 = vmatprep.subr.mxu0 0.0
    %613 = vmatpush1.msra.mxu0 0.0
    %614 = vmatprep.subr.mxu0 0.0
    %615 = vmatpush1.msra.mxu0 0.0
    %616 = vmatprep.subr.mxu0 0.0
    %617 = vmatpush1.msra.mxu0 0.0
    %618 = vmatprep.subr.mxu0 0.0
    %619 = vmatpush1.msra.mxu0 0.0
    %620 = vmatprep.subr.mxu0 0.0
    %621 = vmatpush1.msra.mxu0 0.0
    %622 = vmatprep.subr.mxu0 0.0
    %623 = vmatpush1.msra.mxu0 0.0
    %624 = vmatprep.subr.mxu0 0.0
    %625 = vmatpush1.msra.mxu0 0.0
    %626 = vmatprep.subr.mxu0 0.0
    %627 = vmatpush1.msra.mxu0 0.0
    %628 = vmatprep.subr.mxu0 0.0
    %629 = vmatpush1.msra.mxu0 0.0
    %630 = vmatprep.subr.mxu0 0.0
    %631 = vmatpush1.msra.mxu0 0.0
    %632 = vmatprep.subr.mxu0 0.0
    %633 = vmatpush1.msra.mxu0 0.0
    %634 = vmatprep.subr.mxu0 0.0
    %635 = vmatpush1.msra.mxu0 0.0
    %636 = vmatprep.subr.mxu0 0.0
    %637 = vmatpush1.msra.mxu0 0.0
    %638 = vmatprep.subr.mxu0 0.0
    %639 = vmatpush1.msra.mxu0 0.0
    %640 = vmatprep.subr.mxu0 0.0
    %641 = vmatpush1.msra.mxu0 0.0
    %642 = vmatprep.subr.mxu0 0.0
    %643 = vmatpush1.msra.mxu0 0.0
    %644 = vmatprep.subr.mxu0 0.0
    %645 = vmatpush1.msra.mxu0 0.0
    %646 = vmatprep.subr.mxu0 0.0
    %647 = vmatpush1.msra.mxu0 0.0
    %648 = vmatprep.subr.mxu0 0.0
    %649 = vmatpush1.msra.mxu0 0.0
    %650 = vmatprep.subr.mxu0 0.0
    %651 = vmatpush1.msra.mxu0 0.0
    %652 = vmatprep.subr.mxu0 0.0
    %653 = vmatpush1.msra.mxu0 0.0
    %654 = vmatprep.subr.mxu0 0.0
    %655 = vmatpush1.msra.mxu0 0.0
    %656 = vmatprep.subr.mxu0 0.0
    %657 = vmatpush1.msra.mxu0 0.0
    %658 = vmatprep.subr.mxu0 0.0
    %659 = vmatpush1.msra.mxu0 0.0
    %660 = vmatprep.subr.mxu0 0.0
    %661 = vmatpush1.msra.mxu0 0.0
    %662 = vmatprep.subr.mxu0 0.0
    %663 = vmatpush1.msra.mxu0 0.0
    %664 = vmatprep.subr.mxu0 0.0
    %665 = vmatpush1.msra.mxu0 0.0
    %666 = vmatprep.mubr.f32.mxu0 0.0
    %667 = vmatmul.mubr.f32.gmra.mrb[0].mxu0 %v597
    %v668 = vpop.f32.mrb[0].mxu0
    %v669 = vadd.f32 %v595, %v668
    %v670 = vpop.f32.mrb[0].mxu0
    %671 = vmatprep.mubr.f32.mxu0 0.0
    %672 = vmatmul.mubr.f32.gmra.mrb[0].mxu0 %v600
    %v673 = vpop.f32.mrb[0].mxu0
    %v674 = vadd.f32 %v595, %v673
    %v675 = vpop.f32.mrb[0].mxu0
    %676 = vdwg.mxu0
    %v677 = vadd.f32 %v15, %v669
    %v678 = vadd.f32 %v16, %v674
    %v679 = vld [vmem:[%s2 + $0xf7] sm:$0x1]
    %v680 = vld [vmem:[%s2 + $0xf8] sm:$0x1]
    %v681 = vsel %vm141, %v677, 0.0
    %682 = vadd.xlane.f32.xlu0 %v681
    %v683 = vpop.xlane.xlu0 %682
    %v684 = vsel %vm141, %v678, 0.0
    %685 = vadd.xlane.f32.xlu0 %v684
    %v686 = vpop.xlane.xlu0 %685
    %v687 = vrcp.pop 16.0
    %v688 = vmul.f32 %v683, %v687
    %v689 = vmul.f32 %v686, %v687
    %v690 = vmul.f32 %v677, %v677
    %v691 = vmul.f32 %v678, %v678
    %v692 = vsel %vm141, %v690, 0.0
    %693 = vadd.xlane.f32.xlu0 %v692
    %v694 = vpop.xlane.xlu0 %693
    %v695 = vsel %vm141, %v691, 0.0
    %696 = vadd.xlane.f32.xlu0 %v695
    %v697 = vpop.xlane.xlu0 %696
    %v698 = vmul.f32 %v694, %v687
    %v699 = vmul.f32 %v697, %v687
    %v700 = vmul.f32 %v688, %v688
    %v701 = vmul.f32 %v689, %v689
    %v702 = vsub.f32 %v698, %v700
    %v703 = vsub.f32 %v699, %v701
    %v704 = vsub.f32 %v677, %v688
    %v705 = vsub.f32 %v678, %v689
    %v706 = vadd.f32 %v702, 1e-05
    %v707 = vadd.f32 %v703, 1e-05
    %v708 = vrsqrt.pop %v706
    %v709 = vrsqrt.pop %v707
    %v710 = vmul.f32 %v704, %v708
    %v711 = vmul.f32 %v705, %v709
    %v712 = vlaneseq
    %v713 = vshrl.u32 %v712, 7
    %v714 = vsub.s32 0, %v713
    %v715 = vrot.slane %v679, %v714
    %v716 = vmul.f32 %v710, %v715
    %v717 = vmul.f32 %v711, %v715
    %v718 = vlaneseq
    %v719 = vshrl.u32 %v718, 7
    %v720 = vsub.s32 0, %v719
    %v721 = vrot.slane %v680, %v720
    %v722 = vadd.f32 %v716, %v721
    %v723 = vadd.f32 %v717, %v721
    %v724 = vld [vmem:[%s2 + $0x30] sm:$0xff]
    %v725 = vld [vmem:[%s2 + $0x38] sm:$0xff]
    %v726 = vld [vmem:[%s2 + $0xf3] sm:$0x1]
    %v727 = vlaneseq
    %v728 = vshrl.u32 %v727, 7
    %v729 = vsub.s32 0, %v728
    %v730 = vrot.slane %v726, %v729
    %v732 = vsel %vm141, %v722, 0
    %v735 = vsel %vm141, %v723, 0
    %737 = vmatprep.subr.mxu0 0.0
    %738 = vmatpush1.msra.mxu0 %v724
    %739 = vmatprep.subr.mxu0 0.0
    %740 = vmatpush1.msra.mxu0 %v725
    %741 = vmatprep.subr.mxu0 0.0
    %742 = vmatpush1.msra.mxu0 0.0
    %743 = vmatprep.subr.mxu0 0.0
    %744 = vmatpush1.msra.mxu0 0.0
    %745 = vmatprep.subr.mxu0 0.0
    %746 = vmatpush1.msra.mxu0 0.0
    %747 = vmatprep.subr.mxu0 0.0
    %748 = vmatpush1.msra.mxu0 0.0
    %749 = vmatprep.subr.mxu0 0.0
    %750 = vmatpush1.msra.mxu0 0.0
    %751 = vmatprep.subr.mxu0 0.0
    %752 = vmatpush1.msra.mxu0 0.0
    %753 = vmatprep.subr.mxu0 0.0
    %754 = vmatpush1.msra.mxu0 0.0
    %755 = vmatprep.subr.mxu0 0.0
    %756 = vmatpush1.msra.mxu0 0.0
    %757 = vmatprep.subr.mxu0 0.0
    %758 = vmatpush1.msra.mxu0 0.0
    %759 = vmatprep.subr.mxu0 0.0
    %760 = vmatpush1.msra.mxu0 0.0
    %761 = vmatprep.subr.mxu0 0.0
    %762 = vmatpush1.msra.mxu0 0.0
    %763 = vmatprep.subr.mxu0 0.0
    %764 = vmatpush1.msra.mxu0 0.0
    %765 = vmatprep.subr.mxu0 0.0
    %766 = vmatpush1.msra.mxu0 0.0
    %767 = vmatprep.subr.mxu0 0.0
    %768 = vmatpush1.msra.mxu0 0.0
    %769 = vmatprep.subr.mxu0 0.0
    %770 = vmatpush1.msra.mxu0 0.0
    %771 = vmatprep.subr.mxu0 0.0
    %772 = vmatpush1.msra.mxu0 0.0
    %773 = vmatprep.subr.mxu0 0.0
    %774 = vmatpush1.msra.mxu0 0.0
    %775 = vmatprep.subr.mxu0 0.0
    %776 = vmatpush1.msra.mxu0 0.0
    %777 = vmatprep.subr.mxu0 0.0
    %778 = vmatpush1.msra.mxu0 0.0
    %779 = vmatprep.subr.mxu0 0.0
    %780 = vmatpush1.msra.mxu0 0.0
    %781 = vmatprep.subr.mxu0 0.0
    %782 = vmatpush1.msra.mxu0 0.0
    %783 = vmatprep.subr.mxu0 0.0
    %784 = vmatpush1.msra.mxu0 0.0
    %785 = vmatprep.subr.mxu0 0.0
    %786 = vmatpush1.msra.mxu0 0.0
    %787 = vmatprep.subr.mxu0 0.0
    %788 = vmatpush1.msra.mxu0 0.0
    %789 = vmatprep.subr.mxu0 0.0
    %790 = vmatpush1.msra.mxu0 0.0
    %791 = vmatprep.subr.mxu0 0.0
    %792 = vmatpush1.msra.mxu0 0.0
    %793 = vmatprep.subr.mxu0 0.0
    %794 = vmatpush1.msra.mxu0 0.0
    %795 = vmatprep.subr.mxu0 0.0
    %796 = vmatpush1.msra.mxu0 0.0
    %797 = vmatprep.subr.mxu0 0.0
    %798 = vmatpush1.msra.mxu0 0.0
    %799 = vmatprep.subr.mxu0 0.0
    %800 = vmatpush1.msra.mxu0 0.0
    %801 = vmatprep.mubr.f32.mxu0 0.0
    %802 = vmatmul.mubr.f32.gmra.mrb[0].mxu0 %v732
    %v803 = vpop.f32.mrb[0].mxu0
    %v804 = vadd.f32 %v730, %v803
    %v805 = vpop.f32.mrb[0].mxu0
    %806 = vmatprep.mubr.f32.mxu0 0.0
    %807 = vmatmul.mubr.f32.gmra.mrb[0].mxu0 %v735
    %v808 = vpop.f32.mrb[0].mxu0
    %v809 = vadd.f32 %v730, %v808
    %v810 = vpop.f32.mrb[0].mxu0
    %811 = vdwg.mxu0
    %v812 = vld [vmem:[%s2 + $0x40] sm:$0xff]
    %v813 = vld [vmem:[%s2 + $0x48] sm:$0xff]
    %816 = vrot.lane.b32.xlu0 %v804, 120
    %v817 = vpop.permute.xlu0 %816
    %818 = vrot.lane.b32.xlu0 %v809, 120
    %v819 = vpop.permute.xlu0 %818
    %v822 = vmul.f32 %v804, 0.35355338
    %v823 = vmul.f32 %v809, 0.35355338
    %v824 = vmul.f32 %v817, 0.35355338
    %v825 = vmul.f32 %v819, 0.35355338
    %828 = vrot.lane.b32.xlu0 %v215, 120
    %v829 = vpop.permute.xlu0 %828
    %830 = vrot.lane.b32.xlu0 %v220, 120
    %v831 = vpop.permute.xlu0 %830
    %v833 = vsel %vm333, %v822, 0
    %v836 = vsel %vm333, %v823, 0
    %v839 = vsel %vm333, %v824, 0
    %v842 = vsel %vm333, %v825, 0
    %v844 = vsel %vm333, %v215, 0
    %v846 = vsel %vm333, %v220, 0
    %v848 = vsel %vm333, %v829, 0
    %v850 = vsel %vm333, %v831, 0
    %852 = vmatprep.subr.mxu0 0.0
    %853 = vmatpush1.xpose.msra.mxu0 %v844
    %854 = vmatprep.subr.mxu0 0.0
    %855 = vmatpush1.xpose.msra.mxu0 %v846
    %856 = vmatprep.subr.mxu0 0.0
    %857 = vmatpush1.xpose.msra.mxu0 %v848
    %858 = vmatprep.subr.mxu0 0.0
    %859 = vmatpush1.xpose.msra.mxu0 %v850
    %860 = vmatprep.subr.mxu0 0.0
    %861 = vmatpush1.xpose.msra.mxu0 0.0
    %862 = vmatprep.subr.mxu0 0.0
    %863 = vmatpush1.xpose.msra.mxu0 0.0
    %864 = vmatprep.subr.mxu0 0.0
    %865 = vmatpush1.xpose.msra.mxu0 0.0
    %866 = vmatprep.subr.mxu0 0.0
    %867 = vmatpush1.xpose.msra.mxu0 0.0
    %868 = vmatprep.subr.mxu0 0.0
    %869 = vmatpush1.xpose.msra.mxu0 0.0
    %870 = vmatprep.subr.mxu0 0.0
    %871 = vmatpush1.xpose.msra.mxu0 0.0
    %872 = vmatprep.subr.mxu0 0.0
    %873 = vmatpush1.xpose.msra.mxu0 0.0
    %874 = vmatprep.subr.mxu0 0.0
    %875 = vmatpush1.xpose.msra.mxu0 0.0
    %876 = vmatprep.subr.mxu0 0.0
    %877 = vmatpush1.xpose.msra.mxu0 0.0
    %878 = vmatprep.subr.mxu0 0.0
    %879 = vmatpush1.xpose.msra.mxu0 0.0
    %880 = vmatprep.subr.mxu0 0.0
    %881 = vmatpush1.xpose.msra.mxu0 0.0
    %882 = vmatprep.subr.mxu0 0.0
    %883 = vmatpush1.xpose.msra.mxu0 0.0
    %884 = vmatprep.subr.mxu0 0.0
    %885 = vmatpush1.xpose.msra.mxu0 0.0
    %886 = vmatprep.subr.mxu0 0.0
    %887 = vmatpush1.xpose.msra.mxu0 0.0
    %888 = vmatprep.subr.mxu0 0.0
    %889 = vmatpush1.xpose.msra.mxu0 0.0
    %890 = vmatprep.subr.mxu0 0.0
    %891 = vmatpush1.xpose.msra.mxu0 0.0
    %892 = vmatprep.subr.mxu0 0.0
    %893 = vmatpush1.xpose.msra.mxu0 0.0
    %894 = vmatprep.subr.mxu0 0.0
    %895 = vmatpush1.xpose.msra.mxu0 0.0
    %896 = vmatprep.subr.mxu0 0.0
    %897 = vmatpush1.xpose.msra.mxu0 0.0
    %898 = vmatprep.subr.mxu0 0.0
    %899 = vmatpush1.xpose.msra.mxu0 0.0
    %900 = vmatprep.subr.mxu0 0.0
    %901 = vmatpush1.xpose.msra.mxu0 0.0
    %902 = vmatprep.subr.mxu0 0.0
    %903 = vmatpush1.xpose.msra.mxu0 0.0
    %904 = vmatprep.subr.mxu0 0.0
    %905 = vmatpush1.xpose.msra.mxu0 0.0
    %906 = vmatprep.subr.mxu0 0.0
    %907 = vmatpush1.xpose.msra.mxu0 0.0
    %908 = vmatprep.subr.mxu0 0.0
    %909 = vmatpush1.xpose.msra.mxu0 0.0
    %910 = vmatprep.subr.mxu0 0.0
    %911 = vmatpush1.xpose.msra.mxu0 0.0
    %912 = vmatprep.subr.mxu0 0.0
    %913 = vmatpush1.xpose.msra.mxu0 0.0
    %914 = vmatprep.subr.mxu0 0.0
    %915 = vmatpush1.xpose.msra.mxu0 0.0
    %916 = vmatprep.mubr.f32.mxu0 0.0
    %917 = vmatmul.mubr.f32.gmra.mrb[0].mxu0 %v833
    %v918 = vpop.f32.mrb[0].mxu0
    %v919 = vadd.f32 0.0, %v918
    %v920 = vpop.f32.mrb[0].mxu0
    %921 = vmatprep.mubr.f32.mxu0 0.0
    %922 = vmatmul.mubr.f32.gmra.mrb[0].mxu0 %v836
    %v923 = vpop.f32.mrb[0].mxu0
    %v924 = vadd.f32 0.0, %v923
    %v925 = vpop.f32.mrb[0].mxu0
    %926 = vmatprep.mubr.f32.mxu0 0.0
    %927 = vmatmul.mubr.f32.gmra.mrb[0].mxu0 %v839
    %v928 = vpop.f32.mrb[0].mxu0
    %v929 = vadd.f32 0.0, %v928
    %v930 = vpop.f32.mrb[0].mxu0
    %931 = vmatprep.mubr.f32.mxu0 0.0
    %932 = vmatmul.mubr.f32.gmra.mrb[0].mxu0 %v842
    %v933 = vpop.f32.mrb[0].mxu0
    %v934 = vadd.f32 0.0, %v933
    %v935 = vpop.f32.mrb[0].mxu0
    %936 = vdwg.mxu0
    %v937 = vmul.f32 %v919, 1.442695
    %v938 = vpow.pop %v937
    %v939 = vmul.f32 %v924, 1.442695
    %v940 = vpow.pop %v939
    %v941 = vmul.f32 %v929, 1.442695
    %v942 = vpow.pop %v941
    %v943 = vmul.f32 %v934, 1.442695
    %v944 = vpow.pop %v943
    %v945 = vmul.f32 %v938, %v130
    %v946 = vmul.f32 %v940, %v131
    %v947 = vmul.f32 %v942, %v132
    %v948 = vmul.f32 %v944, %v133
    %v949 = vsel %vm451, %v945, 0.0
    %950 = vadd.xlane.f32.xlu0 %v949
    %v951 = vpop.xlane.xlu0 %950
    %v952 = vsel %vm451, %v946, 0.0
    %953 = vadd.xlane.f32.xlu0 %v952
    %v954 = vpop.xlane.xlu0 %953
    %v955 = vsel %vm451, %v947, 0.0
    %956 = vadd.xlane.f32.xlu0 %v955
    %v957 = vpop.xlane.xlu0 %956
    %v958 = vsel %vm451, %v948, 0.0
    %959 = vadd.xlane.f32.xlu0 %v958
    %v960 = vpop.xlane.xlu0 %959
    %v961 = vrcp.pop %v951
    %v962 = vrcp.pop %v954
    %v963 = vrcp.pop %v957
    %v964 = vrcp.pop %v960
    %v965 = vmul.f32 %v945, %v961
    %v966 = vmul.f32 %v946, %v962
    %v967 = vmul.f32 %v947, %v963
    %v968 = vmul.f32 %v948, %v964
    %969 = vrot.lane.b32.xlu0 %v215, 112
    %v970 = vpop.permute.xlu0 %969
    %971 = vrot.lane.b32.xlu0 %v220, 112
    %v972 = vpop.permute.xlu0 %971
    %973 = vrot.lane.b32.xlu0 %v829, 112
    %v974 = vpop.permute.xlu0 %973
    %975 = vrot.lane.b32.xlu0 %v831, 112
    %v976 = vpop.permute.xlu0 %975
    %v982 = vsel %vm451, %v965, 0
    %v985 = vsel %vm451, %v966, 0
    %v988 = vsel %vm451, %v967, 0
    %v991 = vsel %vm451, %v968, 0
    %993 = vmatprep.subr.mxu0 0.0
    %994 = vmatpush1.msra.mxu0 %v970
    %995 = vmatprep.subr.mxu0 0.0
    %996 = vmatpush1.msra.mxu0 %v972
    %997 = vmatprep.subr.mxu0 0.0
    %998 = vmatpush1.msra.mxu0 %v974
    %999 = vmatprep.subr.mxu0 0.0
    %1000 = vmatpush1.msra.mxu0 %v976
    %1001 = vmatprep.subr.mxu0 0.0
    %1002 = vmatpush1.msra.mxu0 0.0
    %1003 = vmatprep.subr.mxu0 0.0
    %1004 = vmatpush1.msra.mxu0 0.0
    %1005 = vmatprep.subr.mxu0 0.0
    %1006 = vmatpush1.msra.mxu0 0.0
    %1007 = vmatprep.subr.mxu0 0.0
    %1008 = vmatpush1.msra.mxu0 0.0
    %1009 = vmatprep.subr.mxu0 0.0
    %1010 = vmatpush1.msra.mxu0 0.0
    %1011 = vmatprep.subr.mxu0 0.0
    %1012 = vmatpush1.msra.mxu0 0.0
    %1013 = vmatprep.subr.mxu0 0.0
    %1014 = vmatpush1.msra.mxu0 0.0
    %1015 = vmatprep.subr.mxu0 0.0
    %1016 = vmatpush1.msra.mxu0 0.0
    %1017 = vmatprep.subr.mxu0 0.0
    %1018 = vmatpush1.msra.mxu0 0.0
    %1019 = vmatprep.subr.mxu0 0.0
    %1020 = vmatpush1.msra.mxu0 0.0
    %1021 = vmatprep.subr.mxu0 0.0
    %1022 = vmatpush1.msra.mxu0 0.0
    %1023 = vmatprep.subr.mxu0 0.0
    %1024 = vmatpush1.msra.mxu0 0.0
    %1025 = vmatprep.subr.mxu0 0.0
    %1026 = vmatpush1.msra.mxu0 0.0
    %1027 = vmatprep.subr.mxu0 0.0
    %1028 = vmatpush1.msra.mxu0 0.0
    %1029 = vmatprep.subr.mxu0 0.0
    %1030 = vmatpush1.msra.mxu0 0.0
    %1031 = vmatprep.subr.mxu0 0.0
    %1032 = vmatpush1.msra.mxu0 0.0
    %1033 = vmatprep.subr.mxu0 0.0
    %1034 = vmatpush1.msra.mxu0 0.0
    %1035 = vmatprep.subr.mxu0 0.0
    %1036 = vmatpush1.msra.mxu0 0.0
    %1037 = vmatprep.subr.mxu0 0.0
    %1038 = vmatpush1.msra.mxu0 0.0
    %1039 = vmatprep.subr.mxu0 0.0
    %1040 = vmatpush1.msra.mxu0 0.0
    %1041 = vmatprep.subr.mxu0 0.0
    %1042 = vmatpush1.msra.mxu0 0.0
    %1043 = vmatprep.subr.mxu0 0.0
    %1044 = vmatpush1.msra.mxu0 0.0
    %1045 = vmatprep.subr.mxu0 0.0
    %1046 = vmatpush1.msra.mxu0 0.0
    %1047 = vmatprep.subr.mxu0 0.0
    %1048 = vmatpush1.msra.mxu0 0.0
    %1049 = vmatprep.subr.mxu0 0.0
    %1050 = vmatpush1.msra.mxu0 0.0
    %1051 = vmatprep.subr.mxu0 0.0
    %1052 = vmatpush1.msra.mxu0 0.0
    %1053 = vmatprep.subr.mxu0 0.0
    %1054 = vmatpush1.msra.mxu0 0.0
    %1055 = vmatprep.subr.mxu0 0.0
    %1056 = vmatpush1.msra.mxu0 0.0
    %1057 = vmatprep.mubr.f32.mxu0 0.0
    %1058 = vmatmul.mubr.f32.gmra.mrb[0].mxu0 %v982
    %v1059 = vpop.f32.mrb[0].mxu0
    %v1060 = vadd.f32 0.0, %v1059
    %v1061 = vpop.f32.mrb[0].mxu0
    %1062 = vmatprep.mubr.f32.mxu0 0.0
    %1063 = vmatmul.mubr.f32.gmra.mrb[0].mxu0 %v985
    %v1064 = vpop.f32.mrb[0].mxu0
    %v1065 = vadd.f32 0.0, %v1064
    %v1066 = vpop.f32.mrb[0].mxu0
    %1067 = vmatprep.mubr.f32.mxu0 0.0
    %1068 = vmatmul.mubr.f32.gmra.mrb[0].mxu0 %v988
    %v1069 = vpop.f32.mrb[0].mxu0
    %v1070 = vadd.f32 0.0, %v1069
    %v1071 = vpop.f32.mrb[0].mxu0
    %1072 = vmatprep.mubr.f32.mxu0 0.0
    %1073 = vmatmul.mubr.f32.gmra.mrb[0].mxu0 %v991
    %v1074 = vpop.f32.mrb[0].mxu0
    %v1075 = vadd.f32 0.0, %v1074
    %v1076 = vpop.f32.mrb[0].mxu0
    %1077 = vdwg.mxu0
    %1080 = vrot.lane.b32.xlu0 %v1070, 8
    %v1081 = vpop.permute.xlu0 %1080
    %1082 = vrot.lane.b32.xlu0 %v1075, 8
    %v1083 = vpop.permute.xlu0 %1082
    %v1086 = vsel %vm333, %v1060, %v1081
    %v1087 = vsel %vm333, %v1065, %v1083
    %v1088 = vld [vmem:[%s2 + $0xf4] sm:$0x1]
    %v1089 = vlaneseq
    %v1090 = vshrl.u32 %v1089, 7
    %v1091 = vsub.s32 0, %v1090
    %v1092 = vrot.slane %v1088, %v1091
    %v1094 = vsel %vm141, %v1086, 0
    %v1097 = vsel %vm141, %v1087, 0
    %1099 = vmatprep.subr.mxu0 0.0
    %1100 = vmatpush1.msra.mxu0 %v812
    %1101 = vmatprep.subr.mxu0 0.0
    %1102 = vmatpush1.msra.mxu0 %v813
    %1103 = vmatprep.subr.mxu0 0.0
    %1104 = vmatpush1.msra.mxu0 0.0
    %1105 = vmatprep.subr.mxu0 0.0
    %1106 = vmatpush1.msra.mxu0 0.0
    %1107 = vmatprep.subr.mxu0 0.0
    %1108 = vmatpush1.msra.mxu0 0.0
    %1109 = vmatprep.subr.mxu0 0.0
    %1110 = vmatpush1.msra.mxu0 0.0
    %1111 = vmatprep.subr.mxu0 0.0
    %1112 = vmatpush1.msra.mxu0 0.0
    %1113 = vmatprep.subr.mxu0 0.0
    %1114 = vmatpush1.msra.mxu0 0.0
    %1115 = vmatprep.subr.mxu0 0.0
    %1116 = vmatpush1.msra.mxu0 0.0
    %1117 = vmatprep.subr.mxu0 0.0
    %1118 = vmatpush1.msra.mxu0 0.0
    %1119 = vmatprep.subr.mxu0 0.0
    %1120 = vmatpush1.msra.mxu0 0.0
    %1121 = vmatprep.subr.mxu0 0.0
    %1122 = vmatpush1.msra.mxu0 0.0
    %1123 = vmatprep.subr.mxu0 0.0
    %1124 = vmatpush1.msra.mxu0 0.0
    %1125 = vmatprep.subr.mxu0 0.0
    %1126 = vmatpush1.msra.mxu0 0.0
    %1127 = vmatprep.subr.mxu0 0.0
    %1128 = vmatpush1.msra.mxu0 0.0
    %1129 = vmatprep.subr.mxu0 0.0
    %1130 = vmatpush1.msra.mxu0 0.0
    %1131 = vmatprep.subr.mxu0 0.0
    %1132 = vmatpush1.msra.mxu0 0.0
    %1133 = vmatprep.subr.mxu0 0.0
    %1134 = vmatpush1.msra.mxu0 0.0
    %1135 = vmatprep.subr.mxu0 0.0
    %1136 = vmatpush1.msra.mxu0 0.0
    %1137 = vmatprep.subr.mxu0 0.0
    %1138 = vmatpush1.msra.mxu0 0.0
    %1139 = vmatprep.subr.mxu0 0.0
    %1140 = vmatpush1.msra.mxu0 0.0
    %1141 = vmatprep.subr.mxu0 0.0
    %1142 = vmatpush1.msra.mxu0 0.0
    %1143 = vmatprep.subr.mxu0 0.0
    %1144 = vmatpush1.msra.mxu0 0.0
    %1145 = vmatprep.subr.mxu0 0.0
    %1146 = vmatpush1.msra.mxu0 0.0
    %1147 = vmatprep.subr.mxu0 0.0
    %1148 = vmatpush1.msra.mxu0 0.0
    %1149 = vmatprep.subr.mxu0 0.0
    %1150 = vmatpush1.msra.mxu0 0.0
    %1151 = vmatprep.subr.mxu0 0.0
    %1152 = vmatpush1.msra.mxu0 0.0
    %1153 = vmatprep.subr.mxu0 0.0
    %1154 = vmatpush1.msra.mxu0 0.0
    %1155 = vmatprep.subr.mxu0 0.0
    %1156 = vmatpush1.msra.mxu0 0.0
    %1157 = vmatprep.subr.mxu0 0.0
    %1158 = vmatpush1.msra.mxu0 0.0
    %1159 = vmatprep.subr.mxu0 0.0
    %1160 = vmatpush1.msra.mxu0 0.0
    %1161 = vmatprep.subr.mxu0 0.0
    %1162 = vmatpush1.msra.mxu0 0.0
    %1163 = vmatprep.mubr.f32.mxu0 0.0
    %1164 = vmatmul.mubr.f32.gmra.mrb[0].mxu0 %v1094
    %v1165 = vpop.f32.mrb[0].mxu0
    %v1166 = vadd.f32 %v1092, %v1165
    %v1167 = vpop.f32.mrb[0].mxu0
    %1168 = vmatprep.mubr.f32.mxu0 0.0
    %1169 = vmatmul.mubr.f32.gmra.mrb[0].mxu0 %v1097
    %v1170 = vpop.f32.mrb[0].mxu0
    %v1171 = vadd.f32 %v1092, %v1170
    %v1172 = vpop.f32.mrb[0].mxu0
    %1173 = vdwg.mxu0
    %v1174 = vadd.f32 %v722, %v1166
    %v1175 = vadd.f32 %v723, %v1171
    %v1176 = vld [vmem:[%s2 + $0xf9] sm:$0x1]
    %v1177 = vld [vmem:[%s2 + $0xfa] sm:$0x1]
    %v1178 = vsel %vm141, %v1174, 0.0
    %1179 = vadd.xlane.f32.xlu0 %v1178
    %v1180 = vpop.xlane.xlu0 %1179
    %v1181 = vsel %vm141, %v1175, 0.0
    %1182 = vadd.xlane.f32.xlu0 %v1181
    %v1183 = vpop.xlane.xlu0 %1182
    %v1184 = vmul.f32 %v1180, %v687
    %v1185 = vmul.f32 %v1183, %v687
    %v1186 = vmul.f32 %v1174, %v1174
    %v1187 = vmul.f32 %v1175, %v1175
    %v1188 = vsel %vm141, %v1186, 0.0
    %1189 = vadd.xlane.f32.xlu0 %v1188
    %v1190 = vpop.xlane.xlu0 %1189
    %v1191 = vsel %vm141, %v1187, 0.0
    %1192 = vadd.xlane.f32.xlu0 %v1191
    %v1193 = vpop.xlane.xlu0 %1192
    %v1194 = vmul.f32 %v1190, %v687
    %v1195 = vmul.f32 %v1193, %v687
    %v1196 = vmul.f32 %v1184, %v1184
    %v1197 = vmul.f32 %v1185, %v1185
    %v1198 = vsub.f32 %v1194, %v1196
    %v1199 = vsub.f32 %v1195, %v1197
    %v1200 = vsub.f32 %v1174, %v1184
    %v1201 = vsub.f32 %v1175, %v1185
    %v1202 = vadd.f32 %v1198, 1e-05
    %v1203 = vadd.f32 %v1199, 1e-05
    %v1204 = vrsqrt.pop %v1202
    %v1205 = vrsqrt.pop %v1203
    %v1206 = vmul.f32 %v1200, %v1204
    %v1207 = vmul.f32 %v1201, %v1205
    %v1208 = vlaneseq
    %v1209 = vshrl.u32 %v1208, 7
    %v1210 = vsub.s32 0, %v1209
    %v1211 = vrot.slane %v1176, %v1210
    %v1212 = vmul.f32 %v1206, %v1211
    %v1213 = vmul.f32 %v1207, %v1211
    %v1214 = vlaneseq
    %v1215 = vshrl.u32 %v1214, 7
    %v1216 = vsub.s32 0, %v1215
    %v1217 = vrot.slane %v1177, %v1216
    %v1218 = vadd.f32 %v1212, %v1217
    %v1219 = vadd.f32 %v1213, %v1217
    %v1220 = vld [vmem:[%s2 + $0x50] sm:$0xff]
    %v1221 = vld [vmem:[%s2 + $0x58] sm:$0xff]
    %v1222 = vld [vmem:[%s2 + $0xf5] sm:$0x1]
    %v1223 = vlaneseq
    %v1224 = vshrl.u32 %v1223, 7
    %v1225 = vsub.s32 0, %v1224
    %v1226 = vrot.slane %v1222, %v1225
    %v1228 = vsel %vm141, %v1218, 0
    %v1231 = vsel %vm141, %v1219, 0
    %1233 = vmatprep.subr.mxu0 0.0
    %1234 = vmatpush1.msra.mxu0 %v1220
    %1235 = vmatprep.subr.mxu0 0.0
    %1236 = vmatpush1.msra.mxu0 %v1221
    %1237 = vmatprep.subr.mxu0 0.0
    %1238 = vmatpush1.msra.mxu0 0.0
    %1239 = vmatprep.subr.mxu0 0.0
    %1240 = vmatpush1.msra.mxu0 0.0
    %1241 = vmatprep.subr.mxu0 0.0
    %1242 = vmatpush1.msra.mxu0 0.0
    %1243 = vmatprep.subr.mxu0 0.0
    %1244 = vmatpush1.msra.mxu0 0.0
    %1245 = vmatprep.subr.mxu0 0.0
    %1246 = vmatpush1.msra.mxu0 0.0
    %1247 = vmatprep.subr.mxu0 0.0
    %1248 = vmatpush1.msra.mxu0 0.0
    %1249 = vmatprep.subr.mxu0 0.0
    %1250 = vmatpush1.msra.mxu0 0.0
    %1251 = vmatprep.subr.mxu0 0.0
    %1252 = vmatpush1.msra.mxu0 0.0
    %1253 = vmatprep.subr.mxu0 0.0
    %1254 = vmatpush1.msra.mxu0 0.0
    %1255 = vmatprep.subr.mxu0 0.0
    %1256 = vmatpush1.msra.mxu0 0.0
    %1257 = vmatprep.subr.mxu0 0.0
    %1258 = vmatpush1.msra.mxu0 0.0
    %1259 = vmatprep.subr.mxu0 0.0
    %1260 = vmatpush1.msra.mxu0 0.0
    %1261 = vmatprep.subr.mxu0 0.0
    %1262 = vmatpush1.msra.mxu0 0.0
    %1263 = vmatprep.subr.mxu0 0.0
    %1264 = vmatpush1.msra.mxu0 0.0
    %1265 = vmatprep.subr.mxu0 0.0
    %1266 = vmatpush1.msra.mxu0 0.0
    %1267 = vmatprep.subr.mxu0 0.0
    %1268 = vmatpush1.msra.mxu0 0.0
    %1269 = vmatprep.subr.mxu0 0.0
    %1270 = vmatpush1.msra.mxu0 0.0
    %1271 = vmatprep.subr.mxu0 0.0
    %1272 = vmatpush1.msra.mxu0 0.0
    %1273 = vmatprep.subr.mxu0 0.0
    %1274 = vmatpush1.msra.mxu0 0.0
    %1275 = vmatprep.subr.mxu0 0.0
    %1276 = vmatpush1.msra.mxu0 0.0
    %1277 = vmatprep.subr.mxu0 0.0
    %1278 = vmatpush1.msra.mxu0 0.0
    %1279 = vmatprep.subr.mxu0 0.0
    %1280 = vmatpush1.msra.mxu0 0.0
    %1281 = vmatprep.subr.mxu0 0.0
    %1282 = vmatpush1.msra.mxu0 0.0
    %1283 = vmatprep.subr.mxu0 0.0
    %1284 = vmatpush1.msra.mxu0 0.0
    %1285 = vmatprep.subr.mxu0 0.0
    %1286 = vmatpush1.msra.mxu0 0.0
    %1287 = vmatprep.subr.mxu0 0.0
    %1288 = vmatpush1.msra.mxu0 0.0
    %1289 = vmatprep.subr.mxu0 0.0
    %1290 = vmatpush1.msra.mxu0 0.0
    %1291 = vmatprep.subr.mxu0 0.0
    %1292 = vmatpush1.msra.mxu0 0.0
    %1293 = vmatprep.subr.mxu0 0.0
    %1294 = vmatpush1.msra.mxu0 0.0
    %1295 = vmatprep.subr.mxu0 0.0
    %1296 = vmatpush1.msra.mxu0 0.0
    %1297 = vmatprep.mubr.f32.mxu0 0.0
    %1298 = vmatmul.mubr.f32.gmra.mrb[0].mxu0 %v1228
    %v1299 = vpop.f32.mrb[0].mxu0
    %v1300 = vadd.f32 %v1226, %v1299
    %v1301 = vpop.f32.mrb[0].mxu0
    %1302 = vmatprep.mubr.f32.mxu0 0.0
    %1303 = vmatmul.mubr.f32.gmra.mrb[0].mxu0 %v1231
    %v1304 = vpop.f32.mrb[0].mxu0
    %v1305 = vadd.f32 %v1226, %v1304
    %v1306 = vpop.f32.mrb[0].mxu0
    %1307 = vdwg.mxu0
    %v1308 = vmax.f32 %v1300, 0.0
    %v1309 = vmax.f32 %v1305, 0.0
    %v1310 = vld [vmem:[%s2 + $0x60] sm:$0xff]
    %v1311 = vld [vmem:[%s2 + $0x68] sm:$0xff]
    %v1312 = vld [vmem:[%s2 + $0x70] sm:$0xff]
    %v1313 = vld [vmem:[%s2 + $0x78] sm:$0xff]
    %v1314 = vld [vmem:[%s2 + $0xf6] sm:$0x1]
    %v1315 = vlaneseq
    %v1316 = vshrl.u32 %v1315, 7
    %v1317 = vsub.s32 0, %v1316
    %v1318 = vrot.slane %v1314, %v1317
    %v1320 = vsel %vm451, %v1308, 0
    %v1323 = vsel %vm451, %v1309, 0
    %1325 = vmatprep.subr.mxu0 0.0
    %1326 = vmatpush1.msra.mxu0 %v1310
    %1327 = vmatprep.subr.mxu0 0.0
    %1328 = vmatpush1.msra.mxu0 %v1311
    %1329 = vmatprep.subr.mxu0 0.0
    %1330 = vmatpush1.msra.mxu0 %v1312
    %1331 = vmatprep.subr.mxu0 0.0
    %1332 = vmatpush1.msra.mxu0 %v1313
    %1333 = vmatprep.subr.mxu0 0.0
    %1334 = vmatpush1.msra.mxu0 0.0
    %1335 = vmatprep.subr.mxu0 0.0
    %1336 = vmatpush1.msra.mxu0 0.0
    %1337 = vmatprep.subr.mxu0 0.0
    %1338 = vmatpush1.msra.mxu0 0.0
    %1339 = vmatprep.subr.mxu0 0.0
    %1340 = vmatpush1.msra.mxu0 0.0
    %1341 = vmatprep.subr.mxu0 0.0
    %1342 = vmatpush1.msra.mxu0 0.0
    %1343 = vmatprep.subr.mxu0 0.0
    %1344 = vmatpush1.msra.mxu0 0.0
    %1345 = vmatprep.subr.mxu0 0.0
    %1346 = vmatpush1.msra.mxu0 0.0
    %1347 = vmatprep.subr.mxu0 0.0
    %1348 = vmatpush1.msra.mxu0 0.0
    %1349 = vmatprep.subr.mxu0 0.0
    %1350 = vmatpush1.msra.mxu0 0.0
    %1351 = vmatprep.subr.mxu0 0.0
    %1352 = vmatpush1.msra.mxu0 0.0
    %1353 = vmatprep.subr.mxu0 0.0
    %1354 = vmatpush1.msra.mxu0 0.0
    %1355 = vmatprep.subr.mxu0 0.0
    %1356 = vmatpush1.msra.mxu0 0.0
    %1357 = vmatprep.subr.mxu0 0.0
    %1358 = vmatpush1.msra.mxu0 0.0
    %1359 = vmatprep.subr.mxu0 0.0
    %1360 = vmatpush1.msra.mxu0 0.0
    %1361 = vmatprep.subr.mxu0 0.0
    %1362 = vmatpush1.msra.mxu0 0.0
    %1363 = vmatprep.subr.mxu0 0.0
    %1364 = vmatpush1.msra.mxu0 0.0
    %1365 = vmatprep.subr.mxu0 0.0
    %1366 = vmatpush1.msra.mxu0 0.0
    %1367 = vmatprep.subr.mxu0 0.0
    %1368 = vmatpush1.msra.mxu0 0.0
    %1369 = vmatprep.subr.mxu0 0.0
    %1370 = vmatpush1.msra.mxu0 0.0
    %1371 = vmatprep.subr.mxu0 0.0
    %1372 = vmatpush1.msra.mxu0 0.0
    %1373 = vmatprep.subr.mxu0 0.0
    %1374 = vmatpush1.msra.mxu0 0.0
    %1375 = vmatprep.subr.mxu0 0.0
    %1376 = vmatpush1.msra.mxu0 0.0
    %1377 = vmatprep.subr.mxu0 0.0
    %1378 = vmatpush1.msra.mxu0 0.0
    %1379 = vmatprep.subr.mxu0 0.0
    %1380 = vmatpush1.msra.mxu0 0.0
    %1381 = vmatprep.subr.mxu0 0.0
    %1382 = vmatpush1.msra.mxu0 0.0
    %1383 = vmatprep.subr.mxu0 0.0
    %1384 = vmatpush1.msra.mxu0 0.0
    %1385 = vmatprep.subr.mxu0 0.0
    %1386 = vmatpush1.msra.mxu0 0.0
    %1387 = vmatprep.subr.mxu0 0.0
    %1388 = vmatpush1.msra.mxu0 0.0
    %1389 = vmatprep.mubr.f32.mxu0 0.0
    %1390 = vmatmul.mubr.f32.gmra.mrb[0].mxu0 %v1320
    %v1391 = vpop.f32.mrb[0].mxu0
    %v1392 = vadd.f32 %v1318, %v1391
    %v1393 = vpop.f32.mrb[0].mxu0
    %1394 = vmatprep.mubr.f32.mxu0 0.0
    %1395 = vmatmul.mubr.f32.gmra.mrb[0].mxu0 %v1323
    %v1396 = vpop.f32.mrb[0].mxu0
    %v1397 = vadd.f32 %v1318, %v1396
    %v1398 = vpop.f32.mrb[0].mxu0
    %1399 = vdwg.mxu0
    %v1400 = vadd.f32 %v1218, %v1392
    %v1401 = vadd.f32 %v1219, %v1397
    %v1402 = vld [vmem:[%s2 + $0xfb] sm:$0x1]
    %v1403 = vld [vmem:[%s2 + $0xfc] sm:$0x1]
    %v1404 = vsel %vm141, %v1400, 0.0
    %1405 = vadd.xlane.f32.xlu0 %v1404
    %v1406 = vpop.xlane.xlu0 %1405
    %v1407 = vsel %vm141, %v1401, 0.0
    %1408 = vadd.xlane.f32.xlu0 %v1407
    %v1409 = vpop.xlane.xlu0 %1408
    %v1410 = vmul.f32 %v1406, %v687
    %v1411 = vmul.f32 %v1409, %v687
    %v1412 = vmul.f32 %v1400, %v1400
    %v1413 = vmul.f32 %v1401, %v1401
    %v1414 = vsel %vm141, %v1412, 0.0
    %1415 = vadd.xlane.f32.xlu0 %v1414
    %v1416 = vpop.xlane.xlu0 %1415
    %v1417 = vsel %vm141, %v1413, 0.0
    %1418 = vadd.xlane.f32.xlu0 %v1417
    %v1419 = vpop.xlane.xlu0 %1418
    %v1420 = vmul.f32 %v1416, %v687
    %v1421 = vmul.f32 %v1419, %v687
    %v1422 = vmul.f32 %v1410, %v1410
    %v1423 = vmul.f32 %v1411, %v1411
    %v1424 = vsub.f32 %v1420, %v1422
    %v1425 = vsub.f32 %v1421, %v1423
    %v1426 = vsub.f32 %v1400, %v1410
    %v1427 = vsub.f32 %v1401, %v1411
    %v1428 = vadd.f32 %v1424, 1e-05
    %v1429 = vadd.f32 %v1425, 1e-05
    %v1430 = vrsqrt.pop %v1428
    %v1431 = vrsqrt.pop %v1429
    %v1432 = vmul.f32 %v1426, %v1430
    %v1433 = vmul.f32 %v1427, %v1431
    %v1434 = vlaneseq
    %v1435 = vshrl.u32 %v1434, 7
    %v1436 = vsub.s32 0, %v1435
    %v1437 = vrot.slane %v1402, %v1436
    %v1438 = vmul.f32 %v1432, %v1437
    %v1439 = vmul.f32 %v1433, %v1437
    %v1440 = vlaneseq
    %v1441 = vshrl.u32 %v1440, 7
    %v1442 = vsub.s32 0, %v1441
    %v1443 = vrot.slane %v1403, %v1442
    %v1444 = vadd.f32 %v1438, %v1443
    %v1445 = vadd.f32 %v1439, %v1443
    %v1446 = vld [vmem:[%s2 + $0x80] sm:$0xff]
    %v1447 = vld [vmem:[%s2 + $0x88] sm:$0xff]
    %v1448 = vld [vmem:[%s2 + $0xfd] sm:$0x1]
    %v1449 = vlaneseq
    %v1450 = vshrl.u32 %v1449, 7
    %v1451 = vsub.s32 0, %v1450
    %v1452 = vrot.slane %v1448, %v1451
    %v1454 = vsel %vm141, %v1444, 0
    %v1457 = vsel %vm141, %v1445, 0
    %1459 = vmatprep.subr.mxu0 0.0
    %1460 = vmatpush1.msra.mxu0 %v1446
    %1461 = vmatprep.subr.mxu0 0.0
    %1462 = vmatpush1.msra.mxu0 %v1447
    %1463 = vmatprep.subr.mxu0 0.0
    %1464 = vmatpush1.msra.mxu0 0.0
    %1465 = vmatprep.subr.mxu0 0.0
    %1466 = vmatpush1.msra.mxu0 0.0
    %1467 = vmatprep.subr.mxu0 0.0
    %1468 = vmatpush1.msra.mxu0 0.0
    %1469 = vmatprep.subr.mxu0 0.0
    %1470 = vmatpush1.msra.mxu0 0.0
    %1471 = vmatprep.subr.mxu0 0.0
    %1472 = vmatpush1.msra.mxu0 0.0
    %1473 = vmatprep.subr.mxu0 0.0
    %1474 = vmatpush1.msra.mxu0 0.0
    %1475 = vmatprep.subr.mxu0 0.0
    %1476 = vmatpush1.msra.mxu0 0.0
    %1477 = vmatprep.subr.mxu0 0.0
    %1478 = vmatpush1.msra.mxu0 0.0
    %1479 = vmatprep.subr.mxu0 0.0
    %1480 = vmatpush1.msra.mxu0 0.0
    %1481 = vmatprep.subr.mxu0 0.0
    %1482 = vmatpush1.msra.mxu0 0.0
    %1483 = vmatprep.subr.mxu0 0.0
    %1484 = vmatpush1.msra.mxu0 0.0
    %1485 = vmatprep.subr.mxu0 0.0
    %1486 = vmatpush1.msra.mxu0 0.0
    %1487 = vmatprep.subr.mxu0 0.0
    %1488 = vmatpush1.msra.mxu0 0.0
    %1489 = vmatprep.subr.mxu0 0.0
    %1490 = vmatpush1.msra.mxu0 0.0
    %1491 = vmatprep.subr.mxu0 0.0
    %1492 = vmatpush1.msra.mxu0 0.0
    %1493 = vmatprep.subr.mxu0 0.0
    %1494 = vmatpush1.msra.mxu0 0.0
    %1495 = vmatprep.subr.mxu0 0.0
    %1496 = vmatpush1.msra.mxu0 0.0
    %1497 = vmatprep.subr.mxu0 0.0
    %1498 = vmatpush1.msra.mxu0 0.0
    %1499 = vmatprep.subr.mxu0 0.0
    %1500 = vmatpush1.msra.mxu0 0.0
    %1501 = vmatprep.subr.mxu0 0.0
    %1502 = vmatpush1.msra.mxu0 0.0
    %1503 = vmatprep.subr.mxu0 0.0
    %1504 = vmatpush1.msra.mxu0 0.0
    %1505 = vmatprep.subr.mxu0 0.0
    %1506 = vmatpush1.msra.mxu0 0.0
    %1507 = vmatprep.subr.mxu0 0.0
    %1508 = vmatpush1.msra.mxu0 0.0
    %1509 = vmatprep.subr.mxu0 0.0
    %1510 = vmatpush1.msra.mxu0 0.0
    %1511 = vmatprep.subr.mxu0 0.0
    %1512 = vmatpush1.msra.mxu0 0.0
    %1513 = vmatprep.subr.mxu0 0.0
    %1514 = vmatpush1.msra.mxu0 0.0
    %1515 = vmatprep.subr.mxu0 0.0
    %1516 = vmatpush1.msra.mxu0 0.0
    %1517 = vmatprep.subr.mxu0 0.0
    %1518 = vmatpush1.msra.mxu0 0.0
    %1519 = vmatprep.subr.mxu0 0.0
    %1520 = vmatpush1.msra.mxu0 0.0
    %1521 = vmatprep.subr.mxu0 0.0
    %1522 = vmatpush1.msra.mxu0 0.0
    %1523 = vmatprep.mubr.f32.mxu0 0.0
    %1524 = vmatmul.mubr.f32.gmra.mrb[0].mxu0 %v1454
    %v1525 = vpop.f32.mrb[0].mxu0
    %v1526 = vadd.f32 %v1452, %v1525
    %v1527 = vpop.f32.mrb[0].mxu0
    %1528 = vmatprep.mubr.f32.mxu0 0.0
    %1529 = vmatmul.mubr.f32.gmra.mrb[0].mxu0 %v1457
    %v1530 = vpop.f32.mrb[0].mxu0
    %v1531 = vadd.f32 %v1452, %v1530
    %v1532 = vpop.f32.mrb[0].mxu0
    %1533 = vdwg.mxu0
    %v1534 = vld [vmem:[%s2 + $0x90] sm:$0xff]
    %v1535 = vld [vmem:[%s2 + $0x98] sm:$0xff]
    %1538 = vrot.lane.b32.xlu0 %v1526, 120
    %v1539 = vpop.permute.xlu0 %1538
    %1540 = vrot.lane.b32.xlu0 %v1531, 120
    %v1541 = vpop.permute.xlu0 %1540
    %v1544 = vmul.f32 %v1526, 0.35355338
    %v1545 = vmul.f32 %v1531, 0.35355338
    %v1546 = vmul.f32 %v1539, 0.35355338
    %v1547 = vmul.f32 %v1541, 0.35355338
    %1548 = vrot.lane.b32.xlu0 %v1526, 112
    %v1549 = vpop.permute.xlu0 %1548
    %1550 = vrot.lane.b32.xlu0 %v1531, 112
    %v1551 = vpop.permute.xlu0 %1550
    %1552 = vrot.lane.b32.xlu0 %v1539, 112
    %v1553 = vpop.permute.xlu0 %1552
    %1554 = vrot.lane.b32.xlu0 %v1541, 112
    %v1555 = vpop.permute.xlu0 %1554
    %v1557 = vsel %vm333, %v1544, 0
    %v1560 = vsel %vm333, %v1545, 0
    %v1563 = vsel %vm333, %v1546, 0
    %v1566 = vsel %vm333, %v1547, 0
    %v1568 = vsel %vm333, %v1549, 0
    %v1570 = vsel %vm333, %v1551, 0
    %v1572 = vsel %vm333, %v1553, 0
    %v1574 = vsel %vm333, %v1555, 0
    %1576 = vmatprep.subr.mxu0 0.0
    %1577 = vmatpush1.xpose.msra.mxu0 %v1568
    %1578 = vmatprep.subr.mxu0 0.0
    %1579 = vmatpush1.xpose.msra.mxu0 %v1570
    %1580 = vmatprep.subr.mxu0 0.0
    %1581 = vmatpush1.xpose.msra.mxu0 %v1572
    %1582 = vmatprep.subr.mxu0 0.0
    %1583 = vmatpush1.xpose.msra.mxu0 %v1574
    %1584 = vmatprep.subr.mxu0 0.0
    %1585 = vmatpush1.xpose.msra.mxu0 0.0
    %1586 = vmatprep.subr.mxu0 0.0
    %1587 = vmatpush1.xpose.msra.mxu0 0.0
    %1588 = vmatprep.subr.mxu0 0.0
    %1589 = vmatpush1.xpose.msra.mxu0 0.0
    %1590 = vmatprep.subr.mxu0 0.0
    %1591 = vmatpush1.xpose.msra.mxu0 0.0
    %1592 = vmatprep.subr.mxu0 0.0
    %1593 = vmatpush1.xpose.msra.mxu0 0.0
    %1594 = vmatprep.subr.mxu0 0.0
    %1595 = vmatpush1.xpose.msra.mxu0 0.0
    %1596 = vmatprep.subr.mxu0 0.0
    %1597 = vmatpush1.xpose.msra.mxu0 0.0
    %1598 = vmatprep.subr.mxu0 0.0
    %1599 = vmatpush1.xpose.msra.mxu0 0.0
    %1600 = vmatprep.subr.mxu0 0.0
    %1601 = vmatpush1.xpose.msra.mxu0 0.0
    %1602 = vmatprep.subr.mxu0 0.0
    %1603 = vmatpush1.xpose.msra.mxu0 0.0
    %1604 = vmatprep.subr.mxu0 0.0
    %1605 = vmatpush1.xpose.msra.mxu0 0.0
    %1606 = vmatprep.subr.mxu0 0.0
    %1607 = vmatpush1.xpose.msra.mxu0 0.0
    %1608 = vmatprep.subr.mxu0 0.0
    %1609 = vmatpush1.xpose.msra.mxu0 0.0
    %1610 = vmatprep.subr.mxu0 0.0
    %1611 = vmatpush1.xpose.msra.mxu0 0.0
    %1612 = vmatprep.subr.mxu0 0.0
    %1613 = vmatpush1.xpose.msra.mxu0 0.0
    %1614 = vmatprep.subr.mxu0 0.0
    %1615 = vmatpush1.xpose.msra.mxu0 0.0
    %1616 = vmatprep.subr.mxu0 0.0
    %1617 = vmatpush1.xpose.msra.mxu0 0.0
    %1618 = vmatprep.subr.mxu0 0.0
    %1619 = vmatpush1.xpose.msra.mxu0 0.0
    %1620 = vmatprep.subr.mxu0 0.0
    %1621 = vmatpush1.xpose.msra.mxu0 0.0
    %1622 = vmatprep.subr.mxu0 0.0
    %1623 = vmatpush1.xpose.msra.mxu0 0.0
    %1624 = vmatprep.subr.mxu0 0.0
    %1625 = vmatpush1.xpose.msra.mxu0 0.0
    %1626 = vmatprep.subr.mxu0 0.0
    %1627 = vmatpush1.xpose.msra.mxu0 0.0
    %1628 = vmatprep.subr.mxu0 0.0
    %1629 = vmatpush1.xpose.msra.mxu0 0.0
    %1630 = vmatprep.subr.mxu0 0.0
    %1631 = vmatpush1.xpose.msra.mxu0 0.0
    %1632 = vmatprep.subr.mxu0 0.0
    %1633 = vmatpush1.xpose.msra.mxu0 0.0
    %1634 = vmatprep.subr.mxu0 0.0
    %1635 = vmatpush1.xpose.msra.mxu0 0.0
    %1636 = vmatprep.subr.mxu0 0.0
    %1637 = vmatpush1.xpose.msra.mxu0 0.0
    %1638 = vmatprep.subr.mxu0 0.0
    %1639 = vmatpush1.xpose.msra.mxu0 0.0
    %1640 = vmatprep.mubr.f32.mxu0 0.0
    %1641 = vmatmul.mubr.f32.gmra.mrb[0].mxu0 %v1557
    %v1642 = vpop.f32.mrb[0].mxu0
    %v1643 = vadd.f32 0.0, %v1642
    %v1644 = vpop.f32.mrb[0].mxu0
    %1645 = vmatprep.mubr.f32.mxu0 0.0
    %1646 = vmatmul.mubr.f32.gmra.mrb[0].mxu0 %v1560
    %v1647 = vpop.f32.mrb[0].mxu0
    %v1648 = vadd.f32 0.0, %v1647
    %v1649 = vpop.f32.mrb[0].mxu0
    %1650 = vmatprep.mubr.f32.mxu0 0.0
    %1651 = vmatmul.mubr.f32.gmra.mrb[0].mxu0 %v1563
    %v1652 = vpop.f32.mrb[0].mxu0
    %v1653 = vadd.f32 0.0, %v1652
    %v1654 = vpop.f32.mrb[0].mxu0
    %1655 = vmatprep.mubr.f32.mxu0 0.0
    %1656 = vmatmul.mubr.f32.gmra.mrb[0].mxu0 %v1566
    %v1657 = vpop.f32.mrb[0].mxu0
    %v1658 = vadd.f32 0.0, %v1657
    %v1659 = vpop.f32.mrb[0].mxu0
    %1660 = vdwg.mxu0
    %v1661 = vmul.f32 %v1643, 1.442695
    %v1662 = vpow.pop %v1661
    %v1663 = vmul.f32 %v1648, 1.442695
    %v1664 = vpow.pop %v1663
    %v1665 = vmul.f32 %v1653, 1.442695
    %v1666 = vpow.pop %v1665
    %v1667 = vmul.f32 %v1658, 1.442695
    %v1668 = vpow.pop %v1667
    %v1669 = vmul.f32 %v1662, %v130
    %v1670 = vmul.f32 %v1664, %v131
    %v1671 = vmul.f32 %v1666, %v132
    %v1672 = vmul.f32 %v1668, %v133
    %v1673 = vsel %vm451, %v1669, 0.0
    %1674 = vadd.xlane.f32.xlu0 %v1673
    %v1675 = vpop.xlane.xlu0 %1674
    %v1676 = vsel %vm451, %v1670, 0.0
    %1677 = vadd.xlane.f32.xlu0 %v1676
    %v1678 = vpop.xlane.xlu0 %1677
    %v1679 = vsel %vm451, %v1671, 0.0
    %1680 = vadd.xlane.f32.xlu0 %v1679
    %v1681 = vpop.xlane.xlu0 %1680
    %v1682 = vsel %vm451, %v1672, 0.0
    %1683 = vadd.xlane.f32.xlu0 %v1682
    %v1684 = vpop.xlane.xlu0 %1683
    %v1685 = vrcp.pop %v1675
    %v1686 = vrcp.pop %v1678
    %v1687 = vrcp.pop %v1681
    %v1688 = vrcp.pop %v1684
    %v1689 = vmul.f32 %v1669, %v1685
    %v1690 = vmul.f32 %v1670, %v1686
    %v1691 = vmul.f32 %v1671, %v1687
    %v1692 = vmul.f32 %v1672, %v1688
    %1693 = vrot.lane.b32.xlu0 %v1526, 96
    %v1694 = vpop.permute.xlu0 %1693
    %1695 = vrot.lane.b32.xlu0 %v1531, 96
    %v1696 = vpop.permute.xlu0 %1695
    %1697 = vrot.lane.b32.xlu0 %v1539, 96
    %v1698 = vpop.permute.xlu0 %1697
    %1699 = vrot.lane.b32.xlu0 %v1541, 96
    %v1700 = vpop.permute.xlu0 %1699
    %v1706 = vsel %vm451, %v1689, 0
    %v1709 = vsel %vm451, %v1690, 0
    %v1712 = vsel %vm451, %v1691, 0
    %v1715 = vsel %vm451, %v1692, 0
    %1717 = vmatprep.subr.mxu0 0.0
    %1718 = vmatpush1.msra.mxu0 %v1694
    %1719 = vmatprep.subr.mxu0 0.0
    %1720 = vmatpush1.msra.mxu0 %v1696
    %1721 = vmatprep.subr.mxu0 0.0
    %1722 = vmatpush1.msra.mxu0 %v1698
    %1723 = vmatprep.subr.mxu0 0.0
    %1724 = vmatpush1.msra.mxu0 %v1700
    %1725 = vmatprep.subr.mxu0 0.0
    %1726 = vmatpush1.msra.mxu0 0.0
    %1727 = vmatprep.subr.mxu0 0.0
    %1728 = vmatpush1.msra.mxu0 0.0
    %1729 = vmatprep.subr.mxu0 0.0
    %1730 = vmatpush1.msra.mxu0 0.0
    %1731 = vmatprep.subr.mxu0 0.0
    %1732 = vmatpush1.msra.mxu0 0.0
    %1733 = vmatprep.subr.mxu0 0.0
    %1734 = vmatpush1.msra.mxu0 0.0
    %1735 = vmatprep.subr.mxu0 0.0
    %1736 = vmatpush1.msra.mxu0 0.0
    %1737 = vmatprep.subr.mxu0 0.0
    %1738 = vmatpush1.msra.mxu0 0.0
    %1739 = vmatprep.subr.mxu0 0.0
    %1740 = vmatpush1.msra.mxu0 0.0
    %1741 = vmatprep.subr.mxu0 0.0
    %1742 = vmatpush1.msra.mxu0 0.0
    %1743 = vmatprep.subr.mxu0 0.0
    %1744 = vmatpush1.msra.mxu0 0.0
    %1745 = vmatprep.subr.mxu0 0.0
    %1746 = vmatpush1.msra.mxu0 0.0
    %1747 = vmatprep.subr.mxu0 0.0
    %1748 = vmatpush1.msra.mxu0 0.0
    %1749 = vmatprep.subr.mxu0 0.0
    %1750 = vmatpush1.msra.mxu0 0.0
    %1751 = vmatprep.subr.mxu0 0.0
    %1752 = vmatpush1.msra.mxu0 0.0
    %1753 = vmatprep.subr.mxu0 0.0
    %1754 = vmatpush1.msra.mxu0 0.0
    %1755 = vmatprep.subr.mxu0 0.0
    %1756 = vmatpush1.msra.mxu0 0.0
    %1757 = vmatprep.subr.mxu0 0.0
    %1758 = vmatpush1.msra.mxu0 0.0
    %1759 = vmatprep.subr.mxu0 0.0
    %1760 = vmatpush1.msra.mxu0 0.0
    %1761 = vmatprep.subr.mxu0 0.0
    %1762 = vmatpush1.msra.mxu0 0.0
    %1763 = vmatprep.subr.mxu0 0.0
    %1764 = vmatpush1.msra.mxu0 0.0
    %1765 = vmatprep.subr.mxu0 0.0
    %1766 = vmatpush1.msra.mxu0 0.0
    %1767 = vmatprep.subr.mxu0 0.0
    %1768 = vmatpush1.msra.mxu0 0.0
    %1769 = vmatprep.subr.mxu0 0.0
    %1770 = vmatpush1.msra.mxu0 0.0
    %1771 = vmatprep.subr.mxu0 0.0
    %1772 = vmatpush1.msra.mxu0 0.0
    %1773 = vmatprep.subr.mxu0 0.0
    %1774 = vmatpush1.msra.mxu0 0.0
    %1775 = vmatprep.subr.mxu0 0.0
    %1776 = vmatpush1.msra.mxu0 0.0
    %1777 = vmatprep.subr.mxu0 0.0
    %1778 = vmatpush1.msra.mxu0 0.0
    %1779 = vmatprep.subr.mxu0 0.0
    %1780 = vmatpush1.msra.mxu0 0.0
    %1781 = vmatprep.mubr.f32.mxu0 0.0
    %1782 = vmatmul.mubr.f32.gmra.mrb[0].mxu0 %v1706
    %v1783 = vpop.f32.mrb[0].mxu0
    %v1784 = vadd.f32 0.0, %v1783
    %v1785 = vpop.f32.mrb[0].mxu0
    %1786 = vmatprep.mubr.f32.mxu0 0.0
    %1787 = vmatmul.mubr.f32.gmra.mrb[0].mxu0 %v1709
    %v1788 = vpop.f32.mrb[0].mxu0
    %v1789 = vadd.f32 0.0, %v1788
    %v1790 = vpop.f32.mrb[0].mxu0
    %1791 = vmatprep.mubr.f32.mxu0 0.0
    %1792 = vmatmul.mubr.f32.gmra.mrb[0].mxu0 %v1712
    %v1793 = vpop.f32.mrb[0].mxu0
    %v1794 = vadd.f32 0.0, %v1793
    %v1795 = vpop.f32.mrb[0].mxu0
    %1796 = vmatprep.mubr.f32.mxu0 0.0
    %1797 = vmatmul.mubr.f32.gmra.mrb[0].mxu0 %v1715
    %v1798 = vpop.f32.mrb[0].mxu0
    %v1799 = vadd.f32 0.0, %v1798
    %v1800 = vpop.f32.mrb[0].mxu0
    %1801 = vdwg.mxu0
    %1804 = vrot.lane.b32.xlu0 %v1794, 8
    %v1805 = vpop.permute.xlu0 %1804
    %1806 = vrot.lane.b32.xlu0 %v1799, 8
    %v1807 = vpop.permute.xlu0 %1806
    %v1810 = vsel %vm333, %v1784, %v1805
    %v1811 = vsel %vm333, %v1789, %v1807
    %v1812 = vld [vmem:[%s2 + $0xfe] sm:$0x1]
    %v1813 = vlaneseq
    %v1814 = vshrl.u32 %v1813, 7
    %v1815 = vsub.s32 0, %v1814
    %v1816 = vrot.slane %v1812, %v1815
    %v1818 = vsel %vm141, %v1810, 0
    %v1821 = vsel %vm141, %v1811, 0
    %1823 = vmatprep.subr.mxu0 0.0
    %1824 = vmatpush1.msra.mxu0 %v1534
    %1825 = vmatprep.subr.mxu0 0.0
    %1826 = vmatpush1.msra.mxu0 %v1535
    %1827 = vmatprep.subr.mxu0 0.0
    %1828 = vmatpush1.msra.mxu0 0.0
    %1829 = vmatprep.subr.mxu0 0.0
    %1830 = vmatpush1.msra.mxu0 0.0
    %1831 = vmatprep.subr.mxu0 0.0
    %1832 = vmatpush1.msra.mxu0 0.0
    %1833 = vmatprep.subr.mxu0 0.0
    %1834 = vmatpush1.msra.mxu0 0.0
    %1835 = vmatprep.subr.mxu0 0.0
    %1836 = vmatpush1.msra.mxu0 0.0
    %1837 = vmatprep.subr.mxu0 0.0
    %1838 = vmatpush1.msra.mxu0 0.0
    %1839 = vmatprep.subr.mxu0 0.0
    %1840 = vmatpush1.msra.mxu0 0.0
    %1841 = vmatprep.subr.mxu0 0.0
    %1842 = vmatpush1.msra.mxu0 0.0
    %1843 = vmatprep.subr.mxu0 0.0
    %1844 = vmatpush1.msra.mxu0 0.0
    %1845 = vmatprep.subr.mxu0 0.0
    %1846 = vmatpush1.msra.mxu0 0.0
    %1847 = vmatprep.subr.mxu0 0.0
    %1848 = vmatpush1.msra.mxu0 0.0
    %1849 = vmatprep.subr.mxu0 0.0
    %1850 = vmatpush1.msra.mxu0 0.0
    %1851 = vmatprep.subr.mxu0 0.0
    %1852 = vmatpush1.msra.mxu0 0.0
    %1853 = vmatprep.subr.mxu0 0.0
    %1854 = vmatpush1.msra.mxu0 0.0
    %1855 = vmatprep.subr.mxu0 0.0
    %1856 = vmatpush1.msra.mxu0 0.0
    %1857 = vmatprep.subr.mxu0 0.0
    %1858 = vmatpush1.msra.mxu0 0.0
    %1859 = vmatprep.subr.mxu0 0.0
    %1860 = vmatpush1.msra.mxu0 0.0
    %1861 = vmatprep.subr.mxu0 0.0
    %1862 = vmatpush1.msra.mxu0 0.0
    %1863 = vmatprep.subr.mxu0 0.0
    %1864 = vmatpush1.msra.mxu0 0.0
    %1865 = vmatprep.subr.mxu0 0.0
    %1866 = vmatpush1.msra.mxu0 0.0
    %1867 = vmatprep.subr.mxu0 0.0
    %1868 = vmatpush1.msra.mxu0 0.0
    %1869 = vmatprep.subr.mxu0 0.0
    %1870 = vmatpush1.msra.mxu0 0.0
    %1871 = vmatprep.subr.mxu0 0.0
    %1872 = vmatpush1.msra.mxu0 0.0
    %1873 = vmatprep.subr.mxu0 0.0
    %1874 = vmatpush1.msra.mxu0 0.0
    %1875 = vmatprep.subr.mxu0 0.0
    %1876 = vmatpush1.msra.mxu0 0.0
    %1877 = vmatprep.subr.mxu0 0.0
    %1878 = vmatpush1.msra.mxu0 0.0
    %1879 = vmatprep.subr.mxu0 0.0
    %1880 = vmatpush1.msra.mxu0 0.0
    %1881 = vmatprep.subr.mxu0 0.0
    %1882 = vmatpush1.msra.mxu0 0.0
    %1883 = vmatprep.subr.mxu0 0.0
    %1884 = vmatpush1.msra.mxu0 0.0
    %1885 = vmatprep.subr.mxu0 0.0
    %1886 = vmatpush1.msra.mxu0 0.0
    %1887 = vmatprep.mubr.f32.mxu0 0.0
    %1888 = vmatmul.mubr.f32.gmra.mrb[0].mxu0 %v1818
    %v1889 = vpop.f32.mrb[0].mxu0
    %v1890 = vadd.f32 %v1816, %v1889
    %v1891 = vpop.f32.mrb[0].mxu0
    %1892 = vmatprep.mubr.f32.mxu0 0.0
    %1893 = vmatmul.mubr.f32.gmra.mrb[0].mxu0 %v1821
    %v1894 = vpop.f32.mrb[0].mxu0
    %v1895 = vadd.f32 %v1816, %v1894
    %v1896 = vpop.f32.mrb[0].mxu0
    %1897 = vdwg.mxu0
    %v1898 = vadd.f32 %v1444, %v1890
    %v1899 = vadd.f32 %v1445, %v1895
    %v1900 = vld [vmem:[%s2 + $0x103] sm:$0x1]
    %v1901 = vld [vmem:[%s2 + $0x104] sm:$0x1]
    %v1902 = vsel %vm141, %v1898, 0.0
    %1903 = vadd.xlane.f32.xlu0 %v1902
    %v1904 = vpop.xlane.xlu0 %1903
    %v1905 = vsel %vm141, %v1899, 0.0
    %1906 = vadd.xlane.f32.xlu0 %v1905
    %v1907 = vpop.xlane.xlu0 %1906
    %v1908 = vmul.f32 %v1904, %v687
    %v1909 = vmul.f32 %v1907, %v687
    %v1910 = vmul.f32 %v1898, %v1898
    %v1911 = vmul.f32 %v1899, %v1899
    %v1912 = vsel %vm141, %v1910, 0.0
    %1913 = vadd.xlane.f32.xlu0 %v1912
    %v1914 = vpop.xlane.xlu0 %1913
    %v1915 = vsel %vm141, %v1911, 0.0
    %1916 = vadd.xlane.f32.xlu0 %v1915
    %v1917 = vpop.xlane.xlu0 %1916
    %v1918 = vmul.f32 %v1914, %v687
    %v1919 = vmul.f32 %v1917, %v687
    %v1920 = vmul.f32 %v1908, %v1908
    %v1921 = vmul.f32 %v1909, %v1909
    %v1922 = vsub.f32 %v1918, %v1920
    %v1923 = vsub.f32 %v1919, %v1921
    %v1924 = vsub.f32 %v1898, %v1908
    %v1925 = vsub.f32 %v1899, %v1909
    %v1926 = vadd.f32 %v1922, 1e-05
    %v1927 = vadd.f32 %v1923, 1e-05
    %v1928 = vrsqrt.pop %v1926
    %v1929 = vrsqrt.pop %v1927
    %v1930 = vmul.f32 %v1924, %v1928
    %v1931 = vmul.f32 %v1925, %v1929
    %v1932 = vlaneseq
    %v1933 = vshrl.u32 %v1932, 7
    %v1934 = vsub.s32 0, %v1933
    %v1935 = vrot.slane %v1900, %v1934
    %v1936 = vmul.f32 %v1930, %v1935
    %v1937 = vmul.f32 %v1931, %v1935
    %v1938 = vlaneseq
    %v1939 = vshrl.u32 %v1938, 7
    %v1940 = vsub.s32 0, %v1939
    %v1941 = vrot.slane %v1901, %v1940
    %v1942 = vadd.f32 %v1936, %v1941
    %v1943 = vadd.f32 %v1937, %v1941
    %v1944 = vld [vmem:[%s2 + $0xa0] sm:$0xff]
    %v1945 = vld [vmem:[%s2 + $0xa8] sm:$0xff]
    %v1946 = vld [vmem:[%s2 + $0xff] sm:$0x1]
    %v1947 = vlaneseq
    %v1948 = vshrl.u32 %v1947, 7
    %v1949 = vsub.s32 0, %v1948
    %v1950 = vrot.slane %v1946, %v1949
    %v1952 = vsel %vm141, %v1942, 0
    %v1955 = vsel %vm141, %v1943, 0
    %1957 = vmatprep.subr.mxu0 0.0
    %1958 = vmatpush1.msra.mxu0 %v1944
    %1959 = vmatprep.subr.mxu0 0.0
    %1960 = vmatpush1.msra.mxu0 %v1945
    %1961 = vmatprep.subr.mxu0 0.0
    %1962 = vmatpush1.msra.mxu0 0.0
    %1963 = vmatprep.subr.mxu0 0.0
    %1964 = vmatpush1.msra.mxu0 0.0
    %1965 = vmatprep.subr.mxu0 0.0
    %1966 = vmatpush1.msra.mxu0 0.0
    %1967 = vmatprep.subr.mxu0 0.0
    %1968 = vmatpush1.msra.mxu0 0.0
    %1969 = vmatprep.subr.mxu0 0.0
    %1970 = vmatpush1.msra.mxu0 0.0
    %1971 = vmatprep.subr.mxu0 0.0
    %1972 = vmatpush1.msra.mxu0 0.0
    %1973 = vmatprep.subr.mxu0 0.0
    %1974 = vmatpush1.msra.mxu0 0.0
    %1975 = vmatprep.subr.mxu0 0.0
    %1976 = vmatpush1.msra.mxu0 0.0
    %1977 = vmatprep.subr.mxu0 0.0
    %1978 = vmatpush1.msra.mxu0 0.0
    %1979 = vmatprep.subr.mxu0 0.0
    %1980 = vmatpush1.msra.mxu0 0.0
    %1981 = vmatprep.subr.mxu0 0.0
    %1982 = vmatpush1.msra.mxu0 0.0
    %1983 = vmatprep.subr.mxu0 0.0
    %1984 = vmatpush1.msra.mxu0 0.0
    %1985 = vmatprep.subr.mxu0 0.0
    %1986 = vmatpush1.msra.mxu0 0.0
    %1987 = vmatprep.subr.mxu0 0.0
    %1988 = vmatpush1.msra.mxu0 0.0
    %1989 = vmatprep.subr.mxu0 0.0
    %1990 = vmatpush1.msra.mxu0 0.0
    %1991 = vmatprep.subr.mxu0 0.0
    %1992 = vmatpush1.msra.mxu0 0.0
    %1993 = vmatprep.subr.mxu0 0.0
    %1994 = vmatpush1.msra.mxu0 0.0
    %1995 = vmatprep.subr.mxu0 0.0
    %1996 = vmatpush1.msra.mxu0 0.0
    %1997 = vmatprep.subr.mxu0 0.0
    %1998 = vmatpush1.msra.mxu0 0.0
    %1999 = vmatprep.subr.mxu0 0.0
    %2000 = vmatpush1.msra.mxu0 0.0
    %2001 = vmatprep.subr.mxu0 0.0
    %2002 = vmatpush1.msra.mxu0 0.0
    %2003 = vmatprep.subr.mxu0 0.0
    %2004 = vmatpush1.msra.mxu0 0.0
    %2005 = vmatprep.subr.mxu0 0.0
    %2006 = vmatpush1.msra.mxu0 0.0
    %2007 = vmatprep.subr.mxu0 0.0
    %2008 = vmatpush1.msra.mxu0 0.0
    %2009 = vmatprep.subr.mxu0 0.0
    %2010 = vmatpush1.msra.mxu0 0.0
    %2011 = vmatprep.subr.mxu0 0.0
    %2012 = vmatpush1.msra.mxu0 0.0
    %2013 = vmatprep.subr.mxu0 0.0
    %2014 = vmatpush1.msra.mxu0 0.0
    %2015 = vmatprep.subr.mxu0 0.0
    %2016 = vmatpush1.msra.mxu0 0.0
    %2017 = vmatprep.subr.mxu0 0.0
    %2018 = vmatpush1.msra.mxu0 0.0
    %2019 = vmatprep.subr.mxu0 0.0
    %2020 = vmatpush1.msra.mxu0 0.0
    %2021 = vmatprep.mubr.f32.mxu0 0.0
    %2022 = vmatmul.mubr.f32.gmra.mrb[0].mxu0 %v1952
    %v2023 = vpop.f32.mrb[0].mxu0
    %v2024 = vadd.f32 %v1950, %v2023
    %v2025 = vpop.f32.mrb[0].mxu0
    %2026 = vmatprep.mubr.f32.mxu0 0.0
    %2027 = vmatmul.mubr.f32.gmra.mrb[0].mxu0 %v1955
    %v2028 = vpop.f32.mrb[0].mxu0
    %v2029 = vadd.f32 %v1950, %v2028
    %v2030 = vpop.f32.mrb[0].mxu0
    %2031 = vdwg.mxu0
    %v2032 = vld [vmem:[%s2 + $0xb0] sm:$0xff]
    %v2033 = vld [vmem:[%s2 + $0xb8] sm:$0xff]
    %2036 = vrot.lane.b32.xlu0 %v2024, 120
    %v2037 = vpop.permute.xlu0 %2036
    %2038 = vrot.lane.b32.xlu0 %v2029, 120
    %v2039 = vpop.permute.xlu0 %2038
    %v2042 = vmul.f32 %v2024, 0.35355338
    %v2043 = vmul.f32 %v2029, 0.35355338
    %v2044 = vmul.f32 %v2037, 0.35355338
    %v2045 = vmul.f32 %v2039, 0.35355338
    %2046 = vrot.lane.b32.xlu0 %v215, 96
    %v2047 = vpop.permute.xlu0 %2046
    %2048 = vrot.lane.b32.xlu0 %v220, 96
    %v2049 = vpop.permute.xlu0 %2048
    %2050 = vrot.lane.b32.xlu0 %v829, 96
    %v2051 = vpop.permute.xlu0 %2050
    %2052 = vrot.lane.b32.xlu0 %v831, 96
    %v2053 = vpop.permute.xlu0 %2052
    %v2055 = vsel %vm333, %v2042, 0
    %v2058 = vsel %vm333, %v2043, 0
    %v2061 = vsel %vm333, %v2044, 0
    %v2064 = vsel %vm333, %v2045, 0
    %v2066 = vsel %vm333, %v2047, 0
    %v2068 = vsel %vm333, %v2049, 0
    %v2070 = vsel %vm333, %v2051, 0
    %v2072 = vsel %vm333, %v2053, 0
    %2074 = vmatprep.subr.mxu0 0.0
    %2075 = vmatpush1.xpose.msra.mxu0 %v2066
    %2076 = vmatprep.subr.mxu0 0.0
    %2077 = vmatpush1.xpose.msra.mxu0 %v2068
    %2078 = vmatprep.subr.mxu0 0.0
    %2079 = vmatpush1.xpose.msra.mxu0 %v2070
    %2080 = vmatprep.subr.mxu0 0.0
    %2081 = vmatpush1.xpose.msra.mxu0 %v2072
    %2082 = vmatprep.subr.mxu0 0.0
    %2083 = vmatpush1.xpose.msra.mxu0 0.0
    %2084 = vmatprep.subr.mxu0 0.0
    %2085 = vmatpush1.xpose.msra.mxu0 0.0
    %2086 = vmatprep.subr.mxu0 0.0
    %2087 = vmatpush1.xpose.msra.mxu0 0.0
    %2088 = vmatprep.subr.mxu0 0.0
    %2089 = vmatpush1.xpose.msra.mxu0 0.0
    %2090 = vmatprep.subr.mxu0 0.0
    %2091 = vmatpush1.xpose.msra.mxu0 0.0
    %2092 = vmatprep.subr.mxu0 0.0
    %2093 = vmatpush1.xpose.msra.mxu0 0.0
    %2094 = vmatprep.subr.mxu0 0.0
    %2095 = vmatpush1.xpose.msra.mxu0 0.0
    %2096 = vmatprep.subr.mxu0 0.0
    %2097 = vmatpush1.xpose.msra.mxu0 0.0
    %2098 = vmatprep.subr.mxu0 0.0
    %2099 = vmatpush1.xpose.msra.mxu0 0.0
    %2100 = vmatprep.subr.mxu0 0.0
    %2101 = vmatpush1.xpose.msra.mxu0 0.0
    %2102 = vmatprep.subr.mxu0 0.0
    %2103 = vmatpush1.xpose.msra.mxu0 0.0
    %2104 = vmatprep.subr.mxu0 0.0
    %2105 = vmatpush1.xpose.msra.mxu0 0.0
    %2106 = vmatprep.subr.mxu0 0.0
    %2107 = vmatpush1.xpose.msra.mxu0 0.0
    %2108 = vmatprep.subr.mxu0 0.0
    %2109 = vmatpush1.xpose.msra.mxu0 0.0
    %2110 = vmatprep.subr.mxu0 0.0
    %2111 = vmatpush1.xpose.msra.mxu0 0.0
    %2112 = vmatprep.subr.mxu0 0.0
    %2113 = vmatpush1.xpose.msra.mxu0 0.0
    %2114 = vmatprep.subr.mxu0 0.0
    %2115 = vmatpush1.xpose.msra.mxu0 0.0
    %2116 = vmatprep.subr.mxu0 0.0
    %2117 = vmatpush1.xpose.msra.mxu0 0.0
    %2118 = vmatprep.subr.mxu0 0.0
    %2119 = vmatpush1.xpose.msra.mxu0 0.0
    %2120 = vmatprep.subr.mxu0 0.0
    %2121 = vmatpush1.xpose.msra.mxu0 0.0
    %2122 = vmatprep.subr.mxu0 0.0
    %2123 = vmatpush1.xpose.msra.mxu0 0.0
    %2124 = vmatprep.subr.mxu0 0.0
    %2125 = vmatpush1.xpose.msra.mxu0 0.0
    %2126 = vmatprep.subr.mxu0 0.0
    %2127 = vmatpush1.xpose.msra.mxu0 0.0
    %2128 = vmatprep.subr.mxu0 0.0
    %2129 = vmatpush1.xpose.msra.mxu0 0.0
    %2130 = vmatprep.subr.mxu0 0.0
    %2131 = vmatpush1.xpose.msra.mxu0 0.0
    %2132 = vmatprep.subr.mxu0 0.0
    %2133 = vmatpush1.xpose.msra.mxu0 0.0
    %2134 = vmatprep.subr.mxu0 0.0
    %2135 = vmatpush1.xpose.msra.mxu0 0.0
    %2136 = vmatprep.subr.mxu0 0.0
    %2137 = vmatpush1.xpose.msra.mxu0 0.0
    %2138 = vmatprep.mubr.f32.mxu0 0.0
    %2139 = vmatmul.mubr.f32.gmra.mrb[0].mxu0 %v2055
    %v2140 = vpop.f32.mrb[0].mxu0
    %v2141 = vadd.f32 0.0, %v2140
    %v2142 = vpop.f32.mrb[0].mxu0
    %2143 = vmatprep.mubr.f32.mxu0 0.0
    %2144 = vmatmul.mubr.f32.gmra.mrb[0].mxu0 %v2058
    %v2145 = vpop.f32.mrb[0].mxu0
    %v2146 = vadd.f32 0.0, %v2145
    %v2147 = vpop.f32.mrb[0].mxu0
    %2148 = vmatprep.mubr.f32.mxu0 0.0
    %2149 = vmatmul.mubr.f32.gmra.mrb[0].mxu0 %v2061
    %v2150 = vpop.f32.mrb[0].mxu0
    %v2151 = vadd.f32 0.0, %v2150
    %v2152 = vpop.f32.mrb[0].mxu0
    %2153 = vmatprep.mubr.f32.mxu0 0.0
    %2154 = vmatmul.mubr.f32.gmra.mrb[0].mxu0 %v2064
    %v2155 = vpop.f32.mrb[0].mxu0
    %v2156 = vadd.f32 0.0, %v2155
    %v2157 = vpop.f32.mrb[0].mxu0
    %2158 = vdwg.mxu0
    %v2159 = vmul.f32 %v2141, 1.442695
    %v2160 = vpow.pop %v2159
    %v2161 = vmul.f32 %v2146, 1.442695
    %v2162 = vpow.pop %v2161
    %v2163 = vmul.f32 %v2151, 1.442695
    %v2164 = vpow.pop %v2163
    %v2165 = vmul.f32 %v2156, 1.442695
    %v2166 = vpow.pop %v2165
    %v2167 = vmul.f32 %v2160, %v130
    %v2168 = vmul.f32 %v2162, %v131
    %v2169 = vmul.f32 %v2164, %v132
    %v2170 = vmul.f32 %v2166, %v133
    %v2171 = vsel %vm451, %v2167, 0.0
    %2172 = vadd.xlane.f32.xlu0 %v2171
    %v2173 = vpop.xlane.xlu0 %2172
    %v2174 = vsel %vm451, %v2168, 0.0
    %2175 = vadd.xlane.f32.xlu0 %v2174
    %v2176 = vpop.xlane.xlu0 %2175
    %v2177 = vsel %vm451, %v2169, 0.0
    %2178 = vadd.xlane.f32.xlu0 %v2177
    %v2179 = vpop.xlane.xlu0 %2178
    %v2180 = vsel %vm451, %v2170, 0.0
    %2181 = vadd.xlane.f32.xlu0 %v2180
    %v2182 = vpop.xlane.xlu0 %2181
    %v2183 = vrcp.pop %v2173
    %v2184 = vrcp.pop %v2176
    %v2185 = vrcp.pop %v2179
    %v2186 = vrcp.pop %v2182
    %v2187 = vmul.f32 %v2167, %v2183
    %v2188 = vmul.f32 %v2168, %v2184
    %v2189 = vmul.f32 %v2169, %v2185
    %v2190 = vmul.f32 %v2170, %v2186
    %2191 = vrot.lane.b32.xlu0 %v215, 80
    %v2192 = vpop.permute.xlu0 %2191
    %2193 = vrot.lane.b32.xlu0 %v220, 80
    %v2194 = vpop.permute.xlu0 %2193
    %2195 = vrot.lane.b32.xlu0 %v829, 80
    %v2196 = vpop.permute.xlu0 %2195
    %2197 = vrot.lane.b32.xlu0 %v831, 80
    %v2198 = vpop.permute.xlu0 %2197
    %v2204 = vsel %vm451, %v2187, 0
    %v2207 = vsel %vm451, %v2188, 0
    %v2210 = vsel %vm451, %v2189, 0
    %v2213 = vsel %vm451, %v2190, 0
    %2215 = vmatprep.subr.mxu0 0.0
    %2216 = vmatpush1.msra.mxu0 %v2192
    %2217 = vmatprep.subr.mxu0 0.0
    %2218 = vmatpush1.msra.mxu0 %v2194
    %2219 = vmatprep.subr.mxu0 0.0
    %2220 = vmatpush1.msra.mxu0 %v2196
    %2221 = vmatprep.subr.mxu0 0.0
    %2222 = vmatpush1.msra.mxu0 %v2198
    %2223 = vmatprep.subr.mxu0 0.0
    %2224 = vmatpush1.msra.mxu0 0.0
    %2225 = vmatprep.subr.mxu0 0.0
    %2226 = vmatpush1.msra.mxu0 0.0
    %2227 = vmatprep.subr.mxu0 0.0
    %2228 = vmatpush1.msra.mxu0 0.0
    %2229 = vmatprep.subr.mxu0 0.0
    %2230 = vmatpush1.msra.mxu0 0.0
    %2231 = vmatprep.subr.mxu0 0.0
    %2232 = vmatpush1.msra.mxu0 0.0
    %2233 = vmatprep.subr.mxu0 0.0
    %2234 = vmatpush1.msra.mxu0 0.0
    %2235 = vmatprep.subr.mxu0 0.0
    %2236 = vmatpush1.msra.mxu0 0.0
    %2237 = vmatprep.subr.mxu0 0.0
    %2238 = vmatpush1.msra.mxu0 0.0
    %2239 = vmatprep.subr.mxu0 0.0
    %2240 = vmatpush1.msra.mxu0 0.0
    %2241 = vmatprep.subr.mxu0 0.0
    %2242 = vmatpush1.msra.mxu0 0.0
    %2243 = vmatprep.subr.mxu0 0.0
    %2244 = vmatpush1.msra.mxu0 0.0
    %2245 = vmatprep.subr.mxu0 0.0
    %2246 = vmatpush1.msra.mxu0 0.0
    %2247 = vmatprep.subr.mxu0 0.0
    %2248 = vmatpush1.msra.mxu0 0.0
    %2249 = vmatprep.subr.mxu0 0.0
    %2250 = vmatpush1.msra.mxu0 0.0
    %2251 = vmatprep.subr.mxu0 0.0
    %2252 = vmatpush1.msra.mxu0 0.0
    %2253 = vmatprep.subr.mxu0 0.0
    %2254 = vmatpush1.msra.mxu0 0.0
    %2255 = vmatprep.subr.mxu0 0.0
    %2256 = vmatpush1.msra.mxu0 0.0
    %2257 = vmatprep.subr.mxu0 0.0
    %2258 = vmatpush1.msra.mxu0 0.0
    %2259 = vmatprep.subr.mxu0 0.0
    %2260 = vmatpush1.msra.mxu0 0.0
    %2261 = vmatprep.subr.mxu0 0.0
    %2262 = vmatpush1.msra.mxu0 0.0
    %2263 = vmatprep.subr.mxu0 0.0
    %2264 = vmatpush1.msra.mxu0 0.0
    %2265 = vmatprep.subr.mxu0 0.0
    %2266 = vmatpush1.msra.mxu0 0.0
    %2267 = vmatprep.subr.mxu0 0.0
    %2268 = vmatpush1.msra.mxu0 0.0
    %2269 = vmatprep.subr.mxu0 0.0
    %2270 = vmatpush1.msra.mxu0 0.0
    %2271 = vmatprep.subr.mxu0 0.0
    %2272 = vmatpush1.msra.mxu0 0.0
    %2273 = vmatprep.subr.mxu0 0.0
    %2274 = vmatpush1.msra.mxu0 0.0
    %2275 = vmatprep.subr.mxu0 0.0
    %2276 = vmatpush1.msra.mxu0 0.0
    %2277 = vmatprep.subr.mxu0 0.0
    %2278 = vmatpush1.msra.mxu0 0.0
    %2279 = vmatprep.mubr.f32.mxu0 0.0
    %2280 = vmatmul.mubr.f32.gmra.mrb[0].mxu0 %v2204
    %v2281 = vpop.f32.mrb[0].mxu0
    %v2282 = vadd.f32 0.0, %v2281
    %v2283 = vpop.f32.mrb[0].mxu0
    %2284 = vmatprep.mubr.f32.mxu0 0.0
    %2285 = vmatmul.mubr.f32.gmra.mrb[0].mxu0 %v2207
    %v2286 = vpop.f32.mrb[0].mxu0
    %v2287 = vadd.f32 0.0, %v2286
    %v2288 = vpop.f32.mrb[0].mxu0
    %2289 = vmatprep.mubr.f32.mxu0 0.0
    %2290 = vmatmul.mubr.f32.gmra.mrb[0].mxu0 %v2210
    %v2291 = vpop.f32.mrb[0].mxu0
    %v2292 = vadd.f32 0.0, %v2291
    %v2293 = vpop.f32.mrb[0].mxu0
    %2294 = vmatprep.mubr.f32.mxu0 0.0
    %2295 = vmatmul.mubr.f32.gmra.mrb[0].mxu0 %v2213
    %v2296 = vpop.f32.mrb[0].mxu0
    %v2297 = vadd.f32 0.0, %v2296
    %v2298 = vpop.f32.mrb[0].mxu0
    %2299 = vdwg.mxu0
    %2302 = vrot.lane.b32.xlu0 %v2292, 8
    %v2303 = vpop.permute.xlu0 %2302
    %2304 = vrot.lane.b32.xlu0 %v2297, 8
    %v2305 = vpop.permute.xlu0 %2304
    %v2308 = vsel %vm333, %v2282, %v2303
    %v2309 = vsel %vm333, %v2287, %v2305
    %v2310 = vld [vmem:[%s2 + $0x100] sm:$0x1]
    %v2311 = vlaneseq
    %v2312 = vshrl.u32 %v2311, 7
    %v2313 = vsub.s32 0, %v2312
    %v2314 = vrot.slane %v2310, %v2313
    %v2316 = vsel %vm141, %v2308, 0
    %v2319 = vsel %vm141, %v2309, 0
    %2321 = vmatprep.subr.mxu0 0.0
    %2322 = vmatpush1.msra.mxu0 %v2032
    %2323 = vmatprep.subr.mxu0 0.0
    %2324 = vmatpush1.msra.mxu0 %v2033
    %2325 = vmatprep.subr.mxu0 0.0
    %2326 = vmatpush1.msra.mxu0 0.0
    %2327 = vmatprep.subr.mxu0 0.0
    %2328 = vmatpush1.msra.mxu0 0.0
    %2329 = vmatprep.subr.mxu0 0.0
    %2330 = vmatpush1.msra.mxu0 0.0
    %2331 = vmatprep.subr.mxu0 0.0
    %2332 = vmatpush1.msra.mxu0 0.0
    %2333 = vmatprep.subr.mxu0 0.0
    %2334 = vmatpush1.msra.mxu0 0.0
    %2335 = vmatprep.subr.mxu0 0.0
    %2336 = vmatpush1.msra.mxu0 0.0
    %2337 = vmatprep.subr.mxu0 0.0
    %2338 = vmatpush1.msra.mxu0 0.0
    %2339 = vmatprep.subr.mxu0 0.0
    %2340 = vmatpush1.msra.mxu0 0.0
    %2341 = vmatprep.subr.mxu0 0.0
    %2342 = vmatpush1.msra.mxu0 0.0
    %2343 = vmatprep.subr.mxu0 0.0
    %2344 = vmatpush1.msra.mxu0 0.0
    %2345 = vmatprep.subr.mxu0 0.0
    %2346 = vmatpush1.msra.mxu0 0.0
    %2347 = vmatprep.subr.mxu0 0.0
    %2348 = vmatpush1.msra.mxu0 0.0
    %2349 = vmatprep.subr.mxu0 0.0
    %2350 = vmatpush1.msra.mxu0 0.0
    %2351 = vmatprep.subr.mxu0 0.0
    %2352 = vmatpush1.msra.mxu0 0.0
    %2353 = vmatprep.subr.mxu0 0.0
    %2354 = vmatpush1.msra.mxu0 0.0
    %2355 = vmatprep.subr.mxu0 0.0
    %2356 = vmatpush1.msra.mxu0 0.0
    %2357 = vmatprep.subr.mxu0 0.0
    %2358 = vmatpush1.msra.mxu0 0.0
    %2359 = vmatprep.subr.mxu0 0.0
    %2360 = vmatpush1.msra.mxu0 0.0
    %2361 = vmatprep.subr.mxu0 0.0
    %2362 = vmatpush1.msra.mxu0 0.0
    %2363 = vmatprep.subr.mxu0 0.0
    %2364 = vmatpush1.msra.mxu0 0.0
    %2365 = vmatprep.subr.mxu0 0.0
    %2366 = vmatpush1.msra.mxu0 0.0
    %2367 = vmatprep.subr.mxu0 0.0
    %2368 = vmatpush1.msra.mxu0 0.0
    %2369 = vmatprep.subr.mxu0 0.0
    %2370 = vmatpush1.msra.mxu0 0.0
    %2371 = vmatprep.subr.mxu0 0.0
    %2372 = vmatpush1.msra.mxu0 0.0
    %2373 = vmatprep.subr.mxu0 0.0
    %2374 = vmatpush1.msra.mxu0 0.0
    %2375 = vmatprep.subr.mxu0 0.0
    %2376 = vmatpush1.msra.mxu0 0.0
    %2377 = vmatprep.subr.mxu0 0.0
    %2378 = vmatpush1.msra.mxu0 0.0
    %2379 = vmatprep.subr.mxu0 0.0
    %2380 = vmatpush1.msra.mxu0 0.0
    %2381 = vmatprep.subr.mxu0 0.0
    %2382 = vmatpush1.msra.mxu0 0.0
    %2383 = vmatprep.subr.mxu0 0.0
    %2384 = vmatpush1.msra.mxu0 0.0
    %2385 = vmatprep.mubr.f32.mxu0 0.0
    %2386 = vmatmul.mubr.f32.gmra.mrb[0].mxu0 %v2316
    %v2387 = vpop.f32.mrb[0].mxu0
    %v2388 = vadd.f32 %v2314, %v2387
    %v2389 = vpop.f32.mrb[0].mxu0
    %2390 = vmatprep.mubr.f32.mxu0 0.0
    %2391 = vmatmul.mubr.f32.gmra.mrb[0].mxu0 %v2319
    %v2392 = vpop.f32.mrb[0].mxu0
    %v2393 = vadd.f32 %v2314, %v2392
    %v2394 = vpop.f32.mrb[0].mxu0
    %2395 = vdwg.mxu0
    %v2396 = vadd.f32 %v1942, %v2388
    %v2397 = vadd.f32 %v1943, %v2393
    %v2398 = vld [vmem:[%s2 + $0x105] sm:$0x1]
    %v2399 = vld [vmem:[%s2 + $0x106] sm:$0x1]
    %v2400 = vsel %vm141, %v2396, 0.0
    %2401 = vadd.xlane.f32.xlu0 %v2400
    %v2402 = vpop.xlane.xlu0 %2401
    %v2403 = vsel %vm141, %v2397, 0.0
    %2404 = vadd.xlane.f32.xlu0 %v2403
    %v2405 = vpop.xlane.xlu0 %2404
    %v2406 = vmul.f32 %v2402, %v687
    %v2407 = vmul.f32 %v2405, %v687
    %v2408 = vmul.f32 %v2396, %v2396
    %v2409 = vmul.f32 %v2397, %v2397
    %v2410 = vsel %vm141, %v2408, 0.0
    %2411 = vadd.xlane.f32.xlu0 %v2410
    %v2412 = vpop.xlane.xlu0 %2411
    %v2413 = vsel %vm141, %v2409, 0.0
    %2414 = vadd.xlane.f32.xlu0 %v2413
    %v2415 = vpop.xlane.xlu0 %2414
    %v2416 = vmul.f32 %v2412, %v687
    %v2417 = vmul.f32 %v2415, %v687
    %v2418 = vmul.f32 %v2406, %v2406
    %v2419 = vmul.f32 %v2407, %v2407
    %v2420 = vsub.f32 %v2416, %v2418
    %v2421 = vsub.f32 %v2417, %v2419
    %v2422 = vsub.f32 %v2396, %v2406
    %v2423 = vsub.f32 %v2397, %v2407
    %v2424 = vadd.f32 %v2420, 1e-05
    %v2425 = vadd.f32 %v2421, 1e-05
    %v2426 = vrsqrt.pop %v2424
    %v2427 = vrsqrt.pop %v2425
    %v2428 = vmul.f32 %v2422, %v2426
    %v2429 = vmul.f32 %v2423, %v2427
    %v2430 = vlaneseq
    %v2431 = vshrl.u32 %v2430, 7
    %v2432 = vsub.s32 0, %v2431
    %v2433 = vrot.slane %v2398, %v2432
    %v2434 = vmul.f32 %v2428, %v2433
    %v2435 = vmul.f32 %v2429, %v2433
    %v2436 = vlaneseq
    %v2437 = vshrl.u32 %v2436, 7
    %v2438 = vsub.s32 0, %v2437
    %v2439 = vrot.slane %v2399, %v2438
    %v2440 = vadd.f32 %v2434, %v2439
    %v2441 = vadd.f32 %v2435, %v2439
    %v2442 = vld [vmem:[%s2 + $0xc0] sm:$0xff]
    %v2443 = vld [vmem:[%s2 + $0xc8] sm:$0xff]
    %v2444 = vld [vmem:[%s2 + $0x101] sm:$0x1]
    %v2445 = vlaneseq
    %v2446 = vshrl.u32 %v2445, 7
    %v2447 = vsub.s32 0, %v2446
    %v2448 = vrot.slane %v2444, %v2447
    %v2450 = vsel %vm141, %v2440, 0
    %v2453 = vsel %vm141, %v2441, 0
    %2455 = vmatprep.subr.mxu0 0.0
    %2456 = vmatpush1.msra.mxu0 %v2442
    %2457 = vmatprep.subr.mxu0 0.0
    %2458 = vmatpush1.msra.mxu0 %v2443
    %2459 = vmatprep.subr.mxu0 0.0
    %2460 = vmatpush1.msra.mxu0 0.0
    %2461 = vmatprep.subr.mxu0 0.0
    %2462 = vmatpush1.msra.mxu0 0.0
    %2463 = vmatprep.subr.mxu0 0.0
    %2464 = vmatpush1.msra.mxu0 0.0
    %2465 = vmatprep.subr.mxu0 0.0
    %2466 = vmatpush1.msra.mxu0 0.0
    %2467 = vmatprep.subr.mxu0 0.0
    %2468 = vmatpush1.msra.mxu0 0.0
    %2469 = vmatprep.subr.mxu0 0.0
    %2470 = vmatpush1.msra.mxu0 0.0
    %2471 = vmatprep.subr.mxu0 0.0
    %2472 = vmatpush1.msra.mxu0 0.0
    %2473 = vmatprep.subr.mxu0 0.0
    %2474 = vmatpush1.msra.mxu0 0.0
    %2475 = vmatprep.subr.mxu0 0.0
    %2476 = vmatpush1.msra.mxu0 0.0
    %2477 = vmatprep.subr.mxu0 0.0
    %2478 = vmatpush1.msra.mxu0 0.0
    %2479 = vmatprep.subr.mxu0 0.0
    %2480 = vmatpush1.msra.mxu0 0.0
    %2481 = vmatprep.subr.mxu0 0.0
    %2482 = vmatpush1.msra.mxu0 0.0
    %2483 = vmatprep.subr.mxu0 0.0
    %2484 = vmatpush1.msra.mxu0 0.0
    %2485 = vmatprep.subr.mxu0 0.0
    %2486 = vmatpush1.msra.mxu0 0.0
    %2487 = vmatprep.subr.mxu0 0.0
    %2488 = vmatpush1.msra.mxu0 0.0
    %2489 = vmatprep.subr.mxu0 0.0
    %2490 = vmatpush1.msra.mxu0 0.0
    %2491 = vmatprep.subr.mxu0 0.0
    %2492 = vmatpush1.msra.mxu0 0.0
    %2493 = vmatprep.subr.mxu0 0.0
    %2494 = vmatpush1.msra.mxu0 0.0
    %2495 = vmatprep.subr.mxu0 0.0
    %2496 = vmatpush1.msra.mxu0 0.0
    %2497 = vmatprep.subr.mxu0 0.0
    %2498 = vmatpush1.msra.mxu0 0.0
    %2499 = vmatprep.subr.mxu0 0.0
    %2500 = vmatpush1.msra.mxu0 0.0
    %2501 = vmatprep.subr.mxu0 0.0
    %2502 = vmatpush1.msra.mxu0 0.0
    %2503 = vmatprep.subr.mxu0 0.0
    %2504 = vmatpush1.msra.mxu0 0.0
    %2505 = vmatprep.subr.mxu0 0.0
    %2506 = vmatpush1.msra.mxu0 0.0
    %2507 = vmatprep.subr.mxu0 0.0
    %2508 = vmatpush1.msra.mxu0 0.0
    %2509 = vmatprep.subr.mxu0 0.0
    %2510 = vmatpush1.msra.mxu0 0.0
    %2511 = vmatprep.subr.mxu0 0.0
    %2512 = vmatpush1.msra.mxu0 0.0
    %2513 = vmatprep.subr.mxu0 0.0
    %2514 = vmatpush1.msra.mxu0 0.0
    %2515 = vmatprep.subr.mxu0 0.0
    %2516 = vmatpush1.msra.mxu0 0.0
    %2517 = vmatprep.subr.mxu0 0.0
    %2518 = vmatpush1.msra.mxu0 0.0
    %2519 = vmatprep.mubr.f32.mxu0 0.0
    %2520 = vmatmul.mubr.f32.gmra.mrb[0].mxu0 %v2450
    %v2521 = vpop.f32.mrb[0].mxu0
    %v2522 = vadd.f32 %v2448, %v2521
    %v2523 = vpop.f32.mrb[0].mxu0
    %2524 = vmatprep.mubr.f32.mxu0 0.0
    %2525 = vmatmul.mubr.f32.gmra.mrb[0].mxu0 %v2453
    %v2526 = vpop.f32.mrb[0].mxu0
    %v2527 = vadd.f32 %v2448, %v2526
    %v2528 = vpop.f32.mrb[0].mxu0
    %2529 = vdwg.mxu0
    %v2530 = vmax.f32 %v2522, 0.0
    %v2531 = vmax.f32 %v2527, 0.0
    %v2532 = vld [vmem:[%s2 + $0xd0] sm:$0xff]
    %v2533 = vld [vmem:[%s2 + $0xd8] sm:$0xff]
    %v2534 = vld [vmem:[%s2 + $0xe0] sm:$0xff]
    %v2535 = vld [vmem:[%s2 + $0xe8] sm:$0xff]
    %v2536 = vld [vmem:[%s2 + $0x102] sm:$0x1]
    %v2537 = vlaneseq
    %v2538 = vshrl.u32 %v2537, 7
    %v2539 = vsub.s32 0, %v2538
    %v2540 = vrot.slane %v2536, %v2539
    %v2542 = vsel %vm451, %v2530, 0
    %v2545 = vsel %vm451, %v2531, 0
    %2547 = vmatprep.subr.mxu0 0.0
    %2548 = vmatpush1.msra.mxu0 %v2532
    %2549 = vmatprep.subr.mxu0 0.0
    %2550 = vmatpush1.msra.mxu0 %v2533
    %2551 = vmatprep.subr.mxu0 0.0
    %2552 = vmatpush1.msra.mxu0 %v2534
    %2553 = vmatprep.subr.mxu0 0.0
    %2554 = vmatpush1.msra.mxu0 %v2535
    %2555 = vmatprep.subr.mxu0 0.0
    %2556 = vmatpush1.msra.mxu0 0.0
    %2557 = vmatprep.subr.mxu0 0.0
    %2558 = vmatpush1.msra.mxu0 0.0
    %2559 = vmatprep.subr.mxu0 0.0
    %2560 = vmatpush1.msra.mxu0 0.0
    %2561 = vmatprep.subr.mxu0 0.0
    %2562 = vmatpush1.msra.mxu0 0.0
    %2563 = vmatprep.subr.mxu0 0.0
    %2564 = vmatpush1.msra.mxu0 0.0
    %2565 = vmatprep.subr.mxu0 0.0
    %2566 = vmatpush1.msra.mxu0 0.0
    %2567 = vmatprep.subr.mxu0 0.0
    %2568 = vmatpush1.msra.mxu0 0.0
    %2569 = vmatprep.subr.mxu0 0.0
    %2570 = vmatpush1.msra.mxu0 0.0
    %2571 = vmatprep.subr.mxu0 0.0
    %2572 = vmatpush1.msra.mxu0 0.0
    %2573 = vmatprep.subr.mxu0 0.0
    %2574 = vmatpush1.msra.mxu0 0.0
    %2575 = vmatprep.subr.mxu0 0.0
    %2576 = vmatpush1.msra.mxu0 0.0
    %2577 = vmatprep.subr.mxu0 0.0
    %2578 = vmatpush1.msra.mxu0 0.0
    %2579 = vmatprep.subr.mxu0 0.0
    %2580 = vmatpush1.msra.mxu0 0.0
    %2581 = vmatprep.subr.mxu0 0.0
    %2582 = vmatpush1.msra.mxu0 0.0
    %2583 = vmatprep.subr.mxu0 0.0
    %2584 = vmatpush1.msra.mxu0 0.0
    %2585 = vmatprep.subr.mxu0 0.0
    %2586 = vmatpush1.msra.mxu0 0.0
    %2587 = vmatprep.subr.mxu0 0.0
    %2588 = vmatpush1.msra.mxu0 0.0
    %2589 = vmatprep.subr.mxu0 0.0
    %2590 = vmatpush1.msra.mxu0 0.0
    %2591 = vmatprep.subr.mxu0 0.0
    %2592 = vmatpush1.msra.mxu0 0.0
    %2593 = vmatprep.subr.mxu0 0.0
    %2594 = vmatpush1.msra.mxu0 0.0
    %2595 = vmatprep.subr.mxu0 0.0
    %2596 = vmatpush1.msra.mxu0 0.0
    %2597 = vmatprep.subr.mxu0 0.0
    %2598 = vmatpush1.msra.mxu0 0.0
    %2599 = vmatprep.subr.mxu0 0.0
    %2600 = vmatpush1.msra.mxu0 0.0
    %2601 = vmatprep.subr.mxu0 0.0
    %2602 = vmatpush1.msra.mxu0 0.0
    %2603 = vmatprep.subr.mxu0 0.0
    %2604 = vmatpush1.msra.mxu0 0.0
    %2605 = vmatprep.subr.mxu0 0.0
    %2606 = vmatpush1.msra.mxu0 0.0
    %2607 = vmatprep.subr.mxu0 0.0
    %2608 = vmatpush1.msra.mxu0 0.0
    %2609 = vmatprep.subr.mxu0 0.0
    %2610 = vmatpush1.msra.mxu0 0.0
    %2611 = vmatprep.mubr.f32.mxu0 0.0
    %2612 = vmatmul.mubr.f32.gmra.mrb[0].mxu0 %v2542
    %v2613 = vpop.f32.mrb[0].mxu0
    %v2614 = vadd.f32 %v2540, %v2613
    %v2615 = vpop.f32.mrb[0].mxu0
    %2616 = vmatprep.mubr.f32.mxu0 0.0
    %2617 = vmatmul.mubr.f32.gmra.mrb[0].mxu0 %v2545
    %v2618 = vpop.f32.mrb[0].mxu0
    %v2619 = vadd.f32 %v2540, %v2618
    %v2620 = vpop.f32.mrb[0].mxu0
    %2621 = vdwg.mxu0
    %v2622 = vadd.f32 %v2440, %v2614
    %v2623 = vadd.f32 %v2441, %v2619
    %v2624 = vld [vmem:[%s2 + $0x107] sm:$0x1]
    %v2625 = vld [vmem:[%s2 + $0x108] sm:$0x1]
    %v2626 = vsel %vm141, %v2622, 0.0
    %2627 = vadd.xlane.f32.xlu0 %v2626
    %v2628 = vpop.xlane.xlu0 %2627
    %v2629 = vsel %vm141, %v2623, 0.0
    %2630 = vadd.xlane.f32.xlu0 %v2629
    %v2631 = vpop.xlane.xlu0 %2630
    %v2632 = vmul.f32 %v2628, %v687
    %v2633 = vmul.f32 %v2631, %v687
    %v2634 = vmul.f32 %v2622, %v2622
    %v2635 = vmul.f32 %v2623, %v2623
    %v2636 = vsel %vm141, %v2634, 0.0
    %2637 = vadd.xlane.f32.xlu0 %v2636
    %v2638 = vpop.xlane.xlu0 %2637
    %v2639 = vsel %vm141, %v2635, 0.0
    %2640 = vadd.xlane.f32.xlu0 %v2639
    %v2641 = vpop.xlane.xlu0 %2640
    %v2642 = vmul.f32 %v2638, %v687
    %v2643 = vmul.f32 %v2641, %v687
    %v2644 = vmul.f32 %v2632, %v2632
    %v2645 = vmul.f32 %v2633, %v2633
    %v2646 = vsub.f32 %v2642, %v2644
    %v2647 = vsub.f32 %v2643, %v2645
    %v2648 = vsub.f32 %v2622, %v2632
    %v2649 = vsub.f32 %v2623, %v2633
    %v2650 = vadd.f32 %v2646, 1e-05
    %v2651 = vadd.f32 %v2647, 1e-05
    %v2652 = vrsqrt.pop %v2650
    %v2653 = vrsqrt.pop %v2651
    %v2654 = vmul.f32 %v2648, %v2652
    %v2655 = vmul.f32 %v2649, %v2653
    %v2656 = vlaneseq
    %v2657 = vshrl.u32 %v2656, 7
    %v2658 = vsub.s32 0, %v2657
    %v2659 = vrot.slane %v2624, %v2658
    %v2660 = vmul.f32 %v2654, %v2659
    %v2661 = vmul.f32 %v2655, %v2659
    %v2662 = vlaneseq
    %v2663 = vshrl.u32 %v2662, 7
    %v2664 = vsub.s32 0, %v2663
    %v2665 = vrot.slane %v2625, %v2664
    %v2666 = vadd.f32 %v2660, %v2665
    %v2667 = vadd.f32 %v2661, %v2665
    %2668 = vst.msk [vmem:[#allocation2] sm:$0xff] %vm141, %v2666
    %2669 = vst.msk [vmem:[#allocation2 + $0x8] sm:$0xff] %vm141, %v2667
    // Predicated region
    $region14: #{tpu_custom_call.1} parent=1 // pred_check
      _
    $region15: #{tpu_custom_call.1} parent=1 // pred_check_branch
      %2671 = sbr.rel (0) target = $region17
    $region16: #{tpu_custom_call.1} parent=1 // pred_region
      %s2673 = ssub.s32 256, 256
      %2674 = vsyncadd [#allocation3], %s2673
      %s2675 = sshll.u32 [#allocation2], 4
      %s2676 = int_to_ptr.vmem [resolvable:$true] %s2675
      %2681 = dma.vmem_to_hbm [thread:$0]  %s2676, 256, %s3, [#allocation3], 128, 128, 8
    $region17: #{tpu_custom_call.1} parent=1 // pred_fallthru
      _
    // Predicated region
    $region18: #{tpu_custom_call.1} parent=1 // pred_check
      _
    $region19: #{tpu_custom_call.1} parent=1 // pred_check_branch
      %2683 = sbr.rel (0) target = $region21
    $region20: #{tpu_custom_call.1} parent=1 // pred_region
      %2684 = dma.done [#allocation3], 256
    $region21: #{tpu_custom_call.1} parent=1 // pred_fallthru
      _
    %2685 = vsyncpa [#allocation3], 1

</llo_original>
